<compile_context>
chip_gen: v7x
topology: tpu7x:2x2x1
jax: 0.10.0
libtpu: 0.0.40
codegen_flags: <defaults>
</compile_context>

<pallas_src>
import jax
import jax.numpy as jnp
from jax.experimental import pallas as pl
from jax.experimental.pallas import tpu as pltpu

OBS_N = 80 * 80      # 6400
HIDDEN_N = 64
ACT_N = 6            # gym Pong-v0 action_space.n


def _round_up(x, m):
    return (x + m - 1) // m * m


def _mlp_softmax_kernel(obs_ref, w1_ref, b1_ref, w2_ref, b2_ref, out_ref):
    # fc1 + tanh: cast the f32 obs tile to bf16 in-register (VPU has slack since the
    # kernel is HBM-bound), MXU matmul in bf16, accumulate in f32.
    x = obs_ref[...].astype(jnp.bfloat16)
    h = jnp.dot(x, w1_ref[...], preferred_element_type=jnp.float32)
    h = jnp.tanh(h + b1_ref[...])                        # (TB, HIDDEN_N) f32

    # fc2 (f32)
    logits = jnp.dot(h, w2_ref[...], preferred_element_type=jnp.float32)
    logits = logits + b2_ref[...]                        # (TB, ACT_N)

    # Numerically stable softmax along dim=1; exact division so each row sums to 1.
    m = jnp.max(logits, axis=1, keepdims=True)
    e = jnp.exp(logits - m)
    denom = jnp.sum(e, axis=1, keepdims=True)
    out_ref[...] = (e / denom).astype(out_ref.dtype)


def model_forward(obs, w1, b1, w2, b2, *, tb_max=512):
    """obs: (B, OBS_N) f32; w1: (OBS_N, HIDDEN_N); b1: (1, HIDDEN_N);
       w2: (HIDDEN_N, ACT_N); b2: (1, ACT_N).  Returns (B, ACT_N) f32 action probs."""
    B = obs.shape[0]

    # One-time bf16 cast of w1 (~0.8 MB); it stays resident in VMEM across grid steps.
    w1_bf = w1.astype(jnp.bfloat16)

    # Batch tile: multiple of 16 (native bf16 sublane packing).  Cap so that (a) the
    # double-buffered f32 obs tile + resident weights fit the explicit VMEM limit below
    # and (b) the grid has >= 2 tiles whenever B allows it, so both v7x TensorCores work.
    TB = min(tb_max, _round_up(B, 16))
    if B > 16:
        TB = min(TB, _round_up(-(-B // 2), 16))
    grid = (pl.cdiv(B, TB),)   # ragged last block handled by Pallas; no jnp.pad needed

    cost = pl.CostEstimate(
        flops=2 * B * OBS_N * HIDDEN_N + 2 * B * HIDDEN_N * ACT_N,
        transcendentals=B * (HIDDEN_N + ACT_N),          # tanh + exp
        bytes_accessed=(obs.size * 4 + w1_bf.size * 2 + b1.size * 4
                        + w2.size * 4 + b2.size * 4 + B * ACT_N * 4),
    )

    out = pl.pallas_call(
        _mlp_softmax_kernel,
        out_shape=jax.ShapeDtypeStruct((B, ACT_N), jnp.float32),
        grid=grid,
        in_specs=[
            pl.BlockSpec((TB, OBS_N), lambda i: (i, 0)),          # obs: new tile per step
            pl.BlockSpec((OBS_N, HIDDEN_N), lambda i: (0, 0)),    # w1: resident
            pl.BlockSpec((1, HIDDEN_N), lambda i: (0, 0)),        # b1: resident
            pl.BlockSpec((HIDDEN_N, ACT_N), lambda i: (0, 0)),    # w2: resident
            pl.BlockSpec((1, ACT_N), lambda i: (0, 0)),           # b2: resident
        ],
        out_specs=pl.BlockSpec((TB, ACT_N), lambda i: (i, 0)),
        compiler_params=pltpu.CompilerParams(
            dimension_semantics=("parallel",),           # megacore sharding on v7x
            vmem_limit_bytes=48 * 1024 * 1024,           # room for TB=512 f32 obs tiles
        ),
        cost_estimate=cost,
    )(obs, w1_bf, b1, w2, b2)

    return out


if __name__ == "__main__":
    key = jax.random.PRNGKey(0)
    k_obs, k_w1, k_b1, k_w2, k_b2 = jax.random.split(key, 5)

    B = 2
    obs = jax.random.normal(k_obs, (B, OBS_N), dtype=jnp.float32)

    # Deterministic parameter init mirroring the module:
    #   weights ~ N(0, 0.1); biases use PyTorch's default uniform(-1/sqrt(in), 1/sqrt(in)).
    w1 = 0.1 * jax.random.normal(k_w1, (OBS_N, HIDDEN_N), dtype=jnp.float32)
    b1 = jax.random.uniform(k_b1, (1, HIDDEN_N), dtype=jnp.float32,
                            minval=-1.0 / (OBS_N ** 0.5), maxval=1.0 / (OBS_N ** 0.5))
    w2 = 0.1 * jax.random.normal(k_w2, (HIDDEN_N, ACT_N), dtype=jnp.float32)
    b2 = jax.random.uniform(k_b2, (1, ACT_N), dtype=jnp.float32,
                            minval=-1.0 / (HIDDEN_N ** 0.5), maxval=1.0 / (HIDDEN_N ** 0.5))

    probs = jax.block_until_ready(model_forward(obs, w1, b1, w2, b2))
    assert probs.shape == (B, ACT_N)

    # Reference with the same bf16 casts on the fc1 operands (tight check).
    h_ref = jnp.tanh(
        jnp.dot(obs.astype(jnp.bfloat16), w1.astype(jnp.bfloat16),
                preferred_element_type=jnp.float32) + b1)
    ref_bf = jax.nn.softmax(h_ref @ w2 + b2, axis=1)
    assert jnp.allclose(probs, ref_bf, atol=2e-3), "mismatch vs bf16-input reference"

    # Full-f32 reference (semantic fidelity vs the PyTorch module, looser tol for bf16).
    ref_f32 = jax.nn.softmax(jnp.tanh(obs @ w1 + b1) @ w2 + b2, axis=1)
    assert jnp.allclose(probs, ref_f32, atol=3e-2), "mismatch vs f32 reference"

    # Rows must be proper probability distributions (exact-division softmax).
    assert jnp.allclose(jnp.sum(probs, axis=1), 1.0, atol=1e-3)

    print("KERNEL_OK")
</pallas_src>

<mosaic_0001>
module attributes {stable_mosaic.version = 11 : i64} {
  func.func @_mlp_softmax_kernel(%arg0: i32, %arg1: memref<16x6400xf32, #tpu.memory_space<vmem>>, %arg2: memref<6400x64xbf16, #tpu.memory_space<vmem>>, %arg3: memref<1x64xf32, #tpu.memory_space<vmem>>, %arg4: memref<64x6xf32, #tpu.memory_space<vmem>>, %arg5: memref<1x6xf32, #tpu.memory_space<vmem>>, %arg6: memref<16x6xf32, #tpu.memory_space<vmem>>) attributes {dimension_semantics = [#tpu.dimension_semantics<parallel>], iteration_bounds = array<i64: 1>, scalar_prefetch = 0 : i64, scratch_operands = 0 : i64, tpu.core_type = #tpu.core_type<tc>, window_params = [{transform_indices = @transform_0, window_bounds = array<i64: 16, 6400>}, {pipeline_mode = #tpu.pipeline_mode<synchronous>, transform_indices = @transform_1, window_bounds = array<i64: 6400, 64>}, {pipeline_mode = #tpu.pipeline_mode<synchronous>, transform_indices = @transform_2, window_bounds = array<i64: 1, 64>}, {pipeline_mode = #tpu.pipeline_mode<synchronous>, transform_indices = @transform_3, window_bounds = array<i64: 64, 6>}, {pipeline_mode = #tpu.pipeline_mode<synchronous>, transform_indices = @transform_4, window_bounds = array<i64: 1, 6>}, {transform_indices = @transform_5, window_bounds = array<i64: 16, 6>}]} {
    %c0 = arith.constant 0 : index
    %c0_0 = arith.constant 0 : index
    %0 = vector.load %arg1[%c0, %c0_0] : memref<16x6400xf32, #tpu.memory_space<vmem>>, vector<16x6400xf32>
    %1 = arith.truncf %0 : vector<16x6400xf32> to vector<16x6400xbf16>
    %c0_1 = arith.constant 0 : index
    %c0_2 = arith.constant 0 : index
    %2 = vector.load %arg2[%c0_1, %c0_2] : memref<6400x64xbf16, #tpu.memory_space<vmem>>, vector<6400x64xbf16>
    %cst = arith.constant dense<0.000000e+00> : vector<16x64xf32>
    %3 = tpu.matmul %1, %2, %cst {dimension_numbers = #tpu.dot_dimension_numbers<[1], [0], [0], [1], [0, 0, 1, 1], [], []>} : vector<16x6400xbf16>, vector<6400x64xbf16>, vector<16x64xf32> -> vector<16x64xf32>
    %c0_3 = arith.constant 0 : index
    %c0_4 = arith.constant 0 : index
    %4 = vector.load %arg3[%c0_3, %c0_4] : memref<1x64xf32, #tpu.memory_space<vmem>>, vector<1x64xf32>
    %5 = vector.broadcast %4 : vector<1x64xf32> to vector<16x64xf32>
    %6 = arith.addf %3, %5 : vector<16x64xf32>
    %7 = math.tanh %6 : vector<16x64xf32>
    %c0_5 = arith.constant 0 : index
    %c0_6 = arith.constant 0 : index
    %8 = vector.load %arg4[%c0_5, %c0_6] : memref<64x6xf32, #tpu.memory_space<vmem>>, vector<64x6xf32>
    %cst_7 = arith.constant dense<0.000000e+00> : vector<16x6xf32>
    %9 = tpu.matmul %7, %8, %cst_7 {dimension_numbers = #tpu.dot_dimension_numbers<[1], [0], [0], [1], [0, 0, 1, 1], [], []>} : vector<16x64xf32>, vector<64x6xf32>, vector<16x6xf32> -> vector<16x6xf32>
    %c0_8 = arith.constant 0 : index
    %c0_9 = arith.constant 0 : index
    %10 = vector.load %arg5[%c0_8, %c0_9] : memref<1x6xf32, #tpu.memory_space<vmem>>, vector<1x6xf32>
    %11 = vector.broadcast %10 : vector<1x6xf32> to vector<16x6xf32>
    %12 = arith.addf %9, %11 : vector<16x6xf32>
    %cst_10 = arith.constant dense<0xFF800000> : vector<16xf32>
    %13 = vector.multi_reduction <maximumf>, %12, %cst_10 [1] : vector<16x6xf32> to vector<16xf32>
    %14 = vector.shape_cast %13 : vector<16xf32> to vector<16x1xf32>
    %15 = vector.broadcast %14 : vector<16x1xf32> to vector<16x6xf32>
    %16 = arith.subf %12, %15 : vector<16x6xf32>
    %17 = math.exp %16 : vector<16x6xf32>
    %cst_11 = arith.constant dense<0.000000e+00> : vector<16xf32>
    %18 = vector.multi_reduction <add>, %17, %cst_11 [1] : vector<16x6xf32> to vector<16xf32>
    %19 = vector.shape_cast %18 : vector<16xf32> to vector<16x1xf32>
    %20 = vector.broadcast %19 : vector<16x1xf32> to vector<16x6xf32>
    %21 = arith.divf %17, %20 : vector<16x6xf32>
    %c0_12 = arith.constant 0 : index
    %c0_13 = arith.constant 0 : index
    %22 = vector.load %arg6[%c0_12, %c0_13] : memref<16x6xf32, #tpu.memory_space<vmem>>, vector<16x6xf32>
    tpu.vector_store %arg6[%c0_12, %c0_13], %21 {strides = array<i32>} : memref<16x6xf32, #tpu.memory_space<vmem>>, vector<16x6xf32>,
    return
  }
  func.func @transform_0(%arg0: i32) -> (i32, i32) {
    %c0_i32 = arith.constant 0 : i32
    %c0_i32_0 = arith.constant 0 : i32
    return %arg0, %c0_i32 : i32, i32
  }
  func.func @transform_1(%arg0: i32) -> (i32, i32) {
    %c0_i32 = arith.constant 0 : i32
    %c0_i32_0 = arith.constant 0 : i32
    %c0_i32_1 = arith.constant 0 : i32
    return %c0_i32, %c0_i32_0 : i32, i32
  }
  func.func @transform_2(%arg0: i32) -> (i32, i32) {
    %c0_i32 = arith.constant 0 : i32
    %c0_i32_0 = arith.constant 0 : i32
    %c0_i32_1 = arith.constant 0 : i32
    return %c0_i32, %c0_i32_0 : i32, i32
  }
  func.func @transform_3(%arg0: i32) -> (i32, i32) {
    %c0_i32 = arith.constant 0 : i32
    %c0_i32_0 = arith.constant 0 : i32
    %c0_i32_1 = arith.constant 0 : i32
    return %c0_i32, %c0_i32_0 : i32, i32
  }
  func.func @transform_4(%arg0: i32) -> (i32, i32) {
    %c0_i32 = arith.constant 0 : i32
    %c0_i32_0 = arith.constant 0 : i32
    %c0_i32_1 = arith.constant 0 : i32
    return %c0_i32, %c0_i32_0 : i32, i32
  }
  func.func @transform_5(%arg0: i32) -> (i32, i32) {
    %c0_i32 = arith.constant 0 : i32
    %c0_i32_0 = arith.constant 0 : i32
    return %arg0, %c0_i32 : i32, i32
  }
}

</mosaic_0001>

<llo_original>
// kernel: tpu_custom_call.1
$region0: #{tpu_custom_call.1}
  #allocation0 [shape = 'u32[]', space=smem, size = 0x4, offset = 0x4, fixed_abs, tag = 'smem constant byte address 0x4 - core index']
  #allocation1 [shape = 'u32[144,128]{1,0:T(1,128)}', space=vmem, size = 0x12000, scoped, tag = 'internal scratch']
  %s0 = inlined_call_operand.vmem [shape: f32[2,6400], index: 0, kind: input, shape index: {}]
  %s1 = inlined_call_operand.vmem [shape: bf16[6400,64], index: 1, kind: input, shape index: {}]
  %s2 = inlined_call_operand.vmem [shape: f32[1,64], index: 2, kind: input, shape index: {}]
  %s3 = inlined_call_operand.vmem [shape: f32[64,6], index: 3, kind: input, shape index: {}]
  %s4 = inlined_call_operand.vmem [shape: f32[1,6], index: 4, kind: input, shape index: {}]
  %s5 = inlined_call_operand.hbm [shape: f32[2,6], index: 5, kind: output, shape index: {}]
  %s6 = sld [smem:[#allocation0]]
  $region30: #{tpu_custom_call.1} parent=0
    _
  %s8 = ssub.s32 1, %s6
  %s9 = scalar_select 0, %s8, %s6
  $region1: #{tpu_custom_call.1} parent=0
    #allocation2 [shape = 'u8[8192]{0}', space=vmem, size = 0x2000, scoped, tag = 'output window, operand 0, single buffered']
    #allocation3 [shape = 's32[1]{0}', space=sflag, size = 0x4, scoped, tag = 'scoped memory for tpu_custom_call.1']
    %10 = vsyncpa [#allocation3], 0
    // Predicated region
    $region2: #{tpu_custom_call.1} parent=1 // pred_check
      _
    $region3: #{tpu_custom_call.1} parent=1 // pred_check_branch
      %12 = sbr.rel (0) target = $region5
    $region4: #{tpu_custom_call.1} parent=1 // pred_region
      _
    $region5: #{tpu_custom_call.1} parent=1 // pred_fallthru
      _
    // Predicated region
    $region6: #{tpu_custom_call.1} parent=1 // pred_check
      _
    $region7: #{tpu_custom_call.1} parent=1 // pred_check_branch
      %14 = sbr.rel (0) target = $region9
    $region8: #{tpu_custom_call.1} parent=1 // pred_region
      _
    $region9: #{tpu_custom_call.1} parent=1 // pred_fallthru
      _
    // Predicated region
    $region10: #{tpu_custom_call.1} parent=1 // pred_check
      _
    $region11: #{tpu_custom_call.1} parent=1 // pred_check_branch
      %16 = sbr.rel (0) target = $region13
    $region12: #{tpu_custom_call.1} parent=1 // pred_region
      _
    $region13: #{tpu_custom_call.1} parent=1 // pred_fallthru
      _
    // Predicated region
    $region14: #{tpu_custom_call.1} parent=1 // pred_check
      _
    $region15: #{tpu_custom_call.1} parent=1 // pred_check_branch
      %18 = sbr.rel (0) target = $region17
    $region16: #{tpu_custom_call.1} parent=1 // pred_region
      _
    $region17: #{tpu_custom_call.1} parent=1 // pred_fallthru
      _
    // Predicated region
    $region18: #{tpu_custom_call.1} parent=1 // pred_check
      _
    $region19: #{tpu_custom_call.1} parent=1 // pred_check_branch
      %20 = sbr.rel (0) target = $region21
    $region20: #{tpu_custom_call.1} parent=1 // pred_region
      _
    $region21: #{tpu_custom_call.1} parent=1 // pred_fallthru
      _
    %v22 = vld [vmem:[%s0] sm:$0xff]
    %v23 = vld [vmem:[%s0 + $0x8] sm:$0xff]
    %v24 = vld [vmem:[%s0 + $0x10] sm:$0xff]
    %v25 = vld [vmem:[%s0 + $0x18] sm:$0xff]
    %v26 = vld [vmem:[%s0 + $0x20] sm:$0xff]
    %v27 = vld [vmem:[%s0 + $0x28] sm:$0xff]
    %v28 = vld [vmem:[%s0 + $0x30] sm:$0xff]
    %v29 = vld [vmem:[%s0 + $0x38] sm:$0xff]
    %v30 = vld [vmem:[%s0 + $0x40] sm:$0xff]
    %v31 = vld [vmem:[%s0 + $0x48] sm:$0xff]
    %v32 = vld [vmem:[%s0 + $0x50] sm:$0xff]
    %v33 = vld [vmem:[%s0 + $0x58] sm:$0xff]
    %v34 = vld [vmem:[%s0 + $0x60] sm:$0xf]
    %v35 = vld [vmem:[%s0 + $0x64] sm:$0xff]
    %v36 = vld [vmem:[%s0 + $0x6c] sm:$0xff]
    %v37 = vld [vmem:[%s0 + $0x74] sm:$0xff]
    %v38 = vld [vmem:[%s0 + $0x7c] sm:$0xff]
    %v39 = vld [vmem:[%s0 + $0x84] sm:$0xff]
    %v40 = vld [vmem:[%s0 + $0x8c] sm:$0xff]
    %v41 = vld [vmem:[%s0 + $0x94] sm:$0xff]
    %v42 = vld [vmem:[%s0 + $0x9c] sm:$0xff]
    %v43 = vld [vmem:[%s0 + $0xa4] sm:$0xff]
    %v44 = vld [vmem:[%s0 + $0xac] sm:$0xff]
    %v45 = vld [vmem:[%s0 + $0xb4] sm:$0xff]
    %v46 = vld [vmem:[%s0 + $0xbc] sm:$0xff]
    %v47 = vld [vmem:[%s0 + $0xc4] sm:$0xf]
    %v48 = vld [vmem:[%s0 + $0xc8] sm:$0xff]
    %v49 = vld [vmem:[%s0 + $0xd0] sm:$0xff]
    %v50 = vld [vmem:[%s0 + $0xd8] sm:$0xff]
    %v51 = vld [vmem:[%s0 + $0xe0] sm:$0xff]
    %v52 = vld [vmem:[%s0 + $0xe8] sm:$0xff]
    %v53 = vld [vmem:[%s0 + $0xf0] sm:$0xff]
    %v54 = vld [vmem:[%s0 + $0xf8] sm:$0xff]
    %v55 = vld [vmem:[%s0 + $0x100] sm:$0xff]
    %v56 = vld [vmem:[%s0 + $0x108] sm:$0xff]
    %v57 = vld [vmem:[%s0 + $0x110] sm:$0xff]
    %v58 = vld [vmem:[%s0 + $0x118] sm:$0xff]
    %v59 = vld [vmem:[%s0 + $0x120] sm:$0xff]
    %v60 = vld [vmem:[%s0 + $0x128] sm:$0xf]
    %v61 = vld [vmem:[%s0 + $0x12c] sm:$0xff]
    %v62 = vld [vmem:[%s0 + $0x134] sm:$0xff]
    %v63 = vld [vmem:[%s0 + $0x13c] sm:$0xff]
    %v64 = vld [vmem:[%s0 + $0x144] sm:$0xff]
    %v65 = vld [vmem:[%s0 + $0x14c] sm:$0xff]
    %v66 = vld [vmem:[%s0 + $0x154] sm:$0xff]
    %v67 = vld [vmem:[%s0 + $0x15c] sm:$0xff]
    %v68 = vld [vmem:[%s0 + $0x164] sm:$0xff]
    %v69 = vld [vmem:[%s0 + $0x16c] sm:$0xff]
    %v70 = vld [vmem:[%s0 + $0x174] sm:$0xff]
    %v71 = vld [vmem:[%s0 + $0x17c] sm:$0xff]
    %v72 = vld [vmem:[%s0 + $0x184] sm:$0xff]
    %v73 = vld [vmem:[%s0 + $0x18c] sm:$0xf]
    %v74 = vld [vmem:[%s0 + $0x190] sm:$0xff]
    %v75 = vld [vmem:[%s0 + $0x198] sm:$0xff]
    %v76 = vld [vmem:[%s0 + $0x1a0] sm:$0xff]
    %v77 = vld [vmem:[%s0 + $0x1a8] sm:$0xff]
    %v78 = vld [vmem:[%s0 + $0x1b0] sm:$0xff]
    %v79 = vld [vmem:[%s0 + $0x1b8] sm:$0xff]
    %v80 = vld [vmem:[%s0 + $0x1c0] sm:$0xff]
    %v81 = vld [vmem:[%s0 + $0x1c8] sm:$0xff]
    %v82 = vld [vmem:[%s0 + $0x1d0] sm:$0xff]
    %v83 = vld [vmem:[%s0 + $0x1d8] sm:$0xff]
    %v84 = vld [vmem:[%s0 + $0x1e0] sm:$0xff]
    %v85 = vld [vmem:[%s0 + $0x1e8] sm:$0xff]
    %v86 = vld [vmem:[%s0 + $0x1f0] sm:$0xf]
    %v87 = vld [vmem:[%s0 + $0x1f4] sm:$0xff]
    %v88 = vld [vmem:[%s0 + $0x1fc] sm:$0xff]
    %v89 = vld [vmem:[%s0 + $0x204] sm:$0xff]
    %v90 = vld [vmem:[%s0 + $0x20c] sm:$0xff]
    %v91 = vld [vmem:[%s0 + $0x214] sm:$0xff]
    %v92 = vld [vmem:[%s0 + $0x21c] sm:$0xff]
    %v93 = vld [vmem:[%s0 + $0x224] sm:$0xff]
    %v94 = vld [vmem:[%s0 + $0x22c] sm:$0xff]
    %v95 = vld [vmem:[%s0 + $0x234] sm:$0xff]
    %v96 = vld [vmem:[%s0 + $0x23c] sm:$0xff]
    %v97 = vld [vmem:[%s0 + $0x244] sm:$0xff]
    %v98 = vld [vmem:[%s0 + $0x24c] sm:$0xff]
    %v99 = vld [vmem:[%s0 + $0x254] sm:$0xf]
    %v100 = vld [vmem:[%s0 + $0x258] sm:$0xff]
    %v101 = vld [vmem:[%s0 + $0x260] sm:$0xff]
    %v102 = vld [vmem:[%s0 + $0x268] sm:$0xff]
    %v103 = vld [vmem:[%s0 + $0x270] sm:$0xff]
    %v104 = vld [vmem:[%s0 + $0x278] sm:$0xff]
    %v105 = vld [vmem:[%s0 + $0x280] sm:$0xff]
    %v106 = vld [vmem:[%s0 + $0x288] sm:$0xff]
    %v107 = vld [vmem:[%s0 + $0x290] sm:$0xff]
    %v108 = vld [vmem:[%s0 + $0x298] sm:$0xff]
    %v109 = vld [vmem:[%s0 + $0x2a0] sm:$0xff]
    %v110 = vld [vmem:[%s0 + $0x2a8] sm:$0xff]
    %v111 = vld [vmem:[%s0 + $0x2b0] sm:$0xff]
    %v112 = vld [vmem:[%s0 + $0x2b8] sm:$0xf]
    %v113 = vld [vmem:[%s0 + $0x2bc] sm:$0xff]
    %v114 = vld [vmem:[%s0 + $0x2c4] sm:$0xff]
    %v115 = vld [vmem:[%s0 + $0x2cc] sm:$0xff]
    %v116 = vld [vmem:[%s0 + $0x2d4] sm:$0xff]
    %v117 = vld [vmem:[%s0 + $0x2dc] sm:$0xff]
    %v118 = vld [vmem:[%s0 + $0x2e4] sm:$0xff]
    %v119 = vld [vmem:[%s0 + $0x2ec] sm:$0xff]
    %v120 = vld [vmem:[%s0 + $0x2f4] sm:$0xff]
    %v121 = vld [vmem:[%s0 + $0x2fc] sm:$0xff]
    %v122 = vld [vmem:[%s0 + $0x304] sm:$0xff]
    %v123 = vld [vmem:[%s0 + $0x30c] sm:$0xff]
    %v124 = vld [vmem:[%s0 + $0x314] sm:$0xff]
    %v125 = vld [vmem:[%s0 + $0x31c] sm:$0xf]
    %v230 = vcombine.low %v22, %v35
    %v231 = vcombine.high %v22, %v35
    %v232 = vcombine.low %v48, %v61
    %v233 = vcombine.high %v48, %v61
    %v235 = vunpack.c.l.s4 1983009808
    %v236 = vunpack.c.0.s8 %v235
    %v237 = vlaneseq
    %v238 = vshrl.u32 %v237, 7
    %v239 = vsub.s32 %v236, %v238
    %v240 = vrot.slane %v230, %v239
    %v242 = vunpack.c.l.s4 1983009808
    %v243 = vunpack.c.0.s8 %v242
    %v244 = vlaneseq
    %v245 = vshrl.u32 %v244, 7
    %v246 = vsub.s32 %v243, %v245
    %v247 = vrot.slane %v231, %v246
    %v249 = vunpack.c.l.s4 1983009808
    %v250 = vunpack.c.0.s8 %v249
    %v251 = vlaneseq
    %v252 = vshrl.u32 %v251, 7
    %v253 = vsub.s32 %v250, %v252
    %v254 = vrot.slane %v232, %v253
    %v256 = vunpack.c.l.s4 1983009808
    %v257 = vunpack.c.0.s8 %v256
    %v258 = vlaneseq
    %v259 = vshrl.u32 %v258, 7
    %v260 = vsub.s32 %v257, %v259
    %v261 = vrot.slane %v233, %v260
    %v262 = vcombine.low %v240, %v254
    %v263 = vcombine.high %v240, %v254
    %v264 = vcombine.low %v247, %v261
    %v265 = vcombine.high %v247, %v261
    %v266 = vcombine.low %v23, %v36
    %v267 = vcombine.high %v23, %v36
    %v268 = vcombine.low %v49, %v62
    %v269 = vcombine.high %v49, %v62
    %v271 = vunpack.c.l.s4 1983009808
    %v272 = vunpack.c.0.s8 %v271
    %v273 = vlaneseq
    %v274 = vshrl.u32 %v273, 7
    %v275 = vsub.s32 %v272, %v274
    %v276 = vrot.slane %v266, %v275
    %v278 = vunpack.c.l.s4 1983009808
    %v279 = vunpack.c.0.s8 %v278
    %v280 = vlaneseq
    %v281 = vshrl.u32 %v280, 7
    %v282 = vsub.s32 %v279, %v281
    %v283 = vrot.slane %v267, %v282
    %v285 = vunpack.c.l.s4 1983009808
    %v286 = vunpack.c.0.s8 %v285
    %v287 = vlaneseq
    %v288 = vshrl.u32 %v287, 7
    %v289 = vsub.s32 %v286, %v288
    %v290 = vrot.slane %v268, %v289
    %v292 = vunpack.c.l.s4 1983009808
    %v293 = vunpack.c.0.s8 %v292
    %v294 = vlaneseq
    %v295 = vshrl.u32 %v294, 7
    %v296 = vsub.s32 %v293, %v295
    %v297 = vrot.slane %v269, %v296
    %v298 = vcombine.low %v276, %v290
    %v299 = vcombine.high %v276, %v290
    %v300 = vcombine.low %v283, %v297
    %v301 = vcombine.high %v283, %v297
    %v302 = vcombine.low %v24, %v37
    %v303 = vcombine.high %v24, %v37
    %v304 = vcombine.low %v50, %v63
    %v305 = vcombine.high %v50, %v63
    %v307 = vunpack.c.l.s4 1983009808
    %v308 = vunpack.c.0.s8 %v307
    %v309 = vlaneseq
    %v310 = vshrl.u32 %v309, 7
    %v311 = vsub.s32 %v308, %v310
    %v312 = vrot.slane %v302, %v311
    %v314 = vunpack.c.l.s4 1983009808
    %v315 = vunpack.c.0.s8 %v314
    %v316 = vlaneseq
    %v317 = vshrl.u32 %v316, 7
    %v318 = vsub.s32 %v315, %v317
    %v319 = vrot.slane %v303, %v318
    %v321 = vunpack.c.l.s4 1983009808
    %v322 = vunpack.c.0.s8 %v321
    %v323 = vlaneseq
    %v324 = vshrl.u32 %v323, 7
    %v325 = vsub.s32 %v322, %v324
    %v326 = vrot.slane %v304, %v325
    %v328 = vunpack.c.l.s4 1983009808
    %v329 = vunpack.c.0.s8 %v328
    %v330 = vlaneseq
    %v331 = vshrl.u32 %v330, 7
    %v332 = vsub.s32 %v329, %v331
    %v333 = vrot.slane %v305, %v332
    %v334 = vcombine.low %v312, %v326
    %v335 = vcombine.high %v312, %v326
    %v336 = vcombine.low %v319, %v333
    %v337 = vcombine.high %v319, %v333
    %v338 = vcombine.low %v25, %v38
    %v339 = vcombine.high %v25, %v38
    %v340 = vcombine.low %v51, %v64
    %v341 = vcombine.high %v51, %v64
    %v343 = vunpack.c.l.s4 1983009808
    %v344 = vunpack.c.0.s8 %v343
    %v345 = vlaneseq
    %v346 = vshrl.u32 %v345, 7
    %v347 = vsub.s32 %v344, %v346
    %v348 = vrot.slane %v338, %v347
    %v350 = vunpack.c.l.s4 1983009808
    %v351 = vunpack.c.0.s8 %v350
    %v352 = vlaneseq
    %v353 = vshrl.u32 %v352, 7
    %v354 = vsub.s32 %v351, %v353
    %v355 = vrot.slane %v339, %v354
    %v357 = vunpack.c.l.s4 1983009808
    %v358 = vunpack.c.0.s8 %v357
    %v359 = vlaneseq
    %v360 = vshrl.u32 %v359, 7
    %v361 = vsub.s32 %v358, %v360
    %v362 = vrot.slane %v340, %v361
    %v364 = vunpack.c.l.s4 1983009808
    %v365 = vunpack.c.0.s8 %v364
    %v366 = vlaneseq
    %v367 = vshrl.u32 %v366, 7
    %v368 = vsub.s32 %v365, %v367
    %v369 = vrot.slane %v341, %v368
    %v370 = vcombine.low %v348, %v362
    %v371 = vcombine.high %v348, %v362
    %v372 = vcombine.low %v355, %v369
    %v373 = vcombine.high %v355, %v369
    %v374 = vcombine.low %v26, %v39
    %v375 = vcombine.high %v26, %v39
    %v376 = vcombine.low %v52, %v65
    %v377 = vcombine.high %v52, %v65
    %v379 = vunpack.c.l.s4 1983009808
    %v380 = vunpack.c.0.s8 %v379
    %v381 = vlaneseq
    %v382 = vshrl.u32 %v381, 7
    %v383 = vsub.s32 %v380, %v382
    %v384 = vrot.slane %v374, %v383
    %v386 = vunpack.c.l.s4 1983009808
    %v387 = vunpack.c.0.s8 %v386
    %v388 = vlaneseq
    %v389 = vshrl.u32 %v388, 7
    %v390 = vsub.s32 %v387, %v389
    %v391 = vrot.slane %v375, %v390
    %v393 = vunpack.c.l.s4 1983009808
    %v394 = vunpack.c.0.s8 %v393
    %v395 = vlaneseq
    %v396 = vshrl.u32 %v395, 7
    %v397 = vsub.s32 %v394, %v396
    %v398 = vrot.slane %v376, %v397
    %v400 = vunpack.c.l.s4 1983009808
    %v401 = vunpack.c.0.s8 %v400
    %v402 = vlaneseq
    %v403 = vshrl.u32 %v402, 7
    %v404 = vsub.s32 %v401, %v403
    %v405 = vrot.slane %v377, %v404
    %v406 = vcombine.low %v384, %v398
    %v407 = vcombine.high %v384, %v398
    %v408 = vcombine.low %v391, %v405
    %v409 = vcombine.high %v391, %v405
    %v410 = vcombine.low %v27, %v40
    %v411 = vcombine.high %v27, %v40
    %v412 = vcombine.low %v53, %v66
    %v413 = vcombine.high %v53, %v66
    %v415 = vunpack.c.l.s4 1983009808
    %v416 = vunpack.c.0.s8 %v415
    %v417 = vlaneseq
    %v418 = vshrl.u32 %v417, 7
    %v419 = vsub.s32 %v416, %v418
    %v420 = vrot.slane %v410, %v419
    %v422 = vunpack.c.l.s4 1983009808
    %v423 = vunpack.c.0.s8 %v422
    %v424 = vlaneseq
    %v425 = vshrl.u32 %v424, 7
    %v426 = vsub.s32 %v423, %v425
    %v427 = vrot.slane %v411, %v426
    %v429 = vunpack.c.l.s4 1983009808
    %v430 = vunpack.c.0.s8 %v429
    %v431 = vlaneseq
    %v432 = vshrl.u32 %v431, 7
    %v433 = vsub.s32 %v430, %v432
    %v434 = vrot.slane %v412, %v433
    %v436 = vunpack.c.l.s4 1983009808
    %v437 = vunpack.c.0.s8 %v436
    %v438 = vlaneseq
    %v439 = vshrl.u32 %v438, 7
    %v440 = vsub.s32 %v437, %v439
    %v441 = vrot.slane %v413, %v440
    %v442 = vcombine.low %v420, %v434
    %v443 = vcombine.high %v420, %v434
    %v444 = vcombine.low %v427, %v441
    %v445 = vcombine.high %v427, %v441
    %v446 = vcombine.low %v28, %v41
    %v447 = vcombine.high %v28, %v41
    %v448 = vcombine.low %v54, %v67
    %v449 = vcombine.high %v54, %v67
    %v451 = vunpack.c.l.s4 1983009808
    %v452 = vunpack.c.0.s8 %v451
    %v453 = vlaneseq
    %v454 = vshrl.u32 %v453, 7
    %v455 = vsub.s32 %v452, %v454
    %v456 = vrot.slane %v446, %v455
    %v458 = vunpack.c.l.s4 1983009808
    %v459 = vunpack.c.0.s8 %v458
    %v460 = vlaneseq
    %v461 = vshrl.u32 %v460, 7
    %v462 = vsub.s32 %v459, %v461
    %v463 = vrot.slane %v447, %v462
    %v465 = vunpack.c.l.s4 1983009808
    %v466 = vunpack.c.0.s8 %v465
    %v467 = vlaneseq
    %v468 = vshrl.u32 %v467, 7
    %v469 = vsub.s32 %v466, %v468
    %v470 = vrot.slane %v448, %v469
    %v472 = vunpack.c.l.s4 1983009808
    %v473 = vunpack.c.0.s8 %v472
    %v474 = vlaneseq
    %v475 = vshrl.u32 %v474, 7
    %v476 = vsub.s32 %v473, %v475
    %v477 = vrot.slane %v449, %v476
    %v478 = vcombine.low %v456, %v470
    %v479 = vcombine.high %v456, %v470
    %v480 = vcombine.low %v463, %v477
    %v481 = vcombine.high %v463, %v477
    %v482 = vcombine.low %v29, %v42
    %v483 = vcombine.high %v29, %v42
    %v484 = vcombine.low %v55, %v68
    %v485 = vcombine.high %v55, %v68
    %v487 = vunpack.c.l.s4 1983009808
    %v488 = vunpack.c.0.s8 %v487
    %v489 = vlaneseq
    %v490 = vshrl.u32 %v489, 7
    %v491 = vsub.s32 %v488, %v490
    %v492 = vrot.slane %v482, %v491
    %v494 = vunpack.c.l.s4 1983009808
    %v495 = vunpack.c.0.s8 %v494
    %v496 = vlaneseq
    %v497 = vshrl.u32 %v496, 7
    %v498 = vsub.s32 %v495, %v497
    %v499 = vrot.slane %v483, %v498
    %v501 = vunpack.c.l.s4 1983009808
    %v502 = vunpack.c.0.s8 %v501
    %v503 = vlaneseq
    %v504 = vshrl.u32 %v503, 7
    %v505 = vsub.s32 %v502, %v504
    %v506 = vrot.slane %v484, %v505
    %v508 = vunpack.c.l.s4 1983009808
    %v509 = vunpack.c.0.s8 %v508
    %v510 = vlaneseq
    %v511 = vshrl.u32 %v510, 7
    %v512 = vsub.s32 %v509, %v511
    %v513 = vrot.slane %v485, %v512
    %v514 = vcombine.low %v492, %v506
    %v515 = vcombine.high %v492, %v506
    %v516 = vcombine.low %v499, %v513
    %v517 = vcombine.high %v499, %v513
    %v518 = vcombine.low %v30, %v43
    %v519 = vcombine.high %v30, %v43
    %v520 = vcombine.low %v56, %v69
    %v521 = vcombine.high %v56, %v69
    %v523 = vunpack.c.l.s4 1983009808
    %v524 = vunpack.c.0.s8 %v523
    %v525 = vlaneseq
    %v526 = vshrl.u32 %v525, 7
    %v527 = vsub.s32 %v524, %v526
    %v528 = vrot.slane %v518, %v527
    %v530 = vunpack.c.l.s4 1983009808
    %v531 = vunpack.c.0.s8 %v530
    %v532 = vlaneseq
    %v533 = vshrl.u32 %v532, 7
    %v534 = vsub.s32 %v531, %v533
    %v535 = vrot.slane %v519, %v534
    %v537 = vunpack.c.l.s4 1983009808
    %v538 = vunpack.c.0.s8 %v537
    %v539 = vlaneseq
    %v540 = vshrl.u32 %v539, 7
    %v541 = vsub.s32 %v538, %v540
    %v542 = vrot.slane %v520, %v541
    %v544 = vunpack.c.l.s4 1983009808
    %v545 = vunpack.c.0.s8 %v544
    %v546 = vlaneseq
    %v547 = vshrl.u32 %v546, 7
    %v548 = vsub.s32 %v545, %v547
    %v549 = vrot.slane %v521, %v548
    %v550 = vcombine.low %v528, %v542
    %v551 = vcombine.high %v528, %v542
    %v552 = vcombine.low %v535, %v549
    %v553 = vcombine.high %v535, %v549
    %v554 = vcombine.low %v31, %v44
    %v555 = vcombine.high %v31, %v44
    %v556 = vcombine.low %v57, %v70
    %v557 = vcombine.high %v57, %v70
    %v559 = vunpack.c.l.s4 1983009808
    %v560 = vunpack.c.0.s8 %v559
    %v561 = vlaneseq
    %v562 = vshrl.u32 %v561, 7
    %v563 = vsub.s32 %v560, %v562
    %v564 = vrot.slane %v554, %v563
    %v566 = vunpack.c.l.s4 1983009808
    %v567 = vunpack.c.0.s8 %v566
    %v568 = vlaneseq
    %v569 = vshrl.u32 %v568, 7
    %v570 = vsub.s32 %v567, %v569
    %v571 = vrot.slane %v555, %v570
    %v573 = vunpack.c.l.s4 1983009808
    %v574 = vunpack.c.0.s8 %v573
    %v575 = vlaneseq
    %v576 = vshrl.u32 %v575, 7
    %v577 = vsub.s32 %v574, %v576
    %v578 = vrot.slane %v556, %v577
    %v580 = vunpack.c.l.s4 1983009808
    %v581 = vunpack.c.0.s8 %v580
    %v582 = vlaneseq
    %v583 = vshrl.u32 %v582, 7
    %v584 = vsub.s32 %v581, %v583
    %v585 = vrot.slane %v557, %v584
    %v586 = vcombine.low %v564, %v578
    %v587 = vcombine.high %v564, %v578
    %v588 = vcombine.low %v571, %v585
    %v589 = vcombine.high %v571, %v585
    %v590 = vcombine.low %v32, %v45
    %v591 = vcombine.high %v32, %v45
    %v592 = vcombine.low %v58, %v71
    %v593 = vcombine.high %v58, %v71
    %v595 = vunpack.c.l.s4 1983009808
    %v596 = vunpack.c.0.s8 %v595
    %v597 = vlaneseq
    %v598 = vshrl.u32 %v597, 7
    %v599 = vsub.s32 %v596, %v598
    %v600 = vrot.slane %v590, %v599
    %v602 = vunpack.c.l.s4 1983009808
    %v603 = vunpack.c.0.s8 %v602
    %v604 = vlaneseq
    %v605 = vshrl.u32 %v604, 7
    %v606 = vsub.s32 %v603, %v605
    %v607 = vrot.slane %v591, %v606
    %v609 = vunpack.c.l.s4 1983009808
    %v610 = vunpack.c.0.s8 %v609
    %v611 = vlaneseq
    %v612 = vshrl.u32 %v611, 7
    %v613 = vsub.s32 %v610, %v612
    %v614 = vrot.slane %v592, %v613
    %v616 = vunpack.c.l.s4 1983009808
    %v617 = vunpack.c.0.s8 %v616
    %v618 = vlaneseq
    %v619 = vshrl.u32 %v618, 7
    %v620 = vsub.s32 %v617, %v619
    %v621 = vrot.slane %v593, %v620
    %v622 = vcombine.low %v600, %v614
    %v623 = vcombine.high %v600, %v614
    %v624 = vcombine.low %v607, %v621
    %v625 = vcombine.high %v607, %v621
    %v626 = vcombine.low %v33, %v46
    %v627 = vcombine.high %v33, %v46
    %v628 = vcombine.low %v59, %v72
    %v629 = vcombine.high %v59, %v72
    %v631 = vunpack.c.l.s4 1983009808
    %v632 = vunpack.c.0.s8 %v631
    %v633 = vlaneseq
    %v634 = vshrl.u32 %v633, 7
    %v635 = vsub.s32 %v632, %v634
    %v636 = vrot.slane %v626, %v635
    %v638 = vunpack.c.l.s4 1983009808
    %v639 = vunpack.c.0.s8 %v638
    %v640 = vlaneseq
    %v641 = vshrl.u32 %v640, 7
    %v642 = vsub.s32 %v639, %v641
    %v643 = vrot.slane %v627, %v642
    %v645 = vunpack.c.l.s4 1983009808
    %v646 = vunpack.c.0.s8 %v645
    %v647 = vlaneseq
    %v648 = vshrl.u32 %v647, 7
    %v649 = vsub.s32 %v646, %v648
    %v650 = vrot.slane %v628, %v649
    %v652 = vunpack.c.l.s4 1983009808
    %v653 = vunpack.c.0.s8 %v652
    %v654 = vlaneseq
    %v655 = vshrl.u32 %v654, 7
    %v656 = vsub.s32 %v653, %v655
    %v657 = vrot.slane %v629, %v656
    %v658 = vcombine.low %v636, %v650
    %v659 = vcombine.high %v636, %v650
    %v660 = vcombine.low %v643, %v657
    %v661 = vcombine.high %v643, %v657
    %v662 = vcombine.low %v34, %v47
    %v663 = vcombine.low %v60, %v73
    %v665 = vunpack.c.l.s4 1983009808
    %v666 = vunpack.c.0.s8 %v665
    %v667 = vlaneseq
    %v668 = vshrl.u32 %v667, 7
    %v669 = vsub.s32 %v666, %v668
    %v670 = vrot.slane %v662, %v669
    %v672 = vunpack.c.l.s4 1983009808
    %v673 = vunpack.c.0.s8 %v672
    %v674 = vlaneseq
    %v675 = vshrl.u32 %v674, 7
    %v676 = vsub.s32 %v673, %v675
    %v677 = vrot.slane %v663, %v676
    %v678 = vcombine.low %v670, %v677
    %v679 = vcombine.high %v670, %v677
    %v680 = vcombine.low %v74, %v87
    %v681 = vcombine.high %v74, %v87
    %v682 = vcombine.low %v100, %v113
    %v683 = vcombine.high %v100, %v113
    %v685 = vunpack.c.l.s4 1983009808
    %v686 = vunpack.c.0.s8 %v685
    %v687 = vlaneseq
    %v688 = vshrl.u32 %v687, 7
    %v689 = vsub.s32 %v686, %v688
    %v690 = vrot.slane %v680, %v689
    %v692 = vunpack.c.l.s4 1983009808
    %v693 = vunpack.c.0.s8 %v692
    %v694 = vlaneseq
    %v695 = vshrl.u32 %v694, 7
    %v696 = vsub.s32 %v693, %v695
    %v697 = vrot.slane %v681, %v696
    %v699 = vunpack.c.l.s4 1983009808
    %v700 = vunpack.c.0.s8 %v699
    %v701 = vlaneseq
    %v702 = vshrl.u32 %v701, 7
    %v703 = vsub.s32 %v700, %v702
    %v704 = vrot.slane %v682, %v703
    %v706 = vunpack.c.l.s4 1983009808
    %v707 = vunpack.c.0.s8 %v706
    %v708 = vlaneseq
    %v709 = vshrl.u32 %v708, 7
    %v710 = vsub.s32 %v707, %v709
    %v711 = vrot.slane %v683, %v710
    %v712 = vcombine.low %v690, %v704
    %v713 = vcombine.high %v690, %v704
    %v714 = vcombine.low %v697, %v711
    %v715 = vcombine.high %v697, %v711
    %v716 = vcombine.low %v75, %v88
    %v717 = vcombine.high %v75, %v88
    %v718 = vcombine.low %v101, %v114
    %v719 = vcombine.high %v101, %v114
    %v721 = vunpack.c.l.s4 1983009808
    %v722 = vunpack.c.0.s8 %v721
    %v723 = vlaneseq
    %v724 = vshrl.u32 %v723, 7
    %v725 = vsub.s32 %v722, %v724
    %v726 = vrot.slane %v716, %v725
    %v728 = vunpack.c.l.s4 1983009808
    %v729 = vunpack.c.0.s8 %v728
    %v730 = vlaneseq
    %v731 = vshrl.u32 %v730, 7
    %v732 = vsub.s32 %v729, %v731
    %v733 = vrot.slane %v717, %v732
    %v735 = vunpack.c.l.s4 1983009808
    %v736 = vunpack.c.0.s8 %v735
    %v737 = vlaneseq
    %v738 = vshrl.u32 %v737, 7
    %v739 = vsub.s32 %v736, %v738
    %v740 = vrot.slane %v718, %v739
    %v742 = vunpack.c.l.s4 1983009808
    %v743 = vunpack.c.0.s8 %v742
    %v744 = vlaneseq
    %v745 = vshrl.u32 %v744, 7
    %v746 = vsub.s32 %v743, %v745
    %v747 = vrot.slane %v719, %v746
    %v748 = vcombine.low %v726, %v740
    %v749 = vcombine.high %v726, %v740
    %v750 = vcombine.low %v733, %v747
    %v751 = vcombine.high %v733, %v747
    %v752 = vcombine.low %v76, %v89
    %v753 = vcombine.high %v76, %v89
    %v754 = vcombine.low %v102, %v115
    %v755 = vcombine.high %v102, %v115
    %v757 = vunpack.c.l.s4 1983009808
    %v758 = vunpack.c.0.s8 %v757
    %v759 = vlaneseq
    %v760 = vshrl.u32 %v759, 7
    %v761 = vsub.s32 %v758, %v760
    %v762 = vrot.slane %v752, %v761
    %v764 = vunpack.c.l.s4 1983009808
    %v765 = vunpack.c.0.s8 %v764
    %v766 = vlaneseq
    %v767 = vshrl.u32 %v766, 7
    %v768 = vsub.s32 %v765, %v767
    %v769 = vrot.slane %v753, %v768
    %v771 = vunpack.c.l.s4 1983009808
    %v772 = vunpack.c.0.s8 %v771
    %v773 = vlaneseq
    %v774 = vshrl.u32 %v773, 7
    %v775 = vsub.s32 %v772, %v774
    %v776 = vrot.slane %v754, %v775
    %v778 = vunpack.c.l.s4 1983009808
    %v779 = vunpack.c.0.s8 %v778
    %v780 = vlaneseq
    %v781 = vshrl.u32 %v780, 7
    %v782 = vsub.s32 %v779, %v781
    %v783 = vrot.slane %v755, %v782
    %v784 = vcombine.low %v762, %v776
    %v785 = vcombine.high %v762, %v776
    %v786 = vcombine.low %v769, %v783
    %v787 = vcombine.high %v769, %v783
    %v788 = vcombine.low %v77, %v90
    %v789 = vcombine.high %v77, %v90
    %v790 = vcombine.low %v103, %v116
    %v791 = vcombine.high %v103, %v116
    %v793 = vunpack.c.l.s4 1983009808
    %v794 = vunpack.c.0.s8 %v793
    %v795 = vlaneseq
    %v796 = vshrl.u32 %v795, 7
    %v797 = vsub.s32 %v794, %v796
    %v798 = vrot.slane %v788, %v797
    %v800 = vunpack.c.l.s4 1983009808
    %v801 = vunpack.c.0.s8 %v800
    %v802 = vlaneseq
    %v803 = vshrl.u32 %v802, 7
    %v804 = vsub.s32 %v801, %v803
    %v805 = vrot.slane %v789, %v804
    %v807 = vunpack.c.l.s4 1983009808
    %v808 = vunpack.c.0.s8 %v807
    %v809 = vlaneseq
    %v810 = vshrl.u32 %v809, 7
    %v811 = vsub.s32 %v808, %v810
    %v812 = vrot.slane %v790, %v811
    %v814 = vunpack.c.l.s4 1983009808
    %v815 = vunpack.c.0.s8 %v814
    %v816 = vlaneseq
    %v817 = vshrl.u32 %v816, 7
    %v818 = vsub.s32 %v815, %v817
    %v819 = vrot.slane %v791, %v818
    %v820 = vcombine.low %v798, %v812
    %v821 = vcombine.high %v798, %v812
    %v822 = vcombine.low %v805, %v819
    %v823 = vcombine.high %v805, %v819
    %v824 = vcombine.low %v78, %v91
    %v825 = vcombine.high %v78, %v91
    %v826 = vcombine.low %v104, %v117
    %v827 = vcombine.high %v104, %v117
    %v829 = vunpack.c.l.s4 1983009808
    %v830 = vunpack.c.0.s8 %v829
    %v831 = vlaneseq
    %v832 = vshrl.u32 %v831, 7
    %v833 = vsub.s32 %v830, %v832
    %v834 = vrot.slane %v824, %v833
    %v836 = vunpack.c.l.s4 1983009808
    %v837 = vunpack.c.0.s8 %v836
    %v838 = vlaneseq
    %v839 = vshrl.u32 %v838, 7
    %v840 = vsub.s32 %v837, %v839
    %v841 = vrot.slane %v825, %v840
    %v843 = vunpack.c.l.s4 1983009808
    %v844 = vunpack.c.0.s8 %v843
    %v845 = vlaneseq
    %v846 = vshrl.u32 %v845, 7
    %v847 = vsub.s32 %v844, %v846
    %v848 = vrot.slane %v826, %v847
    %v850 = vunpack.c.l.s4 1983009808
    %v851 = vunpack.c.0.s8 %v850
    %v852 = vlaneseq
    %v853 = vshrl.u32 %v852, 7
    %v854 = vsub.s32 %v851, %v853
    %v855 = vrot.slane %v827, %v854
    %v856 = vcombine.low %v834, %v848
    %v857 = vcombine.high %v834, %v848
    %v858 = vcombine.low %v841, %v855
    %v859 = vcombine.high %v841, %v855
    %v860 = vcombine.low %v79, %v92
    %v861 = vcombine.high %v79, %v92
    %v862 = vcombine.low %v105, %v118
    %v863 = vcombine.high %v105, %v118
    %v865 = vunpack.c.l.s4 1983009808
    %v866 = vunpack.c.0.s8 %v865
    %v867 = vlaneseq
    %v868 = vshrl.u32 %v867, 7
    %v869 = vsub.s32 %v866, %v868
    %v870 = vrot.slane %v860, %v869
    %v872 = vunpack.c.l.s4 1983009808
    %v873 = vunpack.c.0.s8 %v872
    %v874 = vlaneseq
    %v875 = vshrl.u32 %v874, 7
    %v876 = vsub.s32 %v873, %v875
    %v877 = vrot.slane %v861, %v876
    %v879 = vunpack.c.l.s4 1983009808
    %v880 = vunpack.c.0.s8 %v879
    %v881 = vlaneseq
    %v882 = vshrl.u32 %v881, 7
    %v883 = vsub.s32 %v880, %v882
    %v884 = vrot.slane %v862, %v883
    %v886 = vunpack.c.l.s4 1983009808
    %v887 = vunpack.c.0.s8 %v886
    %v888 = vlaneseq
    %v889 = vshrl.u32 %v888, 7
    %v890 = vsub.s32 %v887, %v889
    %v891 = vrot.slane %v863, %v890
    %v892 = vcombine.low %v870, %v884
    %v893 = vcombine.high %v870, %v884
    %v894 = vcombine.low %v877, %v891
    %v895 = vcombine.high %v877, %v891
    %v896 = vcombine.low %v80, %v93
    %v897 = vcombine.high %v80, %v93
    %v898 = vcombine.low %v106, %v119
    %v899 = vcombine.high %v106, %v119
    %v901 = vunpack.c.l.s4 1983009808
    %v902 = vunpack.c.0.s8 %v901
    %v903 = vlaneseq
    %v904 = vshrl.u32 %v903, 7
    %v905 = vsub.s32 %v902, %v904
    %v906 = vrot.slane %v896, %v905
    %v908 = vunpack.c.l.s4 1983009808
    %v909 = vunpack.c.0.s8 %v908
    %v910 = vlaneseq
    %v911 = vshrl.u32 %v910, 7
    %v912 = vsub.s32 %v909, %v911
    %v913 = vrot.slane %v897, %v912
    %v915 = vunpack.c.l.s4 1983009808
    %v916 = vunpack.c.0.s8 %v915
    %v917 = vlaneseq
    %v918 = vshrl.u32 %v917, 7
    %v919 = vsub.s32 %v916, %v918
    %v920 = vrot.slane %v898, %v919
    %v922 = vunpack.c.l.s4 1983009808
    %v923 = vunpack.c.0.s8 %v922
    %v924 = vlaneseq
    %v925 = vshrl.u32 %v924, 7
    %v926 = vsub.s32 %v923, %v925
    %v927 = vrot.slane %v899, %v926
    %v928 = vcombine.low %v906, %v920
    %v929 = vcombine.high %v906, %v920
    %v930 = vcombine.low %v913, %v927
    %v931 = vcombine.high %v913, %v927
    %v932 = vcombine.low %v81, %v94
    %v933 = vcombine.high %v81, %v94
    %v934 = vcombine.low %v107, %v120
    %v935 = vcombine.high %v107, %v120
    %v937 = vunpack.c.l.s4 1983009808
    %v938 = vunpack.c.0.s8 %v937
    %v939 = vlaneseq
    %v940 = vshrl.u32 %v939, 7
    %v941 = vsub.s32 %v938, %v940
    %v942 = vrot.slane %v932, %v941
    %v944 = vunpack.c.l.s4 1983009808
    %v945 = vunpack.c.0.s8 %v944
    %v946 = vlaneseq
    %v947 = vshrl.u32 %v946, 7
    %v948 = vsub.s32 %v945, %v947
    %v949 = vrot.slane %v933, %v948
    %v951 = vunpack.c.l.s4 1983009808
    %v952 = vunpack.c.0.s8 %v951
    %v953 = vlaneseq
    %v954 = vshrl.u32 %v953, 7
    %v955 = vsub.s32 %v952, %v954
    %v956 = vrot.slane %v934, %v955
    %v958 = vunpack.c.l.s4 1983009808
    %v959 = vunpack.c.0.s8 %v958
    %v960 = vlaneseq
    %v961 = vshrl.u32 %v960, 7
    %v962 = vsub.s32 %v959, %v961
    %v963 = vrot.slane %v935, %v962
    %v964 = vcombine.low %v942, %v956
    %v965 = vcombine.high %v942, %v956
    %v966 = vcombine.low %v949, %v963
    %v967 = vcombine.high %v949, %v963
    %v968 = vcombine.low %v82, %v95
    %v969 = vcombine.high %v82, %v95
    %v970 = vcombine.low %v108, %v121
    %v971 = vcombine.high %v108, %v121
    %v973 = vunpack.c.l.s4 1983009808
    %v974 = vunpack.c.0.s8 %v973
    %v975 = vlaneseq
    %v976 = vshrl.u32 %v975, 7
    %v977 = vsub.s32 %v974, %v976
    %v978 = vrot.slane %v968, %v977
    %v980 = vunpack.c.l.s4 1983009808
    %v981 = vunpack.c.0.s8 %v980
    %v982 = vlaneseq
    %v983 = vshrl.u32 %v982, 7
    %v984 = vsub.s32 %v981, %v983
    %v985 = vrot.slane %v969, %v984
    %v987 = vunpack.c.l.s4 1983009808
    %v988 = vunpack.c.0.s8 %v987
    %v989 = vlaneseq
    %v990 = vshrl.u32 %v989, 7
    %v991 = vsub.s32 %v988, %v990
    %v992 = vrot.slane %v970, %v991
    %v994 = vunpack.c.l.s4 1983009808
    %v995 = vunpack.c.0.s8 %v994
    %v996 = vlaneseq
    %v997 = vshrl.u32 %v996, 7
    %v998 = vsub.s32 %v995, %v997
    %v999 = vrot.slane %v971, %v998
    %v1000 = vcombine.low %v978, %v992
    %v1001 = vcombine.high %v978, %v992
    %v1002 = vcombine.low %v985, %v999
    %v1003 = vcombine.high %v985, %v999
    %v1004 = vcombine.low %v83, %v96
    %v1005 = vcombine.high %v83, %v96
    %v1006 = vcombine.low %v109, %v122
    %v1007 = vcombine.high %v109, %v122
    %v1009 = vunpack.c.l.s4 1983009808
    %v1010 = vunpack.c.0.s8 %v1009
    %v1011 = vlaneseq
    %v1012 = vshrl.u32 %v1011, 7
    %v1013 = vsub.s32 %v1010, %v1012
    %v1014 = vrot.slane %v1004, %v1013
    %v1016 = vunpack.c.l.s4 1983009808
    %v1017 = vunpack.c.0.s8 %v1016
    %v1018 = vlaneseq
    %v1019 = vshrl.u32 %v1018, 7
    %v1020 = vsub.s32 %v1017, %v1019
    %v1021 = vrot.slane %v1005, %v1020
    %v1023 = vunpack.c.l.s4 1983009808
    %v1024 = vunpack.c.0.s8 %v1023
    %v1025 = vlaneseq
    %v1026 = vshrl.u32 %v1025, 7
    %v1027 = vsub.s32 %v1024, %v1026
    %v1028 = vrot.slane %v1006, %v1027
    %v1030 = vunpack.c.l.s4 1983009808
    %v1031 = vunpack.c.0.s8 %v1030
    %v1032 = vlaneseq
    %v1033 = vshrl.u32 %v1032, 7
    %v1034 = vsub.s32 %v1031, %v1033
    %v1035 = vrot.slane %v1007, %v1034
    %v1036 = vcombine.low %v1014, %v1028
    %v1037 = vcombine.high %v1014, %v1028
    %v1038 = vcombine.low %v1021, %v1035
    %v1039 = vcombine.high %v1021, %v1035
    %v1040 = vcombine.low %v84, %v97
    %v1041 = vcombine.high %v84, %v97
    %v1042 = vcombine.low %v110, %v123
    %v1043 = vcombine.high %v110, %v123
    %v1045 = vunpack.c.l.s4 1983009808
    %v1046 = vunpack.c.0.s8 %v1045
    %v1047 = vlaneseq
    %v1048 = vshrl.u32 %v1047, 7
    %v1049 = vsub.s32 %v1046, %v1048
    %v1050 = vrot.slane %v1040, %v1049
    %v1052 = vunpack.c.l.s4 1983009808
    %v1053 = vunpack.c.0.s8 %v1052
    %v1054 = vlaneseq
    %v1055 = vshrl.u32 %v1054, 7
    %v1056 = vsub.s32 %v1053, %v1055
    %v1057 = vrot.slane %v1041, %v1056
    %v1059 = vunpack.c.l.s4 1983009808
    %v1060 = vunpack.c.0.s8 %v1059
    %v1061 = vlaneseq
    %v1062 = vshrl.u32 %v1061, 7
    %v1063 = vsub.s32 %v1060, %v1062
    %v1064 = vrot.slane %v1042, %v1063
    %v1066 = vunpack.c.l.s4 1983009808
    %v1067 = vunpack.c.0.s8 %v1066
    %v1068 = vlaneseq
    %v1069 = vshrl.u32 %v1068, 7
    %v1070 = vsub.s32 %v1067, %v1069
    %v1071 = vrot.slane %v1043, %v1070
    %v1072 = vcombine.low %v1050, %v1064
    %v1073 = vcombine.high %v1050, %v1064
    %v1074 = vcombine.low %v1057, %v1071
    %v1075 = vcombine.high %v1057, %v1071
    %v1076 = vcombine.low %v85, %v98
    %v1077 = vcombine.high %v85, %v98
    %v1078 = vcombine.low %v111, %v124
    %v1079 = vcombine.high %v111, %v124
    %v1081 = vunpack.c.l.s4 1983009808
    %v1082 = vunpack.c.0.s8 %v1081
    %v1083 = vlaneseq
    %v1084 = vshrl.u32 %v1083, 7
    %v1085 = vsub.s32 %v1082, %v1084
    %v1086 = vrot.slane %v1076, %v1085
    %v1088 = vunpack.c.l.s4 1983009808
    %v1089 = vunpack.c.0.s8 %v1088
    %v1090 = vlaneseq
    %v1091 = vshrl.u32 %v1090, 7
    %v1092 = vsub.s32 %v1089, %v1091
    %v1093 = vrot.slane %v1077, %v1092
    %v1095 = vunpack.c.l.s4 1983009808
    %v1096 = vunpack.c.0.s8 %v1095
    %v1097 = vlaneseq
    %v1098 = vshrl.u32 %v1097, 7
    %v1099 = vsub.s32 %v1096, %v1098
    %v1100 = vrot.slane %v1078, %v1099
    %v1102 = vunpack.c.l.s4 1983009808
    %v1103 = vunpack.c.0.s8 %v1102
    %v1104 = vlaneseq
    %v1105 = vshrl.u32 %v1104, 7
    %v1106 = vsub.s32 %v1103, %v1105
    %v1107 = vrot.slane %v1079, %v1106
    %v1108 = vcombine.low %v1086, %v1100
    %v1109 = vcombine.high %v1086, %v1100
    %v1110 = vcombine.low %v1093, %v1107
    %v1111 = vcombine.high %v1093, %v1107
    %v1112 = vcombine.low %v86, %v99
    %v1113 = vcombine.low %v112, %v125
    %v1115 = vunpack.c.l.s4 1983009808
    %v1116 = vunpack.c.0.s8 %v1115
    %v1117 = vlaneseq
    %v1118 = vshrl.u32 %v1117, 7
    %v1119 = vsub.s32 %v1116, %v1118
    %v1120 = vrot.slane %v1112, %v1119
    %v1122 = vunpack.c.l.s4 1983009808
    %v1123 = vunpack.c.0.s8 %v1122
    %v1124 = vlaneseq
    %v1125 = vshrl.u32 %v1124, 7
    %v1126 = vsub.s32 %v1123, %v1125
    %v1127 = vrot.slane %v1113, %v1126
    %v1128 = vcombine.low %v1120, %v1127
    %v1129 = vcombine.high %v1120, %v1127
    %v1230 = vpack.c.bf16 %v712, %v262
    %v1231 = vpack.c.bf16 %v713, %v263
    %v1232 = vpack.c.bf16 %v714, %v264
    %v1233 = vpack.c.bf16 %v715, %v265
    %v1234 = vpack.c.bf16 %v748, %v298
    %v1235 = vpack.c.bf16 %v749, %v299
    %v1236 = vpack.c.bf16 %v750, %v300
    %v1237 = vpack.c.bf16 %v751, %v301
    %v1238 = vpack.c.bf16 %v784, %v334
    %v1239 = vpack.c.bf16 %v785, %v335
    %v1240 = vpack.c.bf16 %v786, %v336
    %v1241 = vpack.c.bf16 %v787, %v337
    %v1242 = vpack.c.bf16 %v820, %v370
    %v1243 = vpack.c.bf16 %v821, %v371
    %v1244 = vpack.c.bf16 %v822, %v372
    %v1245 = vpack.c.bf16 %v823, %v373
    %v1246 = vpack.c.bf16 %v856, %v406
    %v1247 = vpack.c.bf16 %v857, %v407
    %v1248 = vpack.c.bf16 %v858, %v408
    %v1249 = vpack.c.bf16 %v859, %v409
    %v1250 = vpack.c.bf16 %v892, %v442
    %v1251 = vpack.c.bf16 %v893, %v443
    %v1252 = vpack.c.bf16 %v894, %v444
    %v1253 = vpack.c.bf16 %v895, %v445
    %v1254 = vpack.c.bf16 %v928, %v478
    %v1255 = vpack.c.bf16 %v929, %v479
    %v1256 = vpack.c.bf16 %v930, %v480
    %v1257 = vpack.c.bf16 %v931, %v481
    %v1258 = vpack.c.bf16 %v964, %v514
    %v1259 = vpack.c.bf16 %v965, %v515
    %v1260 = vpack.c.bf16 %v966, %v516
    %v1261 = vpack.c.bf16 %v967, %v517
    %v1262 = vpack.c.bf16 %v1000, %v550
    %v1263 = vpack.c.bf16 %v1001, %v551
    %v1264 = vpack.c.bf16 %v1002, %v552
    %v1265 = vpack.c.bf16 %v1003, %v553
    %v1266 = vpack.c.bf16 %v1036, %v586
    %v1267 = vpack.c.bf16 %v1037, %v587
    %v1268 = vpack.c.bf16 %v1038, %v588
    %v1269 = vpack.c.bf16 %v1039, %v589
    %v1270 = vpack.c.bf16 %v1072, %v622
    %v1271 = vpack.c.bf16 %v1073, %v623
    %v1272 = vpack.c.bf16 %v1074, %v624
    %v1273 = vpack.c.bf16 %v1075, %v625
    %v1274 = vpack.c.bf16 %v1108, %v658
    %v1275 = vpack.c.bf16 %v1109, %v659
    %v1276 = vpack.c.bf16 %v1110, %v660
    %v1277 = vpack.c.bf16 %v1111, %v661
    %v1278 = vpack.c.bf16 %v1128, %v678
    %v1279 = vpack.c.bf16 %v1129, %v679
    %v1280 = vld [vmem:[%s1] sm:$0xf]
    %v1281 = vld [vmem:[%s1 + $0x4] sm:$0xf]
    %v1282 = vld [vmem:[%s1 + $0x8] sm:$0xf]
    %v1283 = vld [vmem:[%s1 + $0xc] sm:$0xf]
    %v1284 = vld [vmem:[%s1 + $0x10] sm:$0xf]
    %v1285 = vld [vmem:[%s1 + $0x14] sm:$0xf]
    %v1286 = vld [vmem:[%s1 + $0x18] sm:$0xf]
    %v1287 = vld [vmem:[%s1 + $0x1c] sm:$0xf]
    %v1288 = vld [vmem:[%s1 + $0x20] sm:$0xf]
    %v1289 = vld [vmem:[%s1 + $0x24] sm:$0xf]
    %v1290 = vld [vmem:[%s1 + $0x28] sm:$0xf]
    %v1291 = vld [vmem:[%s1 + $0x2c] sm:$0xf]
    %v1292 = vld [vmem:[%s1 + $0x30] sm:$0xf]
    %v1293 = vld [vmem:[%s1 + $0x34] sm:$0xf]
    %v1294 = vld [vmem:[%s1 + $0x38] sm:$0xf]
    %v1295 = vld [vmem:[%s1 + $0x3c] sm:$0xf]
    %v1296 = vld [vmem:[%s1 + $0x40] sm:$0xf]
    %v1297 = vld [vmem:[%s1 + $0x44] sm:$0xf]
    %v1298 = vld [vmem:[%s1 + $0x48] sm:$0xf]
    %v1299 = vld [vmem:[%s1 + $0x4c] sm:$0xf]
    %v1300 = vld [vmem:[%s1 + $0x50] sm:$0xf]
    %v1301 = vld [vmem:[%s1 + $0x54] sm:$0xf]
    %v1302 = vld [vmem:[%s1 + $0x58] sm:$0xf]
    %v1303 = vld [vmem:[%s1 + $0x5c] sm:$0xf]
    %v1304 = vld [vmem:[%s1 + $0x60] sm:$0xf]
    %v1305 = vld [vmem:[%s1 + $0x64] sm:$0xf]
    %v1306 = vld [vmem:[%s1 + $0x68] sm:$0xf]
    %v1307 = vld [vmem:[%s1 + $0x6c] sm:$0xf]
    %v1308 = vld [vmem:[%s1 + $0x70] sm:$0xf]
    %v1309 = vld [vmem:[%s1 + $0x74] sm:$0xf]
    %v1310 = vld [vmem:[%s1 + $0x78] sm:$0xf]
    %v1311 = vld [vmem:[%s1 + $0x7c] sm:$0xf]
    %v1312 = vld [vmem:[%s1 + $0x80] sm:$0xf]
    %v1313 = vld [vmem:[%s1 + $0x84] sm:$0xf]
    %v1314 = vld [vmem:[%s1 + $0x88] sm:$0xf]
    %v1315 = vld [vmem:[%s1 + $0x8c] sm:$0xf]
    %v1316 = vld [vmem:[%s1 + $0x90] sm:$0xf]
    %v1317 = vld [vmem:[%s1 + $0x94] sm:$0xf]
    %v1318 = vld [vmem:[%s1 + $0x98] sm:$0xf]
    %v1319 = vld [vmem:[%s1 + $0x9c] sm:$0xf]
    %v1320 = vld [vmem:[%s1 + $0xa0] sm:$0xf]
    %v1321 = vld [vmem:[%s1 + $0xa4] sm:$0xf]
    %v1322 = vld [vmem:[%s1 + $0xa8] sm:$0xf]
    %v1323 = vld [vmem:[%s1 + $0xac] sm:$0xf]
    %v1324 = vld [vmem:[%s1 + $0xb0] sm:$0xf]
    %v1325 = vld [vmem:[%s1 + $0xb4] sm:$0xf]
    %v1326 = vld [vmem:[%s1 + $0xb8] sm:$0xf]
    %v1327 = vld [vmem:[%s1 + $0xbc] sm:$0xf]
    %v1328 = vld [vmem:[%s1 + $0xc0] sm:$0xf]
    %v1329 = vld [vmem:[%s1 + $0xc4] sm:$0xf]
    %v1330 = vld [vmem:[%s1 + $0xc8] sm:$0xf]
    %v1331 = vld [vmem:[%s1 + $0xcc] sm:$0xf]
    %v1332 = vld [vmem:[%s1 + $0xd0] sm:$0xf]
    %v1333 = vld [vmem:[%s1 + $0xd4] sm:$0xf]
    %v1334 = vld [vmem:[%s1 + $0xd8] sm:$0xf]
    %v1335 = vld [vmem:[%s1 + $0xdc] sm:$0xf]
    %v1336 = vld [vmem:[%s1 + $0xe0] sm:$0xf]
    %v1337 = vld [vmem:[%s1 + $0xe4] sm:$0xf]
    %v1338 = vld [vmem:[%s1 + $0xe8] sm:$0xf]
    %v1339 = vld [vmem:[%s1 + $0xec] sm:$0xf]
    %v1340 = vld [vmem:[%s1 + $0xf0] sm:$0xf]
    %v1341 = vld [vmem:[%s1 + $0xf4] sm:$0xf]
    %v1342 = vld [vmem:[%s1 + $0xf8] sm:$0xf]
    %v1343 = vld [vmem:[%s1 + $0xfc] sm:$0xf]
    %v1344 = vld [vmem:[%s1 + $0x100] sm:$0xf]
    %v1345 = vld [vmem:[%s1 + $0x104] sm:$0xf]
    %v1346 = vld [vmem:[%s1 + $0x108] sm:$0xf]
    %v1347 = vld [vmem:[%s1 + $0x10c] sm:$0xf]
    %v1348 = vld [vmem:[%s1 + $0x110] sm:$0xf]
    %v1349 = vld [vmem:[%s1 + $0x114] sm:$0xf]
    %v1350 = vld [vmem:[%s1 + $0x118] sm:$0xf]
    %v1351 = vld [vmem:[%s1 + $0x11c] sm:$0xf]
    %v1352 = vld [vmem:[%s1 + $0x120] sm:$0xf]
    %v1353 = vld [vmem:[%s1 + $0x124] sm:$0xf]
    %v1354 = vld [vmem:[%s1 + $0x128] sm:$0xf]
    %v1355 = vld [vmem:[%s1 + $0x12c] sm:$0xf]
    %v1356 = vld [vmem:[%s1 + $0x130] sm:$0xf]
    %v1357 = vld [vmem:[%s1 + $0x134] sm:$0xf]
    %v1358 = vld [vmem:[%s1 + $0x138] sm:$0xf]
    %v1359 = vld [vmem:[%s1 + $0x13c] sm:$0xf]
    %v1360 = vld [vmem:[%s1 + $0x140] sm:$0xf]
    %v1361 = vld [vmem:[%s1 + $0x144] sm:$0xf]
    %v1362 = vld [vmem:[%s1 + $0x148] sm:$0xf]
    %v1363 = vld [vmem:[%s1 + $0x14c] sm:$0xf]
    %v1364 = vld [vmem:[%s1 + $0x150] sm:$0xf]
    %v1365 = vld [vmem:[%s1 + $0x154] sm:$0xf]
    %v1366 = vld [vmem:[%s1 + $0x158] sm:$0xf]
    %v1367 = vld [vmem:[%s1 + $0x15c] sm:$0xf]
    %v1368 = vld [vmem:[%s1 + $0x160] sm:$0xf]
    %v1369 = vld [vmem:[%s1 + $0x164] sm:$0xf]
    %v1370 = vld [vmem:[%s1 + $0x168] sm:$0xf]
    %v1371 = vld [vmem:[%s1 + $0x16c] sm:$0xf]
    %v1372 = vld [vmem:[%s1 + $0x170] sm:$0xf]
    %v1373 = vld [vmem:[%s1 + $0x174] sm:$0xf]
    %v1374 = vld [vmem:[%s1 + $0x178] sm:$0xf]
    %v1375 = vld [vmem:[%s1 + $0x17c] sm:$0xf]
    %v1376 = vld [vmem:[%s1 + $0x180] sm:$0xf]
    %v1377 = vld [vmem:[%s1 + $0x184] sm:$0xf]
    %v1378 = vld [vmem:[%s1 + $0x188] sm:$0xf]
    %v1379 = vld [vmem:[%s1 + $0x18c] sm:$0xf]
    %v1380 = vld [vmem:[%s1 + $0x190] sm:$0xf]
    %v1381 = vld [vmem:[%s1 + $0x194] sm:$0xf]
    %v1382 = vld [vmem:[%s1 + $0x198] sm:$0xf]
    %v1383 = vld [vmem:[%s1 + $0x19c] sm:$0xf]
    %v1384 = vld [vmem:[%s1 + $0x1a0] sm:$0xf]
    %v1385 = vld [vmem:[%s1 + $0x1a4] sm:$0xf]
    %v1386 = vld [vmem:[%s1 + $0x1a8] sm:$0xf]
    %v1387 = vld [vmem:[%s1 + $0x1ac] sm:$0xf]
    %v1388 = vld [vmem:[%s1 + $0x1b0] sm:$0xf]
    %v1389 = vld [vmem:[%s1 + $0x1b4] sm:$0xf]
    %v1390 = vld [vmem:[%s1 + $0x1b8] sm:$0xf]
    %v1391 = vld [vmem:[%s1 + $0x1bc] sm:$0xf]
    %v1392 = vld [vmem:[%s1 + $0x1c0] sm:$0xf]
    %v1393 = vld [vmem:[%s1 + $0x1c4] sm:$0xf]
    %v1394 = vld [vmem:[%s1 + $0x1c8] sm:$0xf]
    %v1395 = vld [vmem:[%s1 + $0x1cc] sm:$0xf]
    %v1396 = vld [vmem:[%s1 + $0x1d0] sm:$0xf]
    %v1397 = vld [vmem:[%s1 + $0x1d4] sm:$0xf]
    %v1398 = vld [vmem:[%s1 + $0x1d8] sm:$0xf]
    %v1399 = vld [vmem:[%s1 + $0x1dc] sm:$0xf]
    %v1400 = vld [vmem:[%s1 + $0x1e0] sm:$0xf]
    %v1401 = vld [vmem:[%s1 + $0x1e4] sm:$0xf]
    %v1402 = vld [vmem:[%s1 + $0x1e8] sm:$0xf]
    %v1403 = vld [vmem:[%s1 + $0x1ec] sm:$0xf]
    %v1404 = vld [vmem:[%s1 + $0x1f0] sm:$0xf]
    %v1405 = vld [vmem:[%s1 + $0x1f4] sm:$0xf]
    %v1406 = vld [vmem:[%s1 + $0x1f8] sm:$0xf]
    %v1407 = vld [vmem:[%s1 + $0x1fc] sm:$0xf]
    %v1408 = vld [vmem:[%s1 + $0x200] sm:$0xf]
    %v1409 = vld [vmem:[%s1 + $0x204] sm:$0xf]
    %v1410 = vld [vmem:[%s1 + $0x208] sm:$0xf]
    %v1411 = vld [vmem:[%s1 + $0x20c] sm:$0xf]
    %v1412 = vld [vmem:[%s1 + $0x210] sm:$0xf]
    %v1413 = vld [vmem:[%s1 + $0x214] sm:$0xf]
    %v1414 = vld [vmem:[%s1 + $0x218] sm:$0xf]
    %v1415 = vld [vmem:[%s1 + $0x21c] sm:$0xf]
    %v1416 = vld [vmem:[%s1 + $0x220] sm:$0xf]
    %v1417 = vld [vmem:[%s1 + $0x224] sm:$0xf]
    %v1418 = vld [vmem:[%s1 + $0x228] sm:$0xf]
    %v1419 = vld [vmem:[%s1 + $0x22c] sm:$0xf]
    %v1420 = vld [vmem:[%s1 + $0x230] sm:$0xf]
    %v1421 = vld [vmem:[%s1 + $0x234] sm:$0xf]
    %v1422 = vld [vmem:[%s1 + $0x238] sm:$0xf]
    %v1423 = vld [vmem:[%s1 + $0x23c] sm:$0xf]
    %v1424 = vld [vmem:[%s1 + $0x240] sm:$0xf]
    %v1425 = vld [vmem:[%s1 + $0x244] sm:$0xf]
    %v1426 = vld [vmem:[%s1 + $0x248] sm:$0xf]
    %v1427 = vld [vmem:[%s1 + $0x24c] sm:$0xf]
    %v1428 = vld [vmem:[%s1 + $0x250] sm:$0xf]
    %v1429 = vld [vmem:[%s1 + $0x254] sm:$0xf]
    %v1430 = vld [vmem:[%s1 + $0x258] sm:$0xf]
    %v1431 = vld [vmem:[%s1 + $0x25c] sm:$0xf]
    %v1432 = vld [vmem:[%s1 + $0x260] sm:$0xf]
    %v1433 = vld [vmem:[%s1 + $0x264] sm:$0xf]
    %v1434 = vld [vmem:[%s1 + $0x268] sm:$0xf]
    %v1435 = vld [vmem:[%s1 + $0x26c] sm:$0xf]
    %v1436 = vld [vmem:[%s1 + $0x270] sm:$0xf]
    %v1437 = vld [vmem:[%s1 + $0x274] sm:$0xf]
    %v1438 = vld [vmem:[%s1 + $0x278] sm:$0xf]
    %v1439 = vld [vmem:[%s1 + $0x27c] sm:$0xf]
    %v1440 = vld [vmem:[%s1 + $0x280] sm:$0xf]
    %v1441 = vld [vmem:[%s1 + $0x284] sm:$0xf]
    %v1442 = vld [vmem:[%s1 + $0x288] sm:$0xf]
    %v1443 = vld [vmem:[%s1 + $0x28c] sm:$0xf]
    %v1444 = vld [vmem:[%s1 + $0x290] sm:$0xf]
    %v1445 = vld [vmem:[%s1 + $0x294] sm:$0xf]
    %v1446 = vld [vmem:[%s1 + $0x298] sm:$0xf]
    %v1447 = vld [vmem:[%s1 + $0x29c] sm:$0xf]
    %v1448 = vld [vmem:[%s1 + $0x2a0] sm:$0xf]
    %v1449 = vld [vmem:[%s1 + $0x2a4] sm:$0xf]
    %v1450 = vld [vmem:[%s1 + $0x2a8] sm:$0xf]
    %v1451 = vld [vmem:[%s1 + $0x2ac] sm:$0xf]
    %v1452 = vld [vmem:[%s1 + $0x2b0] sm:$0xf]
    %v1453 = vld [vmem:[%s1 + $0x2b4] sm:$0xf]
    %v1454 = vld [vmem:[%s1 + $0x2b8] sm:$0xf]
    %v1455 = vld [vmem:[%s1 + $0x2bc] sm:$0xf]
    %v1456 = vld [vmem:[%s1 + $0x2c0] sm:$0xf]
    %v1457 = vld [vmem:[%s1 + $0x2c4] sm:$0xf]
    %v1458 = vld [vmem:[%s1 + $0x2c8] sm:$0xf]
    %v1459 = vld [vmem:[%s1 + $0x2cc] sm:$0xf]
    %v1460 = vld [vmem:[%s1 + $0x2d0] sm:$0xf]
    %v1461 = vld [vmem:[%s1 + $0x2d4] sm:$0xf]
    %v1462 = vld [vmem:[%s1 + $0x2d8] sm:$0xf]
    %v1463 = vld [vmem:[%s1 + $0x2dc] sm:$0xf]
    %v1464 = vld [vmem:[%s1 + $0x2e0] sm:$0xf]
    %v1465 = vld [vmem:[%s1 + $0x2e4] sm:$0xf]
    %v1466 = vld [vmem:[%s1 + $0x2e8] sm:$0xf]
    %v1467 = vld [vmem:[%s1 + $0x2ec] sm:$0xf]
    %v1468 = vld [vmem:[%s1 + $0x2f0] sm:$0xf]
    %v1469 = vld [vmem:[%s1 + $0x2f4] sm:$0xf]
    %v1470 = vld [vmem:[%s1 + $0x2f8] sm:$0xf]
    %v1471 = vld [vmem:[%s1 + $0x2fc] sm:$0xf]
    %v1472 = vld [vmem:[%s1 + $0x300] sm:$0xf]
    %v1473 = vld [vmem:[%s1 + $0x304] sm:$0xf]
    %v1474 = vld [vmem:[%s1 + $0x308] sm:$0xf]
    %v1475 = vld [vmem:[%s1 + $0x30c] sm:$0xf]
    %v1476 = vld [vmem:[%s1 + $0x310] sm:$0xf]
    %v1477 = vld [vmem:[%s1 + $0x314] sm:$0xf]
    %v1478 = vld [vmem:[%s1 + $0x318] sm:$0xf]
    %v1479 = vld [vmem:[%s1 + $0x31c] sm:$0xf]
    %v1480 = vld [vmem:[%s1 + $0x320] sm:$0xf]
    %v1481 = vld [vmem:[%s1 + $0x324] sm:$0xf]
    %v1482 = vld [vmem:[%s1 + $0x328] sm:$0xf]
    %v1483 = vld [vmem:[%s1 + $0x32c] sm:$0xf]
    %v1484 = vld [vmem:[%s1 + $0x330] sm:$0xf]
    %v1485 = vld [vmem:[%s1 + $0x334] sm:$0xf]
    %v1486 = vld [vmem:[%s1 + $0x338] sm:$0xf]
    %v1487 = vld [vmem:[%s1 + $0x33c] sm:$0xf]
    %v1488 = vld [vmem:[%s1 + $0x340] sm:$0xf]
    %v1489 = vld [vmem:[%s1 + $0x344] sm:$0xf]
    %v1490 = vld [vmem:[%s1 + $0x348] sm:$0xf]
    %v1491 = vld [vmem:[%s1 + $0x34c] sm:$0xf]
    %v1492 = vld [vmem:[%s1 + $0x350] sm:$0xf]
    %v1493 = vld [vmem:[%s1 + $0x354] sm:$0xf]
    %v1494 = vld [vmem:[%s1 + $0x358] sm:$0xf]
    %v1495 = vld [vmem:[%s1 + $0x35c] sm:$0xf]
    %v1496 = vld [vmem:[%s1 + $0x360] sm:$0xf]
    %v1497 = vld [vmem:[%s1 + $0x364] sm:$0xf]
    %v1498 = vld [vmem:[%s1 + $0x368] sm:$0xf]
    %v1499 = vld [vmem:[%s1 + $0x36c] sm:$0xf]
    %v1500 = vld [vmem:[%s1 + $0x370] sm:$0xf]
    %v1501 = vld [vmem:[%s1 + $0x374] sm:$0xf]
    %v1502 = vld [vmem:[%s1 + $0x378] sm:$0xf]
    %v1503 = vld [vmem:[%s1 + $0x37c] sm:$0xf]
    %v1504 = vld [vmem:[%s1 + $0x380] sm:$0xf]
    %v1505 = vld [vmem:[%s1 + $0x384] sm:$0xf]
    %v1506 = vld [vmem:[%s1 + $0x388] sm:$0xf]
    %v1507 = vld [vmem:[%s1 + $0x38c] sm:$0xf]
    %v1508 = vld [vmem:[%s1 + $0x390] sm:$0xf]
    %v1509 = vld [vmem:[%s1 + $0x394] sm:$0xf]
    %v1510 = vld [vmem:[%s1 + $0x398] sm:$0xf]
    %v1511 = vld [vmem:[%s1 + $0x39c] sm:$0xf]
    %v1512 = vld [vmem:[%s1 + $0x3a0] sm:$0xf]
    %v1513 = vld [vmem:[%s1 + $0x3a4] sm:$0xf]
    %v1514 = vld [vmem:[%s1 + $0x3a8] sm:$0xf]
    %v1515 = vld [vmem:[%s1 + $0x3ac] sm:$0xf]
    %v1516 = vld [vmem:[%s1 + $0x3b0] sm:$0xf]
    %v1517 = vld [vmem:[%s1 + $0x3b4] sm:$0xf]
    %v1518 = vld [vmem:[%s1 + $0x3b8] sm:$0xf]
    %v1519 = vld [vmem:[%s1 + $0x3bc] sm:$0xf]
    %v1520 = vld [vmem:[%s1 + $0x3c0] sm:$0xf]
    %v1521 = vld [vmem:[%s1 + $0x3c4] sm:$0xf]
    %v1522 = vld [vmem:[%s1 + $0x3c8] sm:$0xf]
    %v1523 = vld [vmem:[%s1 + $0x3cc] sm:$0xf]
    %v1524 = vld [vmem:[%s1 + $0x3d0] sm:$0xf]
    %v1525 = vld [vmem:[%s1 + $0x3d4] sm:$0xf]
    %v1526 = vld [vmem:[%s1 + $0x3d8] sm:$0xf]
    %v1527 = vld [vmem:[%s1 + $0x3dc] sm:$0xf]
    %v1528 = vld [vmem:[%s1 + $0x3e0] sm:$0xf]
    %v1529 = vld [vmem:[%s1 + $0x3e4] sm:$0xf]
    %v1530 = vld [vmem:[%s1 + $0x3e8] sm:$0xf]
    %v1531 = vld [vmem:[%s1 + $0x3ec] sm:$0xf]
    %v1532 = vld [vmem:[%s1 + $0x3f0] sm:$0xf]
    %v1533 = vld [vmem:[%s1 + $0x3f4] sm:$0xf]
    %v1534 = vld [vmem:[%s1 + $0x3f8] sm:$0xf]
    %v1535 = vld [vmem:[%s1 + $0x3fc] sm:$0xf]
    %v1536 = vld [vmem:[%s1 + $0x400] sm:$0xf]
    %v1537 = vld [vmem:[%s1 + $0x404] sm:$0xf]
    %v1538 = vld [vmem:[%s1 + $0x408] sm:$0xf]
    %v1539 = vld [vmem:[%s1 + $0x40c] sm:$0xf]
    %v1540 = vld [vmem:[%s1 + $0x410] sm:$0xf]
    %v1541 = vld [vmem:[%s1 + $0x414] sm:$0xf]
    %v1542 = vld [vmem:[%s1 + $0x418] sm:$0xf]
    %v1543 = vld [vmem:[%s1 + $0x41c] sm:$0xf]
    %v1544 = vld [vmem:[%s1 + $0x420] sm:$0xf]
    %v1545 = vld [vmem:[%s1 + $0x424] sm:$0xf]
    %v1546 = vld [vmem:[%s1 + $0x428] sm:$0xf]
    %v1547 = vld [vmem:[%s1 + $0x42c] sm:$0xf]
    %v1548 = vld [vmem:[%s1 + $0x430] sm:$0xf]
    %v1549 = vld [vmem:[%s1 + $0x434] sm:$0xf]
    %v1550 = vld [vmem:[%s1 + $0x438] sm:$0xf]
    %v1551 = vld [vmem:[%s1 + $0x43c] sm:$0xf]
    %v1552 = vld [vmem:[%s1 + $0x440] sm:$0xf]
    %v1553 = vld [vmem:[%s1 + $0x444] sm:$0xf]
    %v1554 = vld [vmem:[%s1 + $0x448] sm:$0xf]
    %v1555 = vld [vmem:[%s1 + $0x44c] sm:$0xf]
    %v1556 = vld [vmem:[%s1 + $0x450] sm:$0xf]
    %v1557 = vld [vmem:[%s1 + $0x454] sm:$0xf]
    %v1558 = vld [vmem:[%s1 + $0x458] sm:$0xf]
    %v1559 = vld [vmem:[%s1 + $0x45c] sm:$0xf]
    %v1560 = vld [vmem:[%s1 + $0x460] sm:$0xf]
    %v1561 = vld [vmem:[%s1 + $0x464] sm:$0xf]
    %v1562 = vld [vmem:[%s1 + $0x468] sm:$0xf]
    %v1563 = vld [vmem:[%s1 + $0x46c] sm:$0xf]
    %v1564 = vld [vmem:[%s1 + $0x470] sm:$0xf]
    %v1565 = vld [vmem:[%s1 + $0x474] sm:$0xf]
    %v1566 = vld [vmem:[%s1 + $0x478] sm:$0xf]
    %v1567 = vld [vmem:[%s1 + $0x47c] sm:$0xf]
    %v1568 = vld [vmem:[%s1 + $0x480] sm:$0xf]
    %v1569 = vld [vmem:[%s1 + $0x484] sm:$0xf]
    %v1570 = vld [vmem:[%s1 + $0x488] sm:$0xf]
    %v1571 = vld [vmem:[%s1 + $0x48c] sm:$0xf]
    %v1572 = vld [vmem:[%s1 + $0x490] sm:$0xf]
    %v1573 = vld [vmem:[%s1 + $0x494] sm:$0xf]
    %v1574 = vld [vmem:[%s1 + $0x498] sm:$0xf]
    %v1575 = vld [vmem:[%s1 + $0x49c] sm:$0xf]
    %v1576 = vld [vmem:[%s1 + $0x4a0] sm:$0xf]
    %v1577 = vld [vmem:[%s1 + $0x4a4] sm:$0xf]
    %v1578 = vld [vmem:[%s1 + $0x4a8] sm:$0xf]
    %v1579 = vld [vmem:[%s1 + $0x4ac] sm:$0xf]
    %v1580 = vld [vmem:[%s1 + $0x4b0] sm:$0xf]
    %v1581 = vld [vmem:[%s1 + $0x4b4] sm:$0xf]
    %v1582 = vld [vmem:[%s1 + $0x4b8] sm:$0xf]
    %v1583 = vld [vmem:[%s1 + $0x4bc] sm:$0xf]
    %v1584 = vld [vmem:[%s1 + $0x4c0] sm:$0xf]
    %v1585 = vld [vmem:[%s1 + $0x4c4] sm:$0xf]
    %v1586 = vld [vmem:[%s1 + $0x4c8] sm:$0xf]
    %v1587 = vld [vmem:[%s1 + $0x4cc] sm:$0xf]
    %v1588 = vld [vmem:[%s1 + $0x4d0] sm:$0xf]
    %v1589 = vld [vmem:[%s1 + $0x4d4] sm:$0xf]
    %v1590 = vld [vmem:[%s1 + $0x4d8] sm:$0xf]
    %v1591 = vld [vmem:[%s1 + $0x4dc] sm:$0xf]
    %v1592 = vld [vmem:[%s1 + $0x4e0] sm:$0xf]
    %v1593 = vld [vmem:[%s1 + $0x4e4] sm:$0xf]
    %v1594 = vld [vmem:[%s1 + $0x4e8] sm:$0xf]
    %v1595 = vld [vmem:[%s1 + $0x4ec] sm:$0xf]
    %v1596 = vld [vmem:[%s1 + $0x4f0] sm:$0xf]
    %v1597 = vld [vmem:[%s1 + $0x4f4] sm:$0xf]
    %v1598 = vld [vmem:[%s1 + $0x4f8] sm:$0xf]
    %v1599 = vld [vmem:[%s1 + $0x4fc] sm:$0xf]
    %v1600 = vld [vmem:[%s1 + $0x500] sm:$0xf]
    %v1601 = vld [vmem:[%s1 + $0x504] sm:$0xf]
    %v1602 = vld [vmem:[%s1 + $0x508] sm:$0xf]
    %v1603 = vld [vmem:[%s1 + $0x50c] sm:$0xf]
    %v1604 = vld [vmem:[%s1 + $0x510] sm:$0xf]
    %v1605 = vld [vmem:[%s1 + $0x514] sm:$0xf]
    %v1606 = vld [vmem:[%s1 + $0x518] sm:$0xf]
    %v1607 = vld [vmem:[%s1 + $0x51c] sm:$0xf]
    %v1608 = vld [vmem:[%s1 + $0x520] sm:$0xf]
    %v1609 = vld [vmem:[%s1 + $0x524] sm:$0xf]
    %v1610 = vld [vmem:[%s1 + $0x528] sm:$0xf]
    %v1611 = vld [vmem:[%s1 + $0x52c] sm:$0xf]
    %v1612 = vld [vmem:[%s1 + $0x530] sm:$0xf]
    %v1613 = vld [vmem:[%s1 + $0x534] sm:$0xf]
    %v1614 = vld [vmem:[%s1 + $0x538] sm:$0xf]
    %v1615 = vld [vmem:[%s1 + $0x53c] sm:$0xf]
    %v1616 = vld [vmem:[%s1 + $0x540] sm:$0xf]
    %v1617 = vld [vmem:[%s1 + $0x544] sm:$0xf]
    %v1618 = vld [vmem:[%s1 + $0x548] sm:$0xf]
    %v1619 = vld [vmem:[%s1 + $0x54c] sm:$0xf]
    %v1620 = vld [vmem:[%s1 + $0x550] sm:$0xf]
    %v1621 = vld [vmem:[%s1 + $0x554] sm:$0xf]
    %v1622 = vld [vmem:[%s1 + $0x558] sm:$0xf]
    %v1623 = vld [vmem:[%s1 + $0x55c] sm:$0xf]
    %v1624 = vld [vmem:[%s1 + $0x560] sm:$0xf]
    %v1625 = vld [vmem:[%s1 + $0x564] sm:$0xf]
    %v1626 = vld [vmem:[%s1 + $0x568] sm:$0xf]
    %v1627 = vld [vmem:[%s1 + $0x56c] sm:$0xf]
    %v1628 = vld [vmem:[%s1 + $0x570] sm:$0xf]
    %v1629 = vld [vmem:[%s1 + $0x574] sm:$0xf]
    %v1630 = vld [vmem:[%s1 + $0x578] sm:$0xf]
    %v1631 = vld [vmem:[%s1 + $0x57c] sm:$0xf]
    %v1632 = vld [vmem:[%s1 + $0x580] sm:$0xf]
    %v1633 = vld [vmem:[%s1 + $0x584] sm:$0xf]
    %v1634 = vld [vmem:[%s1 + $0x588] sm:$0xf]
    %v1635 = vld [vmem:[%s1 + $0x58c] sm:$0xf]
    %v1636 = vld [vmem:[%s1 + $0x590] sm:$0xf]
    %v1637 = vld [vmem:[%s1 + $0x594] sm:$0xf]
    %v1638 = vld [vmem:[%s1 + $0x598] sm:$0xf]
    %v1639 = vld [vmem:[%s1 + $0x59c] sm:$0xf]
    %v1640 = vld [vmem:[%s1 + $0x5a0] sm:$0xf]
    %v1641 = vld [vmem:[%s1 + $0x5a4] sm:$0xf]
    %v1642 = vld [vmem:[%s1 + $0x5a8] sm:$0xf]
    %v1643 = vld [vmem:[%s1 + $0x5ac] sm:$0xf]
    %v1644 = vld [vmem:[%s1 + $0x5b0] sm:$0xf]
    %v1645 = vld [vmem:[%s1 + $0x5b4] sm:$0xf]
    %v1646 = vld [vmem:[%s1 + $0x5b8] sm:$0xf]
    %v1647 = vld [vmem:[%s1 + $0x5bc] sm:$0xf]
    %v1648 = vld [vmem:[%s1 + $0x5c0] sm:$0xf]
    %v1649 = vld [vmem:[%s1 + $0x5c4] sm:$0xf]
    %v1650 = vld [vmem:[%s1 + $0x5c8] sm:$0xf]
    %v1651 = vld [vmem:[%s1 + $0x5cc] sm:$0xf]
    %v1652 = vld [vmem:[%s1 + $0x5d0] sm:$0xf]
    %v1653 = vld [vmem:[%s1 + $0x5d4] sm:$0xf]
    %v1654 = vld [vmem:[%s1 + $0x5d8] sm:$0xf]
    %v1655 = vld [vmem:[%s1 + $0x5dc] sm:$0xf]
    %v1656 = vld [vmem:[%s1 + $0x5e0] sm:$0xf]
    %v1657 = vld [vmem:[%s1 + $0x5e4] sm:$0xf]
    %v1658 = vld [vmem:[%s1 + $0x5e8] sm:$0xf]
    %v1659 = vld [vmem:[%s1 + $0x5ec] sm:$0xf]
    %v1660 = vld [vmem:[%s1 + $0x5f0] sm:$0xf]
    %v1661 = vld [vmem:[%s1 + $0x5f4] sm:$0xf]
    %v1662 = vld [vmem:[%s1 + $0x5f8] sm:$0xf]
    %v1663 = vld [vmem:[%s1 + $0x5fc] sm:$0xf]
    %v1664 = vld [vmem:[%s1 + $0x600] sm:$0xf]
    %v1665 = vld [vmem:[%s1 + $0x604] sm:$0xf]
    %v1666 = vld [vmem:[%s1 + $0x608] sm:$0xf]
    %v1667 = vld [vmem:[%s1 + $0x60c] sm:$0xf]
    %v1668 = vld [vmem:[%s1 + $0x610] sm:$0xf]
    %v1669 = vld [vmem:[%s1 + $0x614] sm:$0xf]
    %v1670 = vld [vmem:[%s1 + $0x618] sm:$0xf]
    %v1671 = vld [vmem:[%s1 + $0x61c] sm:$0xf]
    %v1672 = vld [vmem:[%s1 + $0x620] sm:$0xf]
    %v1673 = vld [vmem:[%s1 + $0x624] sm:$0xf]
    %v1674 = vld [vmem:[%s1 + $0x628] sm:$0xf]
    %v1675 = vld [vmem:[%s1 + $0x62c] sm:$0xf]
    %v1676 = vld [vmem:[%s1 + $0x630] sm:$0xf]
    %v1677 = vld [vmem:[%s1 + $0x634] sm:$0xf]
    %v1678 = vld [vmem:[%s1 + $0x638] sm:$0xf]
    %v1679 = vld [vmem:[%s1 + $0x63c] sm:$0xf]
    %v1680 = vld [vmem:[%s1 + $0x640] sm:$0xf]
    %v1681 = vld [vmem:[%s1 + $0x644] sm:$0xf]
    %v1682 = vld [vmem:[%s1 + $0x648] sm:$0xf]
    %v1683 = vld [vmem:[%s1 + $0x64c] sm:$0xf]
    %v1684 = vld [vmem:[%s1 + $0x650] sm:$0xf]
    %v1685 = vld [vmem:[%s1 + $0x654] sm:$0xf]
    %v1686 = vld [vmem:[%s1 + $0x658] sm:$0xf]
    %v1687 = vld [vmem:[%s1 + $0x65c] sm:$0xf]
    %v1688 = vld [vmem:[%s1 + $0x660] sm:$0xf]
    %v1689 = vld [vmem:[%s1 + $0x664] sm:$0xf]
    %v1690 = vld [vmem:[%s1 + $0x668] sm:$0xf]
    %v1691 = vld [vmem:[%s1 + $0x66c] sm:$0xf]
    %v1692 = vld [vmem:[%s1 + $0x670] sm:$0xf]
    %v1693 = vld [vmem:[%s1 + $0x674] sm:$0xf]
    %v1694 = vld [vmem:[%s1 + $0x678] sm:$0xf]
    %v1695 = vld [vmem:[%s1 + $0x67c] sm:$0xf]
    %v1696 = vld [vmem:[%s1 + $0x680] sm:$0xf]
    %v1697 = vld [vmem:[%s1 + $0x684] sm:$0xf]
    %v1698 = vld [vmem:[%s1 + $0x688] sm:$0xf]
    %v1699 = vld [vmem:[%s1 + $0x68c] sm:$0xf]
    %v1700 = vld [vmem:[%s1 + $0x690] sm:$0xf]
    %v1701 = vld [vmem:[%s1 + $0x694] sm:$0xf]
    %v1702 = vld [vmem:[%s1 + $0x698] sm:$0xf]
    %v1703 = vld [vmem:[%s1 + $0x69c] sm:$0xf]
    %v1704 = vld [vmem:[%s1 + $0x6a0] sm:$0xf]
    %v1705 = vld [vmem:[%s1 + $0x6a4] sm:$0xf]
    %v1706 = vld [vmem:[%s1 + $0x6a8] sm:$0xf]
    %v1707 = vld [vmem:[%s1 + $0x6ac] sm:$0xf]
    %v1708 = vld [vmem:[%s1 + $0x6b0] sm:$0xf]
    %v1709 = vld [vmem:[%s1 + $0x6b4] sm:$0xf]
    %v1710 = vld [vmem:[%s1 + $0x6b8] sm:$0xf]
    %v1711 = vld [vmem:[%s1 + $0x6bc] sm:$0xf]
    %v1712 = vld [vmem:[%s1 + $0x6c0] sm:$0xf]
    %v1713 = vld [vmem:[%s1 + $0x6c4] sm:$0xf]
    %v1714 = vld [vmem:[%s1 + $0x6c8] sm:$0xf]
    %v1715 = vld [vmem:[%s1 + $0x6cc] sm:$0xf]
    %v1716 = vld [vmem:[%s1 + $0x6d0] sm:$0xf]
    %v1717 = vld [vmem:[%s1 + $0x6d4] sm:$0xf]
    %v1718 = vld [vmem:[%s1 + $0x6d8] sm:$0xf]
    %v1719 = vld [vmem:[%s1 + $0x6dc] sm:$0xf]
    %v1720 = vld [vmem:[%s1 + $0x6e0] sm:$0xf]
    %v1721 = vld [vmem:[%s1 + $0x6e4] sm:$0xf]
    %v1722 = vld [vmem:[%s1 + $0x6e8] sm:$0xf]
    %v1723 = vld [vmem:[%s1 + $0x6ec] sm:$0xf]
    %v1724 = vld [vmem:[%s1 + $0x6f0] sm:$0xf]
    %v1725 = vld [vmem:[%s1 + $0x6f4] sm:$0xf]
    %v1726 = vld [vmem:[%s1 + $0x6f8] sm:$0xf]
    %v1727 = vld [vmem:[%s1 + $0x6fc] sm:$0xf]
    %v1728 = vld [vmem:[%s1 + $0x700] sm:$0xf]
    %v1729 = vld [vmem:[%s1 + $0x704] sm:$0xf]
    %v1730 = vld [vmem:[%s1 + $0x708] sm:$0xf]
    %v1731 = vld [vmem:[%s1 + $0x70c] sm:$0xf]
    %v1732 = vld [vmem:[%s1 + $0x710] sm:$0xf]
    %v1733 = vld [vmem:[%s1 + $0x714] sm:$0xf]
    %v1734 = vld [vmem:[%s1 + $0x718] sm:$0xf]
    %v1735 = vld [vmem:[%s1 + $0x71c] sm:$0xf]
    %v1736 = vld [vmem:[%s1 + $0x720] sm:$0xf]
    %v1737 = vld [vmem:[%s1 + $0x724] sm:$0xf]
    %v1738 = vld [vmem:[%s1 + $0x728] sm:$0xf]
    %v1739 = vld [vmem:[%s1 + $0x72c] sm:$0xf]
    %v1740 = vld [vmem:[%s1 + $0x730] sm:$0xf]
    %v1741 = vld [vmem:[%s1 + $0x734] sm:$0xf]
    %v1742 = vld [vmem:[%s1 + $0x738] sm:$0xf]
    %v1743 = vld [vmem:[%s1 + $0x73c] sm:$0xf]
    %v1744 = vld [vmem:[%s1 + $0x740] sm:$0xf]
    %v1745 = vld [vmem:[%s1 + $0x744] sm:$0xf]
    %v1746 = vld [vmem:[%s1 + $0x748] sm:$0xf]
    %v1747 = vld [vmem:[%s1 + $0x74c] sm:$0xf]
    %v1748 = vld [vmem:[%s1 + $0x750] sm:$0xf]
    %v1749 = vld [vmem:[%s1 + $0x754] sm:$0xf]
    %v1750 = vld [vmem:[%s1 + $0x758] sm:$0xf]
    %v1751 = vld [vmem:[%s1 + $0x75c] sm:$0xf]
    %v1752 = vld [vmem:[%s1 + $0x760] sm:$0xf]
    %v1753 = vld [vmem:[%s1 + $0x764] sm:$0xf]
    %v1754 = vld [vmem:[%s1 + $0x768] sm:$0xf]
    %v1755 = vld [vmem:[%s1 + $0x76c] sm:$0xf]
    %v1756 = vld [vmem:[%s1 + $0x770] sm:$0xf]
    %v1757 = vld [vmem:[%s1 + $0x774] sm:$0xf]
    %v1758 = vld [vmem:[%s1 + $0x778] sm:$0xf]
    %v1759 = vld [vmem:[%s1 + $0x77c] sm:$0xf]
    %v1760 = vld [vmem:[%s1 + $0x780] sm:$0xf]
    %v1761 = vld [vmem:[%s1 + $0x784] sm:$0xf]
    %v1762 = vld [vmem:[%s1 + $0x788] sm:$0xf]
    %v1763 = vld [vmem:[%s1 + $0x78c] sm:$0xf]
    %v1764 = vld [vmem:[%s1 + $0x790] sm:$0xf]
    %v1765 = vld [vmem:[%s1 + $0x794] sm:$0xf]
    %v1766 = vld [vmem:[%s1 + $0x798] sm:$0xf]
    %v1767 = vld [vmem:[%s1 + $0x79c] sm:$0xf]
    %v1768 = vld [vmem:[%s1 + $0x7a0] sm:$0xf]
    %v1769 = vld [vmem:[%s1 + $0x7a4] sm:$0xf]
    %v1770 = vld [vmem:[%s1 + $0x7a8] sm:$0xf]
    %v1771 = vld [vmem:[%s1 + $0x7ac] sm:$0xf]
    %v1772 = vld [vmem:[%s1 + $0x7b0] sm:$0xf]
    %v1773 = vld [vmem:[%s1 + $0x7b4] sm:$0xf]
    %v1774 = vld [vmem:[%s1 + $0x7b8] sm:$0xf]
    %v1775 = vld [vmem:[%s1 + $0x7bc] sm:$0xf]
    %v1776 = vld [vmem:[%s1 + $0x7c0] sm:$0xf]
    %v1777 = vld [vmem:[%s1 + $0x7c4] sm:$0xf]
    %v1778 = vld [vmem:[%s1 + $0x7c8] sm:$0xf]
    %v1779 = vld [vmem:[%s1 + $0x7cc] sm:$0xf]
    %v1780 = vld [vmem:[%s1 + $0x7d0] sm:$0xf]
    %v1781 = vld [vmem:[%s1 + $0x7d4] sm:$0xf]
    %v1782 = vld [vmem:[%s1 + $0x7d8] sm:$0xf]
    %v1783 = vld [vmem:[%s1 + $0x7dc] sm:$0xf]
    %v1784 = vld [vmem:[%s1 + $0x7e0] sm:$0xf]
    %v1785 = vld [vmem:[%s1 + $0x7e4] sm:$0xf]
    %v1786 = vld [vmem:[%s1 + $0x7e8] sm:$0xf]
    %v1787 = vld [vmem:[%s1 + $0x7ec] sm:$0xf]
    %v1788 = vld [vmem:[%s1 + $0x7f0] sm:$0xf]
    %v1789 = vld [vmem:[%s1 + $0x7f4] sm:$0xf]
    %v1790 = vld [vmem:[%s1 + $0x7f8] sm:$0xf]
    %v1791 = vld [vmem:[%s1 + $0x7fc] sm:$0xf]
    %v1792 = vld [vmem:[%s1 + $0x800] sm:$0xf]
    %v1793 = vld [vmem:[%s1 + $0x804] sm:$0xf]
    %v1794 = vld [vmem:[%s1 + $0x808] sm:$0xf]
    %v1795 = vld [vmem:[%s1 + $0x80c] sm:$0xf]
    %v1796 = vld [vmem:[%s1 + $0x810] sm:$0xf]
    %v1797 = vld [vmem:[%s1 + $0x814] sm:$0xf]
    %v1798 = vld [vmem:[%s1 + $0x818] sm:$0xf]
    %v1799 = vld [vmem:[%s1 + $0x81c] sm:$0xf]
    %v1800 = vld [vmem:[%s1 + $0x820] sm:$0xf]
    %v1801 = vld [vmem:[%s1 + $0x824] sm:$0xf]
    %v1802 = vld [vmem:[%s1 + $0x828] sm:$0xf]
    %v1803 = vld [vmem:[%s1 + $0x82c] sm:$0xf]
    %v1804 = vld [vmem:[%s1 + $0x830] sm:$0xf]
    %v1805 = vld [vmem:[%s1 + $0x834] sm:$0xf]
    %v1806 = vld [vmem:[%s1 + $0x838] sm:$0xf]
    %v1807 = vld [vmem:[%s1 + $0x83c] sm:$0xf]
    %v1808 = vld [vmem:[%s1 + $0x840] sm:$0xf]
    %v1809 = vld [vmem:[%s1 + $0x844] sm:$0xf]
    %v1810 = vld [vmem:[%s1 + $0x848] sm:$0xf]
    %v1811 = vld [vmem:[%s1 + $0x84c] sm:$0xf]
    %v1812 = vld [vmem:[%s1 + $0x850] sm:$0xf]
    %v1813 = vld [vmem:[%s1 + $0x854] sm:$0xf]
    %v1814 = vld [vmem:[%s1 + $0x858] sm:$0xf]
    %v1815 = vld [vmem:[%s1 + $0x85c] sm:$0xf]
    %v1816 = vld [vmem:[%s1 + $0x860] sm:$0xf]
    %v1817 = vld [vmem:[%s1 + $0x864] sm:$0xf]
    %v1818 = vld [vmem:[%s1 + $0x868] sm:$0xf]
    %v1819 = vld [vmem:[%s1 + $0x86c] sm:$0xf]
    %v1820 = vld [vmem:[%s1 + $0x870] sm:$0xf]
    %v1821 = vld [vmem:[%s1 + $0x874] sm:$0xf]
    %v1822 = vld [vmem:[%s1 + $0x878] sm:$0xf]
    %v1823 = vld [vmem:[%s1 + $0x87c] sm:$0xf]
    %v1824 = vld [vmem:[%s1 + $0x880] sm:$0xf]
    %v1825 = vld [vmem:[%s1 + $0x884] sm:$0xf]
    %v1826 = vld [vmem:[%s1 + $0x888] sm:$0xf]
    %v1827 = vld [vmem:[%s1 + $0x88c] sm:$0xf]
    %v1828 = vld [vmem:[%s1 + $0x890] sm:$0xf]
    %v1829 = vld [vmem:[%s1 + $0x894] sm:$0xf]
    %v1830 = vld [vmem:[%s1 + $0x898] sm:$0xf]
    %v1831 = vld [vmem:[%s1 + $0x89c] sm:$0xf]
    %v1832 = vld [vmem:[%s1 + $0x8a0] sm:$0xf]
    %v1833 = vld [vmem:[%s1 + $0x8a4] sm:$0xf]
    %v1834 = vld [vmem:[%s1 + $0x8a8] sm:$0xf]
    %v1835 = vld [vmem:[%s1 + $0x8ac] sm:$0xf]
    %v1836 = vld [vmem:[%s1 + $0x8b0] sm:$0xf]
    %v1837 = vld [vmem:[%s1 + $0x8b4] sm:$0xf]
    %v1838 = vld [vmem:[%s1 + $0x8b8] sm:$0xf]
    %v1839 = vld [vmem:[%s1 + $0x8bc] sm:$0xf]
    %v1840 = vld [vmem:[%s1 + $0x8c0] sm:$0xf]
    %v1841 = vld [vmem:[%s1 + $0x8c4] sm:$0xf]
    %v1842 = vld [vmem:[%s1 + $0x8c8] sm:$0xf]
    %v1843 = vld [vmem:[%s1 + $0x8cc] sm:$0xf]
    %v1844 = vld [vmem:[%s1 + $0x8d0] sm:$0xf]
    %v1845 = vld [vmem:[%s1 + $0x8d4] sm:$0xf]
    %v1846 = vld [vmem:[%s1 + $0x8d8] sm:$0xf]
    %v1847 = vld [vmem:[%s1 + $0x8dc] sm:$0xf]
    %v1848 = vld [vmem:[%s1 + $0x8e0] sm:$0xf]
    %v1849 = vld [vmem:[%s1 + $0x8e4] sm:$0xf]
    %v1850 = vld [vmem:[%s1 + $0x8e8] sm:$0xf]
    %v1851 = vld [vmem:[%s1 + $0x8ec] sm:$0xf]
    %v1852 = vld [vmem:[%s1 + $0x8f0] sm:$0xf]
    %v1853 = vld [vmem:[%s1 + $0x8f4] sm:$0xf]
    %v1854 = vld [vmem:[%s1 + $0x8f8] sm:$0xf]
    %v1855 = vld [vmem:[%s1 + $0x8fc] sm:$0xf]
    %v1856 = vld [vmem:[%s1 + $0x900] sm:$0xf]
    %v1857 = vld [vmem:[%s1 + $0x904] sm:$0xf]
    %v1858 = vld [vmem:[%s1 + $0x908] sm:$0xf]
    %v1859 = vld [vmem:[%s1 + $0x90c] sm:$0xf]
    %v1860 = vld [vmem:[%s1 + $0x910] sm:$0xf]
    %v1861 = vld [vmem:[%s1 + $0x914] sm:$0xf]
    %v1862 = vld [vmem:[%s1 + $0x918] sm:$0xf]
    %v1863 = vld [vmem:[%s1 + $0x91c] sm:$0xf]
    %v1864 = vld [vmem:[%s1 + $0x920] sm:$0xf]
    %v1865 = vld [vmem:[%s1 + $0x924] sm:$0xf]
    %v1866 = vld [vmem:[%s1 + $0x928] sm:$0xf]
    %v1867 = vld [vmem:[%s1 + $0x92c] sm:$0xf]
    %v1868 = vld [vmem:[%s1 + $0x930] sm:$0xf]
    %v1869 = vld [vmem:[%s1 + $0x934] sm:$0xf]
    %v1870 = vld [vmem:[%s1 + $0x938] sm:$0xf]
    %v1871 = vld [vmem:[%s1 + $0x93c] sm:$0xf]
    %v1872 = vld [vmem:[%s1 + $0x940] sm:$0xf]
    %v1873 = vld [vmem:[%s1 + $0x944] sm:$0xf]
    %v1874 = vld [vmem:[%s1 + $0x948] sm:$0xf]
    %v1875 = vld [vmem:[%s1 + $0x94c] sm:$0xf]
    %v1876 = vld [vmem:[%s1 + $0x950] sm:$0xf]
    %v1877 = vld [vmem:[%s1 + $0x954] sm:$0xf]
    %v1878 = vld [vmem:[%s1 + $0x958] sm:$0xf]
    %v1879 = vld [vmem:[%s1 + $0x95c] sm:$0xf]
    %v1880 = vld [vmem:[%s1 + $0x960] sm:$0xf]
    %v1881 = vld [vmem:[%s1 + $0x964] sm:$0xf]
    %v1882 = vld [vmem:[%s1 + $0x968] sm:$0xf]
    %v1883 = vld [vmem:[%s1 + $0x96c] sm:$0xf]
    %v1884 = vld [vmem:[%s1 + $0x970] sm:$0xf]
    %v1885 = vld [vmem:[%s1 + $0x974] sm:$0xf]
    %v1886 = vld [vmem:[%s1 + $0x978] sm:$0xf]
    %v1887 = vld [vmem:[%s1 + $0x97c] sm:$0xf]
    %v1888 = vld [vmem:[%s1 + $0x980] sm:$0xf]
    %v1889 = vld [vmem:[%s1 + $0x984] sm:$0xf]
    %v1890 = vld [vmem:[%s1 + $0x988] sm:$0xf]
    %v1891 = vld [vmem:[%s1 + $0x98c] sm:$0xf]
    %v1892 = vld [vmem:[%s1 + $0x990] sm:$0xf]
    %v1893 = vld [vmem:[%s1 + $0x994] sm:$0xf]
    %v1894 = vld [vmem:[%s1 + $0x998] sm:$0xf]
    %v1895 = vld [vmem:[%s1 + $0x99c] sm:$0xf]
    %v1896 = vld [vmem:[%s1 + $0x9a0] sm:$0xf]
    %v1897 = vld [vmem:[%s1 + $0x9a4] sm:$0xf]
    %v1898 = vld [vmem:[%s1 + $0x9a8] sm:$0xf]
    %v1899 = vld [vmem:[%s1 + $0x9ac] sm:$0xf]
    %v1900 = vld [vmem:[%s1 + $0x9b0] sm:$0xf]
    %v1901 = vld [vmem:[%s1 + $0x9b4] sm:$0xf]
    %v1902 = vld [vmem:[%s1 + $0x9b8] sm:$0xf]
    %v1903 = vld [vmem:[%s1 + $0x9bc] sm:$0xf]
    %v1904 = vld [vmem:[%s1 + $0x9c0] sm:$0xf]
    %v1905 = vld [vmem:[%s1 + $0x9c4] sm:$0xf]
    %v1906 = vld [vmem:[%s1 + $0x9c8] sm:$0xf]
    %v1907 = vld [vmem:[%s1 + $0x9cc] sm:$0xf]
    %v1908 = vld [vmem:[%s1 + $0x9d0] sm:$0xf]
    %v1909 = vld [vmem:[%s1 + $0x9d4] sm:$0xf]
    %v1910 = vld [vmem:[%s1 + $0x9d8] sm:$0xf]
    %v1911 = vld [vmem:[%s1 + $0x9dc] sm:$0xf]
    %v1912 = vld [vmem:[%s1 + $0x9e0] sm:$0xf]
    %v1913 = vld [vmem:[%s1 + $0x9e4] sm:$0xf]
    %v1914 = vld [vmem:[%s1 + $0x9e8] sm:$0xf]
    %v1915 = vld [vmem:[%s1 + $0x9ec] sm:$0xf]
    %v1916 = vld [vmem:[%s1 + $0x9f0] sm:$0xf]
    %v1917 = vld [vmem:[%s1 + $0x9f4] sm:$0xf]
    %v1918 = vld [vmem:[%s1 + $0x9f8] sm:$0xf]
    %v1919 = vld [vmem:[%s1 + $0x9fc] sm:$0xf]
    %v1920 = vld [vmem:[%s1 + $0xa00] sm:$0xf]
    %v1921 = vld [vmem:[%s1 + $0xa04] sm:$0xf]
    %v1922 = vld [vmem:[%s1 + $0xa08] sm:$0xf]
    %v1923 = vld [vmem:[%s1 + $0xa0c] sm:$0xf]
    %v1924 = vld [vmem:[%s1 + $0xa10] sm:$0xf]
    %v1925 = vld [vmem:[%s1 + $0xa14] sm:$0xf]
    %v1926 = vld [vmem:[%s1 + $0xa18] sm:$0xf]
    %v1927 = vld [vmem:[%s1 + $0xa1c] sm:$0xf]
    %v1928 = vld [vmem:[%s1 + $0xa20] sm:$0xf]
    %v1929 = vld [vmem:[%s1 + $0xa24] sm:$0xf]
    %v1930 = vld [vmem:[%s1 + $0xa28] sm:$0xf]
    %v1931 = vld [vmem:[%s1 + $0xa2c] sm:$0xf]
    %v1932 = vld [vmem:[%s1 + $0xa30] sm:$0xf]
    %v1933 = vld [vmem:[%s1 + $0xa34] sm:$0xf]
    %v1934 = vld [vmem:[%s1 + $0xa38] sm:$0xf]
    %v1935 = vld [vmem:[%s1 + $0xa3c] sm:$0xf]
    %v1936 = vld [vmem:[%s1 + $0xa40] sm:$0xf]
    %v1937 = vld [vmem:[%s1 + $0xa44] sm:$0xf]
    %v1938 = vld [vmem:[%s1 + $0xa48] sm:$0xf]
    %v1939 = vld [vmem:[%s1 + $0xa4c] sm:$0xf]
    %v1940 = vld [vmem:[%s1 + $0xa50] sm:$0xf]
    %v1941 = vld [vmem:[%s1 + $0xa54] sm:$0xf]
    %v1942 = vld [vmem:[%s1 + $0xa58] sm:$0xf]
    %v1943 = vld [vmem:[%s1 + $0xa5c] sm:$0xf]
    %v1944 = vld [vmem:[%s1 + $0xa60] sm:$0xf]
    %v1945 = vld [vmem:[%s1 + $0xa64] sm:$0xf]
    %v1946 = vld [vmem:[%s1 + $0xa68] sm:$0xf]
    %v1947 = vld [vmem:[%s1 + $0xa6c] sm:$0xf]
    %v1948 = vld [vmem:[%s1 + $0xa70] sm:$0xf]
    %v1949 = vld [vmem:[%s1 + $0xa74] sm:$0xf]
    %v1950 = vld [vmem:[%s1 + $0xa78] sm:$0xf]
    %v1951 = vld [vmem:[%s1 + $0xa7c] sm:$0xf]
    %v1952 = vld [vmem:[%s1 + $0xa80] sm:$0xf]
    %v1953 = vld [vmem:[%s1 + $0xa84] sm:$0xf]
    %v1954 = vld [vmem:[%s1 + $0xa88] sm:$0xf]
    %v1955 = vld [vmem:[%s1 + $0xa8c] sm:$0xf]
    %v1956 = vld [vmem:[%s1 + $0xa90] sm:$0xf]
    %v1957 = vld [vmem:[%s1 + $0xa94] sm:$0xf]
    %v1958 = vld [vmem:[%s1 + $0xa98] sm:$0xf]
    %v1959 = vld [vmem:[%s1 + $0xa9c] sm:$0xf]
    %v1960 = vld [vmem:[%s1 + $0xaa0] sm:$0xf]
    %v1961 = vld [vmem:[%s1 + $0xaa4] sm:$0xf]
    %v1962 = vld [vmem:[%s1 + $0xaa8] sm:$0xf]
    %v1963 = vld [vmem:[%s1 + $0xaac] sm:$0xf]
    %v1964 = vld [vmem:[%s1 + $0xab0] sm:$0xf]
    %v1965 = vld [vmem:[%s1 + $0xab4] sm:$0xf]
    %v1966 = vld [vmem:[%s1 + $0xab8] sm:$0xf]
    %v1967 = vld [vmem:[%s1 + $0xabc] sm:$0xf]
    %v1968 = vld [vmem:[%s1 + $0xac0] sm:$0xf]
    %v1969 = vld [vmem:[%s1 + $0xac4] sm:$0xf]
    %v1970 = vld [vmem:[%s1 + $0xac8] sm:$0xf]
    %v1971 = vld [vmem:[%s1 + $0xacc] sm:$0xf]
    %v1972 = vld [vmem:[%s1 + $0xad0] sm:$0xf]
    %v1973 = vld [vmem:[%s1 + $0xad4] sm:$0xf]
    %v1974 = vld [vmem:[%s1 + $0xad8] sm:$0xf]
    %v1975 = vld [vmem:[%s1 + $0xadc] sm:$0xf]
    %v1976 = vld [vmem:[%s1 + $0xae0] sm:$0xf]
    %v1977 = vld [vmem:[%s1 + $0xae4] sm:$0xf]
    %v1978 = vld [vmem:[%s1 + $0xae8] sm:$0xf]
    %v1979 = vld [vmem:[%s1 + $0xaec] sm:$0xf]
    %v1980 = vld [vmem:[%s1 + $0xaf0] sm:$0xf]
    %v1981 = vld [vmem:[%s1 + $0xaf4] sm:$0xf]
    %v1982 = vld [vmem:[%s1 + $0xaf8] sm:$0xf]
    %v1983 = vld [vmem:[%s1 + $0xafc] sm:$0xf]
    %v1984 = vld [vmem:[%s1 + $0xb00] sm:$0xf]
    %v1985 = vld [vmem:[%s1 + $0xb04] sm:$0xf]
    %v1986 = vld [vmem:[%s1 + $0xb08] sm:$0xf]
    %v1987 = vld [vmem:[%s1 + $0xb0c] sm:$0xf]
    %v1988 = vld [vmem:[%s1 + $0xb10] sm:$0xf]
    %v1989 = vld [vmem:[%s1 + $0xb14] sm:$0xf]
    %v1990 = vld [vmem:[%s1 + $0xb18] sm:$0xf]
    %v1991 = vld [vmem:[%s1 + $0xb1c] sm:$0xf]
    %v1992 = vld [vmem:[%s1 + $0xb20] sm:$0xf]
    %v1993 = vld [vmem:[%s1 + $0xb24] sm:$0xf]
    %v1994 = vld [vmem:[%s1 + $0xb28] sm:$0xf]
    %v1995 = vld [vmem:[%s1 + $0xb2c] sm:$0xf]
    %v1996 = vld [vmem:[%s1 + $0xb30] sm:$0xf]
    %v1997 = vld [vmem:[%s1 + $0xb34] sm:$0xf]
    %v1998 = vld [vmem:[%s1 + $0xb38] sm:$0xf]
    %v1999 = vld [vmem:[%s1 + $0xb3c] sm:$0xf]
    %v2000 = vld [vmem:[%s1 + $0xb40] sm:$0xf]
    %v2001 = vld [vmem:[%s1 + $0xb44] sm:$0xf]
    %v2002 = vld [vmem:[%s1 + $0xb48] sm:$0xf]
    %v2003 = vld [vmem:[%s1 + $0xb4c] sm:$0xf]
    %v2004 = vld [vmem:[%s1 + $0xb50] sm:$0xf]
    %v2005 = vld [vmem:[%s1 + $0xb54] sm:$0xf]
    %v2006 = vld [vmem:[%s1 + $0xb58] sm:$0xf]
    %v2007 = vld [vmem:[%s1 + $0xb5c] sm:$0xf]
    %v2008 = vld [vmem:[%s1 + $0xb60] sm:$0xf]
    %v2009 = vld [vmem:[%s1 + $0xb64] sm:$0xf]
    %v2010 = vld [vmem:[%s1 + $0xb68] sm:$0xf]
    %v2011 = vld [vmem:[%s1 + $0xb6c] sm:$0xf]
    %v2012 = vld [vmem:[%s1 + $0xb70] sm:$0xf]
    %v2013 = vld [vmem:[%s1 + $0xb74] sm:$0xf]
    %v2014 = vld [vmem:[%s1 + $0xb78] sm:$0xf]
    %v2015 = vld [vmem:[%s1 + $0xb7c] sm:$0xf]
    %v2016 = vld [vmem:[%s1 + $0xb80] sm:$0xf]
    %v2017 = vld [vmem:[%s1 + $0xb84] sm:$0xf]
    %v2018 = vld [vmem:[%s1 + $0xb88] sm:$0xf]
    %v2019 = vld [vmem:[%s1 + $0xb8c] sm:$0xf]
    %v2020 = vld [vmem:[%s1 + $0xb90] sm:$0xf]
    %v2021 = vld [vmem:[%s1 + $0xb94] sm:$0xf]
    %v2022 = vld [vmem:[%s1 + $0xb98] sm:$0xf]
    %v2023 = vld [vmem:[%s1 + $0xb9c] sm:$0xf]
    %v2024 = vld [vmem:[%s1 + $0xba0] sm:$0xf]
    %v2025 = vld [vmem:[%s1 + $0xba4] sm:$0xf]
    %v2026 = vld [vmem:[%s1 + $0xba8] sm:$0xf]
    %v2027 = vld [vmem:[%s1 + $0xbac] sm:$0xf]
    %v2028 = vld [vmem:[%s1 + $0xbb0] sm:$0xf]
    %v2029 = vld [vmem:[%s1 + $0xbb4] sm:$0xf]
    %v2030 = vld [vmem:[%s1 + $0xbb8] sm:$0xf]
    %v2031 = vld [vmem:[%s1 + $0xbbc] sm:$0xf]
    %v2032 = vld [vmem:[%s1 + $0xbc0] sm:$0xf]
    %v2033 = vld [vmem:[%s1 + $0xbc4] sm:$0xf]
    %v2034 = vld [vmem:[%s1 + $0xbc8] sm:$0xf]
    %v2035 = vld [vmem:[%s1 + $0xbcc] sm:$0xf]
    %v2036 = vld [vmem:[%s1 + $0xbd0] sm:$0xf]
    %v2037 = vld [vmem:[%s1 + $0xbd4] sm:$0xf]
    %v2038 = vld [vmem:[%s1 + $0xbd8] sm:$0xf]
    %v2039 = vld [vmem:[%s1 + $0xbdc] sm:$0xf]
    %v2040 = vld [vmem:[%s1 + $0xbe0] sm:$0xf]
    %v2041 = vld [vmem:[%s1 + $0xbe4] sm:$0xf]
    %v2042 = vld [vmem:[%s1 + $0xbe8] sm:$0xf]
    %v2043 = vld [vmem:[%s1 + $0xbec] sm:$0xf]
    %v2044 = vld [vmem:[%s1 + $0xbf0] sm:$0xf]
    %v2045 = vld [vmem:[%s1 + $0xbf4] sm:$0xf]
    %v2046 = vld [vmem:[%s1 + $0xbf8] sm:$0xf]
    %v2047 = vld [vmem:[%s1 + $0xbfc] sm:$0xf]
    %v2048 = vld [vmem:[%s1 + $0xc00] sm:$0xf]
    %v2049 = vld [vmem:[%s1 + $0xc04] sm:$0xf]
    %v2050 = vld [vmem:[%s1 + $0xc08] sm:$0xf]
    %v2051 = vld [vmem:[%s1 + $0xc0c] sm:$0xf]
    %v2052 = vld [vmem:[%s1 + $0xc10] sm:$0xf]
    %v2053 = vld [vmem:[%s1 + $0xc14] sm:$0xf]
    %v2054 = vld [vmem:[%s1 + $0xc18] sm:$0xf]
    %v2055 = vld [vmem:[%s1 + $0xc1c] sm:$0xf]
    %v2056 = vld [vmem:[%s1 + $0xc20] sm:$0xf]
    %v2057 = vld [vmem:[%s1 + $0xc24] sm:$0xf]
    %v2058 = vld [vmem:[%s1 + $0xc28] sm:$0xf]
    %v2059 = vld [vmem:[%s1 + $0xc2c] sm:$0xf]
    %v2060 = vld [vmem:[%s1 + $0xc30] sm:$0xf]
    %v2061 = vld [vmem:[%s1 + $0xc34] sm:$0xf]
    %v2062 = vld [vmem:[%s1 + $0xc38] sm:$0xf]
    %v2063 = vld [vmem:[%s1 + $0xc3c] sm:$0xf]
    %v2064 = vld [vmem:[%s1 + $0xc40] sm:$0xf]
    %v2065 = vld [vmem:[%s1 + $0xc44] sm:$0xf]
    %v2066 = vld [vmem:[%s1 + $0xc48] sm:$0xf]
    %v2067 = vld [vmem:[%s1 + $0xc4c] sm:$0xf]
    %v2068 = vld [vmem:[%s1 + $0xc50] sm:$0xf]
    %v2069 = vld [vmem:[%s1 + $0xc54] sm:$0xf]
    %v2070 = vld [vmem:[%s1 + $0xc58] sm:$0xf]
    %v2071 = vld [vmem:[%s1 + $0xc5c] sm:$0xf]
    %v2072 = vld [vmem:[%s1 + $0xc60] sm:$0xf]
    %v2073 = vld [vmem:[%s1 + $0xc64] sm:$0xf]
    %v2074 = vld [vmem:[%s1 + $0xc68] sm:$0xf]
    %v2075 = vld [vmem:[%s1 + $0xc6c] sm:$0xf]
    %v2076 = vld [vmem:[%s1 + $0xc70] sm:$0xf]
    %v2077 = vld [vmem:[%s1 + $0xc74] sm:$0xf]
    %v2078 = vld [vmem:[%s1 + $0xc78] sm:$0xf]
    %v2079 = vld [vmem:[%s1 + $0xc7c] sm:$0xf]
    %v2080 = vld [vmem:[%s2] sm:$0x1]
    %v2082 = vlaneseq
    %v2083 = vshrl.u32 %v2082, 7
    %v2084 = vsub.s32 0, %v2083
    %v2085 = vrot.slane %v2080, %v2084
    %v2887 = vunpack.c.l.b16 %v1280
    %v2888 = vunpack.c.l.b16 %v1281
    %v2889 = vunpack.c.l.b16 %v1282
    %v2890 = vunpack.c.l.b16 %v1283
    %v2891 = vunpack.c.l.b16 %v1284
    %v2892 = vunpack.c.l.b16 %v1285
    %v2893 = vunpack.c.l.b16 %v1286
    %v2894 = vunpack.c.l.b16 %v1287
    %v2895 = vunpack.c.l.b16 %v1288
    %v2896 = vunpack.c.l.b16 %v1289
    %v2897 = vunpack.c.l.b16 %v1290
    %v2898 = vunpack.c.l.b16 %v1291
    %v2899 = vunpack.c.l.b16 %v1292
    %v2900 = vunpack.c.l.b16 %v1293
    %v2901 = vunpack.c.l.b16 %v1294
    %v2902 = vunpack.c.l.b16 %v1295
    %v2903 = vunpack.c.l.b16 %v1296
    %v2904 = vunpack.c.l.b16 %v1297
    %v2905 = vunpack.c.l.b16 %v1298
    %v2906 = vunpack.c.l.b16 %v1299
    %v2907 = vunpack.c.l.b16 %v1300
    %v2908 = vunpack.c.l.b16 %v1301
    %v2909 = vunpack.c.l.b16 %v1302
    %v2910 = vunpack.c.l.b16 %v1303
    %v2911 = vunpack.c.l.b16 %v1304
    %v2912 = vunpack.c.l.b16 %v1305
    %v2913 = vunpack.c.l.b16 %v1306
    %v2914 = vunpack.c.l.b16 %v1307
    %v2915 = vunpack.c.l.b16 %v1308
    %v2916 = vunpack.c.l.b16 %v1309
    %v2917 = vunpack.c.l.b16 %v1310
    %v2918 = vunpack.c.l.b16 %v1311
    %v2919 = vunpack.c.l.b16 %v1312
    %v2920 = vunpack.c.l.b16 %v1313
    %v2921 = vunpack.c.l.b16 %v1314
    %v2922 = vunpack.c.l.b16 %v1315
    %v2923 = vunpack.c.l.b16 %v1316
    %v2924 = vunpack.c.l.b16 %v1317
    %v2925 = vunpack.c.l.b16 %v1318
    %v2926 = vunpack.c.l.b16 %v1319
    %v2927 = vunpack.c.l.b16 %v1320
    %v2928 = vunpack.c.l.b16 %v1321
    %v2929 = vunpack.c.l.b16 %v1322
    %v2930 = vunpack.c.l.b16 %v1323
    %v2931 = vunpack.c.l.b16 %v1324
    %v2932 = vunpack.c.l.b16 %v1325
    %v2933 = vunpack.c.l.b16 %v1326
    %v2934 = vunpack.c.l.b16 %v1327
    %v2935 = vunpack.c.l.b16 %v1328
    %v2936 = vunpack.c.l.b16 %v1329
    %v2937 = vunpack.c.l.b16 %v1330
    %v2938 = vunpack.c.l.b16 %v1331
    %v2939 = vunpack.c.l.b16 %v1332
    %v2940 = vunpack.c.l.b16 %v1333
    %v2941 = vunpack.c.l.b16 %v1334
    %v2942 = vunpack.c.l.b16 %v1335
    %v2943 = vunpack.c.l.b16 %v1336
    %v2944 = vunpack.c.l.b16 %v1337
    %v2945 = vunpack.c.l.b16 %v1338
    %v2946 = vunpack.c.l.b16 %v1339
    %v2947 = vunpack.c.l.b16 %v1340
    %v2948 = vunpack.c.l.b16 %v1341
    %v2949 = vunpack.c.l.b16 %v1342
    %v2950 = vunpack.c.l.b16 %v1343
    %v2951 = vunpack.c.l.b16 %v1344
    %v2952 = vunpack.c.l.b16 %v1345
    %v2953 = vunpack.c.l.b16 %v1346
    %v2954 = vunpack.c.l.b16 %v1347
    %v2955 = vunpack.c.l.b16 %v1348
    %v2956 = vunpack.c.l.b16 %v1349
    %v2957 = vunpack.c.l.b16 %v1350
    %v2958 = vunpack.c.l.b16 %v1351
    %v2959 = vunpack.c.l.b16 %v1352
    %v2960 = vunpack.c.l.b16 %v1353
    %v2961 = vunpack.c.l.b16 %v1354
    %v2962 = vunpack.c.l.b16 %v1355
    %v2963 = vunpack.c.l.b16 %v1356
    %v2964 = vunpack.c.l.b16 %v1357
    %v2965 = vunpack.c.l.b16 %v1358
    %v2966 = vunpack.c.l.b16 %v1359
    %v2967 = vunpack.c.l.b16 %v1360
    %v2968 = vunpack.c.l.b16 %v1361
    %v2969 = vunpack.c.l.b16 %v1362
    %v2970 = vunpack.c.l.b16 %v1363
    %v2971 = vunpack.c.l.b16 %v1364
    %v2972 = vunpack.c.l.b16 %v1365
    %v2973 = vunpack.c.l.b16 %v1366
    %v2974 = vunpack.c.l.b16 %v1367
    %v2975 = vunpack.c.l.b16 %v1368
    %v2976 = vunpack.c.l.b16 %v1369
    %v2977 = vunpack.c.l.b16 %v1370
    %v2978 = vunpack.c.l.b16 %v1371
    %v2979 = vunpack.c.l.b16 %v1372
    %v2980 = vunpack.c.l.b16 %v1373
    %v2981 = vunpack.c.l.b16 %v1374
    %v2982 = vunpack.c.l.b16 %v1375
    %v2983 = vunpack.c.l.b16 %v1376
    %v2984 = vunpack.c.l.b16 %v1377
    %v2985 = vunpack.c.l.b16 %v1378
    %v2986 = vunpack.c.l.b16 %v1379
    %v2987 = vunpack.c.l.b16 %v1380
    %v2988 = vunpack.c.l.b16 %v1381
    %v2989 = vunpack.c.l.b16 %v1382
    %v2990 = vunpack.c.l.b16 %v1383
    %v2991 = vunpack.c.l.b16 %v1384
    %v2992 = vunpack.c.l.b16 %v1385
    %v2993 = vunpack.c.l.b16 %v1386
    %v2994 = vunpack.c.l.b16 %v1387
    %v2995 = vunpack.c.l.b16 %v1388
    %v2996 = vunpack.c.l.b16 %v1389
    %v2997 = vunpack.c.l.b16 %v1390
    %v2998 = vunpack.c.l.b16 %v1391
    %v2999 = vunpack.c.l.b16 %v1392
    %v3000 = vunpack.c.l.b16 %v1393
    %v3001 = vunpack.c.l.b16 %v1394
    %v3002 = vunpack.c.l.b16 %v1395
    %v3003 = vunpack.c.l.b16 %v1396
    %v3004 = vunpack.c.l.b16 %v1397
    %v3005 = vunpack.c.l.b16 %v1398
    %v3006 = vunpack.c.l.b16 %v1399
    %v3007 = vunpack.c.l.b16 %v1400
    %v3008 = vunpack.c.l.b16 %v1401
    %v3009 = vunpack.c.l.b16 %v1402
    %v3010 = vunpack.c.l.b16 %v1403
    %v3011 = vunpack.c.l.b16 %v1404
    %v3012 = vunpack.c.l.b16 %v1405
    %v3013 = vunpack.c.l.b16 %v1406
    %v3014 = vunpack.c.l.b16 %v1407
    %v3015 = vunpack.c.l.b16 %v1408
    %v3016 = vunpack.c.l.b16 %v1409
    %v3017 = vunpack.c.l.b16 %v1410
    %v3018 = vunpack.c.l.b16 %v1411
    %v3019 = vunpack.c.l.b16 %v1412
    %v3020 = vunpack.c.l.b16 %v1413
    %v3021 = vunpack.c.l.b16 %v1414
    %v3022 = vunpack.c.l.b16 %v1415
    %v3023 = vunpack.c.l.b16 %v1416
    %v3024 = vunpack.c.l.b16 %v1417
    %v3025 = vunpack.c.l.b16 %v1418
    %v3026 = vunpack.c.l.b16 %v1419
    %v3027 = vunpack.c.l.b16 %v1420
    %v3028 = vunpack.c.l.b16 %v1421
    %v3029 = vunpack.c.l.b16 %v1422
    %v3030 = vunpack.c.l.b16 %v1423
    %v3031 = vunpack.c.l.b16 %v1424
    %v3032 = vunpack.c.l.b16 %v1425
    %v3033 = vunpack.c.l.b16 %v1426
    %v3034 = vunpack.c.l.b16 %v1427
    %v3035 = vunpack.c.l.b16 %v1428
    %v3036 = vunpack.c.l.b16 %v1429
    %v3037 = vunpack.c.l.b16 %v1430
    %v3038 = vunpack.c.l.b16 %v1431
    %v3039 = vunpack.c.l.b16 %v1432
    %v3040 = vunpack.c.l.b16 %v1433
    %v3041 = vunpack.c.l.b16 %v1434
    %v3042 = vunpack.c.l.b16 %v1435
    %v3043 = vunpack.c.l.b16 %v1436
    %v3044 = vunpack.c.l.b16 %v1437
    %v3045 = vunpack.c.l.b16 %v1438
    %v3046 = vunpack.c.l.b16 %v1439
    %v3047 = vunpack.c.l.b16 %v1440
    %v3048 = vunpack.c.l.b16 %v1441
    %v3049 = vunpack.c.l.b16 %v1442
    %v3050 = vunpack.c.l.b16 %v1443
    %v3051 = vunpack.c.l.b16 %v1444
    %v3052 = vunpack.c.l.b16 %v1445
    %v3053 = vunpack.c.l.b16 %v1446
    %v3054 = vunpack.c.l.b16 %v1447
    %v3055 = vunpack.c.l.b16 %v1448
    %v3056 = vunpack.c.l.b16 %v1449
    %v3057 = vunpack.c.l.b16 %v1450
    %v3058 = vunpack.c.l.b16 %v1451
    %v3059 = vunpack.c.l.b16 %v1452
    %v3060 = vunpack.c.l.b16 %v1453
    %v3061 = vunpack.c.l.b16 %v1454
    %v3062 = vunpack.c.l.b16 %v1455
    %v3063 = vunpack.c.l.b16 %v1456
    %v3064 = vunpack.c.l.b16 %v1457
    %v3065 = vunpack.c.l.b16 %v1458
    %v3066 = vunpack.c.l.b16 %v1459
    %v3067 = vunpack.c.l.b16 %v1460
    %v3068 = vunpack.c.l.b16 %v1461
    %v3069 = vunpack.c.l.b16 %v1462
    %v3070 = vunpack.c.l.b16 %v1463
    %v3071 = vunpack.c.l.b16 %v1464
    %v3072 = vunpack.c.l.b16 %v1465
    %v3073 = vunpack.c.l.b16 %v1466
    %v3074 = vunpack.c.l.b16 %v1467
    %v3075 = vunpack.c.l.b16 %v1468
    %v3076 = vunpack.c.l.b16 %v1469
    %v3077 = vunpack.c.l.b16 %v1470
    %v3078 = vunpack.c.l.b16 %v1471
    %v3079 = vunpack.c.l.b16 %v1472
    %v3080 = vunpack.c.l.b16 %v1473
    %v3081 = vunpack.c.l.b16 %v1474
    %v3082 = vunpack.c.l.b16 %v1475
    %v3083 = vunpack.c.l.b16 %v1476
    %v3084 = vunpack.c.l.b16 %v1477
    %v3085 = vunpack.c.l.b16 %v1478
    %v3086 = vunpack.c.l.b16 %v1479
    %v3087 = vunpack.c.l.b16 %v1480
    %v3088 = vunpack.c.l.b16 %v1481
    %v3089 = vunpack.c.l.b16 %v1482
    %v3090 = vunpack.c.l.b16 %v1483
    %v3091 = vunpack.c.l.b16 %v1484
    %v3092 = vunpack.c.l.b16 %v1485
    %v3093 = vunpack.c.l.b16 %v1486
    %v3094 = vunpack.c.l.b16 %v1487
    %v3095 = vunpack.c.l.b16 %v1488
    %v3096 = vunpack.c.l.b16 %v1489
    %v3097 = vunpack.c.l.b16 %v1490
    %v3098 = vunpack.c.l.b16 %v1491
    %v3099 = vunpack.c.l.b16 %v1492
    %v3100 = vunpack.c.l.b16 %v1493
    %v3101 = vunpack.c.l.b16 %v1494
    %v3102 = vunpack.c.l.b16 %v1495
    %v3103 = vunpack.c.l.b16 %v1496
    %v3104 = vunpack.c.l.b16 %v1497
    %v3105 = vunpack.c.l.b16 %v1498
    %v3106 = vunpack.c.l.b16 %v1499
    %v3107 = vunpack.c.l.b16 %v1500
    %v3108 = vunpack.c.l.b16 %v1501
    %v3109 = vunpack.c.l.b16 %v1502
    %v3110 = vunpack.c.l.b16 %v1503
    %v3111 = vunpack.c.l.b16 %v1504
    %v3112 = vunpack.c.l.b16 %v1505
    %v3113 = vunpack.c.l.b16 %v1506
    %v3114 = vunpack.c.l.b16 %v1507
    %v3115 = vunpack.c.l.b16 %v1508
    %v3116 = vunpack.c.l.b16 %v1509
    %v3117 = vunpack.c.l.b16 %v1510
    %v3118 = vunpack.c.l.b16 %v1511
    %v3119 = vunpack.c.l.b16 %v1512
    %v3120 = vunpack.c.l.b16 %v1513
    %v3121 = vunpack.c.l.b16 %v1514
    %v3122 = vunpack.c.l.b16 %v1515
    %v3123 = vunpack.c.l.b16 %v1516
    %v3124 = vunpack.c.l.b16 %v1517
    %v3125 = vunpack.c.l.b16 %v1518
    %v3126 = vunpack.c.l.b16 %v1519
    %v3127 = vunpack.c.l.b16 %v1520
    %v3128 = vunpack.c.l.b16 %v1521
    %v3129 = vunpack.c.l.b16 %v1522
    %v3130 = vunpack.c.l.b16 %v1523
    %v3131 = vunpack.c.l.b16 %v1524
    %v3132 = vunpack.c.l.b16 %v1525
    %v3133 = vunpack.c.l.b16 %v1526
    %v3134 = vunpack.c.l.b16 %v1527
    %v3135 = vunpack.c.l.b16 %v1528
    %v3136 = vunpack.c.l.b16 %v1529
    %v3137 = vunpack.c.l.b16 %v1530
    %v3138 = vunpack.c.l.b16 %v1531
    %v3139 = vunpack.c.l.b16 %v1532
    %v3140 = vunpack.c.l.b16 %v1533
    %v3141 = vunpack.c.l.b16 %v1534
    %v3142 = vunpack.c.l.b16 %v1535
    %v3143 = vunpack.c.l.b16 %v1536
    %v3144 = vunpack.c.l.b16 %v1537
    %v3145 = vunpack.c.l.b16 %v1538
    %v3146 = vunpack.c.l.b16 %v1539
    %v3147 = vunpack.c.l.b16 %v1540
    %v3148 = vunpack.c.l.b16 %v1541
    %v3149 = vunpack.c.l.b16 %v1542
    %v3150 = vunpack.c.l.b16 %v1543
    %v3151 = vunpack.c.l.b16 %v1544
    %v3152 = vunpack.c.l.b16 %v1545
    %v3153 = vunpack.c.l.b16 %v1546
    %v3154 = vunpack.c.l.b16 %v1547
    %v3155 = vunpack.c.l.b16 %v1548
    %v3156 = vunpack.c.l.b16 %v1549
    %v3157 = vunpack.c.l.b16 %v1550
    %v3158 = vunpack.c.l.b16 %v1551
    %v3159 = vunpack.c.l.b16 %v1552
    %v3160 = vunpack.c.l.b16 %v1553
    %v3161 = vunpack.c.l.b16 %v1554
    %v3162 = vunpack.c.l.b16 %v1555
    %v3163 = vunpack.c.l.b16 %v1556
    %v3164 = vunpack.c.l.b16 %v1557
    %v3165 = vunpack.c.l.b16 %v1558
    %v3166 = vunpack.c.l.b16 %v1559
    %v3167 = vunpack.c.l.b16 %v1560
    %v3168 = vunpack.c.l.b16 %v1561
    %v3169 = vunpack.c.l.b16 %v1562
    %v3170 = vunpack.c.l.b16 %v1563
    %v3171 = vunpack.c.l.b16 %v1564
    %v3172 = vunpack.c.l.b16 %v1565
    %v3173 = vunpack.c.l.b16 %v1566
    %v3174 = vunpack.c.l.b16 %v1567
    %v3175 = vunpack.c.l.b16 %v1568
    %v3176 = vunpack.c.l.b16 %v1569
    %v3177 = vunpack.c.l.b16 %v1570
    %v3178 = vunpack.c.l.b16 %v1571
    %v3179 = vunpack.c.l.b16 %v1572
    %v3180 = vunpack.c.l.b16 %v1573
    %v3181 = vunpack.c.l.b16 %v1574
    %v3182 = vunpack.c.l.b16 %v1575
    %v3183 = vunpack.c.l.b16 %v1576
    %v3184 = vunpack.c.l.b16 %v1577
    %v3185 = vunpack.c.l.b16 %v1578
    %v3186 = vunpack.c.l.b16 %v1579
    %v3187 = vunpack.c.l.b16 %v1580
    %v3188 = vunpack.c.l.b16 %v1581
    %v3189 = vunpack.c.l.b16 %v1582
    %v3190 = vunpack.c.l.b16 %v1583
    %v3191 = vunpack.c.l.b16 %v1584
    %v3192 = vunpack.c.l.b16 %v1585
    %v3193 = vunpack.c.l.b16 %v1586
    %v3194 = vunpack.c.l.b16 %v1587
    %v3195 = vunpack.c.l.b16 %v1588
    %v3196 = vunpack.c.l.b16 %v1589
    %v3197 = vunpack.c.l.b16 %v1590
    %v3198 = vunpack.c.l.b16 %v1591
    %v3199 = vunpack.c.l.b16 %v1592
    %v3200 = vunpack.c.l.b16 %v1593
    %v3201 = vunpack.c.l.b16 %v1594
    %v3202 = vunpack.c.l.b16 %v1595
    %v3203 = vunpack.c.l.b16 %v1596
    %v3204 = vunpack.c.l.b16 %v1597
    %v3205 = vunpack.c.l.b16 %v1598
    %v3206 = vunpack.c.l.b16 %v1599
    %v3207 = vunpack.c.l.b16 %v1600
    %v3208 = vunpack.c.l.b16 %v1601
    %v3209 = vunpack.c.l.b16 %v1602
    %v3210 = vunpack.c.l.b16 %v1603
    %v3211 = vunpack.c.l.b16 %v1604
    %v3212 = vunpack.c.l.b16 %v1605
    %v3213 = vunpack.c.l.b16 %v1606
    %v3214 = vunpack.c.l.b16 %v1607
    %v3215 = vunpack.c.l.b16 %v1608
    %v3216 = vunpack.c.l.b16 %v1609
    %v3217 = vunpack.c.l.b16 %v1610
    %v3218 = vunpack.c.l.b16 %v1611
    %v3219 = vunpack.c.l.b16 %v1612
    %v3220 = vunpack.c.l.b16 %v1613
    %v3221 = vunpack.c.l.b16 %v1614
    %v3222 = vunpack.c.l.b16 %v1615
    %v3223 = vunpack.c.l.b16 %v1616
    %v3224 = vunpack.c.l.b16 %v1617
    %v3225 = vunpack.c.l.b16 %v1618
    %v3226 = vunpack.c.l.b16 %v1619
    %v3227 = vunpack.c.l.b16 %v1620
    %v3228 = vunpack.c.l.b16 %v1621
    %v3229 = vunpack.c.l.b16 %v1622
    %v3230 = vunpack.c.l.b16 %v1623
    %v3231 = vunpack.c.l.b16 %v1624
    %v3232 = vunpack.c.l.b16 %v1625
    %v3233 = vunpack.c.l.b16 %v1626
    %v3234 = vunpack.c.l.b16 %v1627
    %v3235 = vunpack.c.l.b16 %v1628
    %v3236 = vunpack.c.l.b16 %v1629
    %v3237 = vunpack.c.l.b16 %v1630
    %v3238 = vunpack.c.l.b16 %v1631
    %v3239 = vunpack.c.l.b16 %v1632
    %v3240 = vunpack.c.l.b16 %v1633
    %v3241 = vunpack.c.l.b16 %v1634
    %v3242 = vunpack.c.l.b16 %v1635
    %v3243 = vunpack.c.l.b16 %v1636
    %v3244 = vunpack.c.l.b16 %v1637
    %v3245 = vunpack.c.l.b16 %v1638
    %v3246 = vunpack.c.l.b16 %v1639
    %v3247 = vunpack.c.l.b16 %v1640
    %v3248 = vunpack.c.l.b16 %v1641
    %v3249 = vunpack.c.l.b16 %v1642
    %v3250 = vunpack.c.l.b16 %v1643
    %v3251 = vunpack.c.l.b16 %v1644
    %v3252 = vunpack.c.l.b16 %v1645
    %v3253 = vunpack.c.l.b16 %v1646
    %v3254 = vunpack.c.l.b16 %v1647
    %v3255 = vunpack.c.l.b16 %v1648
    %v3256 = vunpack.c.l.b16 %v1649
    %v3257 = vunpack.c.l.b16 %v1650
    %v3258 = vunpack.c.l.b16 %v1651
    %v3259 = vunpack.c.l.b16 %v1652
    %v3260 = vunpack.c.l.b16 %v1653
    %v3261 = vunpack.c.l.b16 %v1654
    %v3262 = vunpack.c.l.b16 %v1655
    %v3263 = vunpack.c.l.b16 %v1656
    %v3264 = vunpack.c.l.b16 %v1657
    %v3265 = vunpack.c.l.b16 %v1658
    %v3266 = vunpack.c.l.b16 %v1659
    %v3267 = vunpack.c.l.b16 %v1660
    %v3268 = vunpack.c.l.b16 %v1661
    %v3269 = vunpack.c.l.b16 %v1662
    %v3270 = vunpack.c.l.b16 %v1663
    %v3271 = vunpack.c.l.b16 %v1664
    %v3272 = vunpack.c.l.b16 %v1665
    %v3273 = vunpack.c.l.b16 %v1666
    %v3274 = vunpack.c.l.b16 %v1667
    %v3275 = vunpack.c.l.b16 %v1668
    %v3276 = vunpack.c.l.b16 %v1669
    %v3277 = vunpack.c.l.b16 %v1670
    %v3278 = vunpack.c.l.b16 %v1671
    %v3279 = vunpack.c.l.b16 %v1672
    %v3280 = vunpack.c.l.b16 %v1673
    %v3281 = vunpack.c.l.b16 %v1674
    %v3282 = vunpack.c.l.b16 %v1675
    %v3283 = vunpack.c.l.b16 %v1676
    %v3284 = vunpack.c.l.b16 %v1677
    %v3285 = vunpack.c.l.b16 %v1678
    %v3286 = vunpack.c.l.b16 %v1679
    %v3287 = vunpack.c.l.b16 %v1680
    %v3288 = vunpack.c.l.b16 %v1681
    %v3289 = vunpack.c.l.b16 %v1682
    %v3290 = vunpack.c.l.b16 %v1683
    %v3291 = vunpack.c.l.b16 %v1684
    %v3292 = vunpack.c.l.b16 %v1685
    %v3293 = vunpack.c.l.b16 %v1686
    %v3294 = vunpack.c.l.b16 %v1687
    %v3295 = vunpack.c.l.b16 %v1688
    %v3296 = vunpack.c.l.b16 %v1689
    %v3297 = vunpack.c.l.b16 %v1690
    %v3298 = vunpack.c.l.b16 %v1691
    %v3299 = vunpack.c.l.b16 %v1692
    %v3300 = vunpack.c.l.b16 %v1693
    %v3301 = vunpack.c.l.b16 %v1694
    %v3302 = vunpack.c.l.b16 %v1695
    %v3303 = vunpack.c.l.b16 %v1696
    %v3304 = vunpack.c.l.b16 %v1697
    %v3305 = vunpack.c.l.b16 %v1698
    %v3306 = vunpack.c.l.b16 %v1699
    %v3307 = vunpack.c.l.b16 %v1700
    %v3308 = vunpack.c.l.b16 %v1701
    %v3309 = vunpack.c.l.b16 %v1702
    %v3310 = vunpack.c.l.b16 %v1703
    %v3311 = vunpack.c.l.b16 %v1704
    %v3312 = vunpack.c.l.b16 %v1705
    %v3313 = vunpack.c.l.b16 %v1706
    %v3314 = vunpack.c.l.b16 %v1707
    %v3315 = vunpack.c.l.b16 %v1708
    %v3316 = vunpack.c.l.b16 %v1709
    %v3317 = vunpack.c.l.b16 %v1710
    %v3318 = vunpack.c.l.b16 %v1711
    %v3319 = vunpack.c.l.b16 %v1712
    %v3320 = vunpack.c.l.b16 %v1713
    %v3321 = vunpack.c.l.b16 %v1714
    %v3322 = vunpack.c.l.b16 %v1715
    %v3323 = vunpack.c.l.b16 %v1716
    %v3324 = vunpack.c.l.b16 %v1717
    %v3325 = vunpack.c.l.b16 %v1718
    %v3326 = vunpack.c.l.b16 %v1719
    %v3327 = vunpack.c.l.b16 %v1720
    %v3328 = vunpack.c.l.b16 %v1721
    %v3329 = vunpack.c.l.b16 %v1722
    %v3330 = vunpack.c.l.b16 %v1723
    %v3331 = vunpack.c.l.b16 %v1724
    %v3332 = vunpack.c.l.b16 %v1725
    %v3333 = vunpack.c.l.b16 %v1726
    %v3334 = vunpack.c.l.b16 %v1727
    %v3335 = vunpack.c.l.b16 %v1728
    %v3336 = vunpack.c.l.b16 %v1729
    %v3337 = vunpack.c.l.b16 %v1730
    %v3338 = vunpack.c.l.b16 %v1731
    %v3339 = vunpack.c.l.b16 %v1732
    %v3340 = vunpack.c.l.b16 %v1733
    %v3341 = vunpack.c.l.b16 %v1734
    %v3342 = vunpack.c.l.b16 %v1735
    %v3343 = vunpack.c.l.b16 %v1736
    %v3344 = vunpack.c.l.b16 %v1737
    %v3345 = vunpack.c.l.b16 %v1738
    %v3346 = vunpack.c.l.b16 %v1739
    %v3347 = vunpack.c.l.b16 %v1740
    %v3348 = vunpack.c.l.b16 %v1741
    %v3349 = vunpack.c.l.b16 %v1742
    %v3350 = vunpack.c.l.b16 %v1743
    %v3351 = vunpack.c.l.b16 %v1744
    %v3352 = vunpack.c.l.b16 %v1745
    %v3353 = vunpack.c.l.b16 %v1746
    %v3354 = vunpack.c.l.b16 %v1747
    %v3355 = vunpack.c.l.b16 %v1748
    %v3356 = vunpack.c.l.b16 %v1749
    %v3357 = vunpack.c.l.b16 %v1750
    %v3358 = vunpack.c.l.b16 %v1751
    %v3359 = vunpack.c.l.b16 %v1752
    %v3360 = vunpack.c.l.b16 %v1753
    %v3361 = vunpack.c.l.b16 %v1754
    %v3362 = vunpack.c.l.b16 %v1755
    %v3363 = vunpack.c.l.b16 %v1756
    %v3364 = vunpack.c.l.b16 %v1757
    %v3365 = vunpack.c.l.b16 %v1758
    %v3366 = vunpack.c.l.b16 %v1759
    %v3367 = vunpack.c.l.b16 %v1760
    %v3368 = vunpack.c.l.b16 %v1761
    %v3369 = vunpack.c.l.b16 %v1762
    %v3370 = vunpack.c.l.b16 %v1763
    %v3371 = vunpack.c.l.b16 %v1764
    %v3372 = vunpack.c.l.b16 %v1765
    %v3373 = vunpack.c.l.b16 %v1766
    %v3374 = vunpack.c.l.b16 %v1767
    %v3375 = vunpack.c.l.b16 %v1768
    %v3376 = vunpack.c.l.b16 %v1769
    %v3377 = vunpack.c.l.b16 %v1770
    %v3378 = vunpack.c.l.b16 %v1771
    %v3379 = vunpack.c.l.b16 %v1772
    %v3380 = vunpack.c.l.b16 %v1773
    %v3381 = vunpack.c.l.b16 %v1774
    %v3382 = vunpack.c.l.b16 %v1775
    %v3383 = vunpack.c.l.b16 %v1776
    %v3384 = vunpack.c.l.b16 %v1777
    %v3385 = vunpack.c.l.b16 %v1778
    %v3386 = vunpack.c.l.b16 %v1779
    %v3387 = vunpack.c.l.b16 %v1780
    %v3388 = vunpack.c.l.b16 %v1781
    %v3389 = vunpack.c.l.b16 %v1782
    %v3390 = vunpack.c.l.b16 %v1783
    %v3391 = vunpack.c.l.b16 %v1784
    %v3392 = vunpack.c.l.b16 %v1785
    %v3393 = vunpack.c.l.b16 %v1786
    %v3394 = vunpack.c.l.b16 %v1787
    %v3395 = vunpack.c.l.b16 %v1788
    %v3396 = vunpack.c.l.b16 %v1789
    %v3397 = vunpack.c.l.b16 %v1790
    %v3398 = vunpack.c.l.b16 %v1791
    %v3399 = vunpack.c.l.b16 %v1792
    %v3400 = vunpack.c.l.b16 %v1793
    %v3401 = vunpack.c.l.b16 %v1794
    %v3402 = vunpack.c.l.b16 %v1795
    %v3403 = vunpack.c.l.b16 %v1796
    %v3404 = vunpack.c.l.b16 %v1797
    %v3405 = vunpack.c.l.b16 %v1798
    %v3406 = vunpack.c.l.b16 %v1799
    %v3407 = vunpack.c.l.b16 %v1800
    %v3408 = vunpack.c.l.b16 %v1801
    %v3409 = vunpack.c.l.b16 %v1802
    %v3410 = vunpack.c.l.b16 %v1803
    %v3411 = vunpack.c.l.b16 %v1804
    %v3412 = vunpack.c.l.b16 %v1805
    %v3413 = vunpack.c.l.b16 %v1806
    %v3414 = vunpack.c.l.b16 %v1807
    %v3415 = vunpack.c.l.b16 %v1808
    %v3416 = vunpack.c.l.b16 %v1809
    %v3417 = vunpack.c.l.b16 %v1810
    %v3418 = vunpack.c.l.b16 %v1811
    %v3419 = vunpack.c.l.b16 %v1812
    %v3420 = vunpack.c.l.b16 %v1813
    %v3421 = vunpack.c.l.b16 %v1814
    %v3422 = vunpack.c.l.b16 %v1815
    %v3423 = vunpack.c.l.b16 %v1816
    %v3424 = vunpack.c.l.b16 %v1817
    %v3425 = vunpack.c.l.b16 %v1818
    %v3426 = vunpack.c.l.b16 %v1819
    %v3427 = vunpack.c.l.b16 %v1820
    %v3428 = vunpack.c.l.b16 %v1821
    %v3429 = vunpack.c.l.b16 %v1822
    %v3430 = vunpack.c.l.b16 %v1823
    %v3431 = vunpack.c.l.b16 %v1824
    %v3432 = vunpack.c.l.b16 %v1825
    %v3433 = vunpack.c.l.b16 %v1826
    %v3434 = vunpack.c.l.b16 %v1827
    %v3435 = vunpack.c.l.b16 %v1828
    %v3436 = vunpack.c.l.b16 %v1829
    %v3437 = vunpack.c.l.b16 %v1830
    %v3438 = vunpack.c.l.b16 %v1831
    %v3439 = vunpack.c.l.b16 %v1832
    %v3440 = vunpack.c.l.b16 %v1833
    %v3441 = vunpack.c.l.b16 %v1834
    %v3442 = vunpack.c.l.b16 %v1835
    %v3443 = vunpack.c.l.b16 %v1836
    %v3444 = vunpack.c.l.b16 %v1837
    %v3445 = vunpack.c.l.b16 %v1838
    %v3446 = vunpack.c.l.b16 %v1839
    %v3447 = vunpack.c.l.b16 %v1840
    %v3448 = vunpack.c.l.b16 %v1841
    %v3449 = vunpack.c.l.b16 %v1842
    %v3450 = vunpack.c.l.b16 %v1843
    %v3451 = vunpack.c.l.b16 %v1844
    %v3452 = vunpack.c.l.b16 %v1845
    %v3453 = vunpack.c.l.b16 %v1846
    %v3454 = vunpack.c.l.b16 %v1847
    %v3455 = vunpack.c.l.b16 %v1848
    %v3456 = vunpack.c.l.b16 %v1849
    %v3457 = vunpack.c.l.b16 %v1850
    %v3458 = vunpack.c.l.b16 %v1851
    %v3459 = vunpack.c.l.b16 %v1852
    %v3460 = vunpack.c.l.b16 %v1853
    %v3461 = vunpack.c.l.b16 %v1854
    %v3462 = vunpack.c.l.b16 %v1855
    %v3463 = vunpack.c.l.b16 %v1856
    %v3464 = vunpack.c.l.b16 %v1857
    %v3465 = vunpack.c.l.b16 %v1858
    %v3466 = vunpack.c.l.b16 %v1859
    %v3467 = vunpack.c.l.b16 %v1860
    %v3468 = vunpack.c.l.b16 %v1861
    %v3469 = vunpack.c.l.b16 %v1862
    %v3470 = vunpack.c.l.b16 %v1863
    %v3471 = vunpack.c.l.b16 %v1864
    %v3472 = vunpack.c.l.b16 %v1865
    %v3473 = vunpack.c.l.b16 %v1866
    %v3474 = vunpack.c.l.b16 %v1867
    %v3475 = vunpack.c.l.b16 %v1868
    %v3476 = vunpack.c.l.b16 %v1869
    %v3477 = vunpack.c.l.b16 %v1870
    %v3478 = vunpack.c.l.b16 %v1871
    %v3479 = vunpack.c.l.b16 %v1872
    %v3480 = vunpack.c.l.b16 %v1873
    %v3481 = vunpack.c.l.b16 %v1874
    %v3482 = vunpack.c.l.b16 %v1875
    %v3483 = vunpack.c.l.b16 %v1876
    %v3484 = vunpack.c.l.b16 %v1877
    %v3485 = vunpack.c.l.b16 %v1878
    %v3486 = vunpack.c.l.b16 %v1879
    %v3487 = vunpack.c.l.b16 %v1880
    %v3488 = vunpack.c.l.b16 %v1881
    %v3489 = vunpack.c.l.b16 %v1882
    %v3490 = vunpack.c.l.b16 %v1883
    %v3491 = vunpack.c.l.b16 %v1884
    %v3492 = vunpack.c.l.b16 %v1885
    %v3493 = vunpack.c.l.b16 %v1886
    %v3494 = vunpack.c.l.b16 %v1887
    %v3495 = vunpack.c.l.b16 %v1888
    %v3496 = vunpack.c.l.b16 %v1889
    %v3497 = vunpack.c.l.b16 %v1890
    %v3498 = vunpack.c.l.b16 %v1891
    %v3499 = vunpack.c.l.b16 %v1892
    %v3500 = vunpack.c.l.b16 %v1893
    %v3501 = vunpack.c.l.b16 %v1894
    %v3502 = vunpack.c.l.b16 %v1895
    %v3503 = vunpack.c.l.b16 %v1896
    %v3504 = vunpack.c.l.b16 %v1897
    %v3505 = vunpack.c.l.b16 %v1898
    %v3506 = vunpack.c.l.b16 %v1899
    %v3507 = vunpack.c.l.b16 %v1900
    %v3508 = vunpack.c.l.b16 %v1901
    %v3509 = vunpack.c.l.b16 %v1902
    %v3510 = vunpack.c.l.b16 %v1903
    %v3511 = vunpack.c.l.b16 %v1904
    %v3512 = vunpack.c.l.b16 %v1905
    %v3513 = vunpack.c.l.b16 %v1906
    %v3514 = vunpack.c.l.b16 %v1907
    %v3515 = vunpack.c.l.b16 %v1908
    %v3516 = vunpack.c.l.b16 %v1909
    %v3517 = vunpack.c.l.b16 %v1910
    %v3518 = vunpack.c.l.b16 %v1911
    %v3519 = vunpack.c.l.b16 %v1912
    %v3520 = vunpack.c.l.b16 %v1913
    %v3521 = vunpack.c.l.b16 %v1914
    %v3522 = vunpack.c.l.b16 %v1915
    %v3523 = vunpack.c.l.b16 %v1916
    %v3524 = vunpack.c.l.b16 %v1917
    %v3525 = vunpack.c.l.b16 %v1918
    %v3526 = vunpack.c.l.b16 %v1919
    %v3527 = vunpack.c.l.b16 %v1920
    %v3528 = vunpack.c.l.b16 %v1921
    %v3529 = vunpack.c.l.b16 %v1922
    %v3530 = vunpack.c.l.b16 %v1923
    %v3531 = vunpack.c.l.b16 %v1924
    %v3532 = vunpack.c.l.b16 %v1925
    %v3533 = vunpack.c.l.b16 %v1926
    %v3534 = vunpack.c.l.b16 %v1927
    %v3535 = vunpack.c.l.b16 %v1928
    %v3536 = vunpack.c.l.b16 %v1929
    %v3537 = vunpack.c.l.b16 %v1930
    %v3538 = vunpack.c.l.b16 %v1931
    %v3539 = vunpack.c.l.b16 %v1932
    %v3540 = vunpack.c.l.b16 %v1933
    %v3541 = vunpack.c.l.b16 %v1934
    %v3542 = vunpack.c.l.b16 %v1935
    %v3543 = vunpack.c.l.b16 %v1936
    %v3544 = vunpack.c.l.b16 %v1937
    %v3545 = vunpack.c.l.b16 %v1938
    %v3546 = vunpack.c.l.b16 %v1939
    %v3547 = vunpack.c.l.b16 %v1940
    %v3548 = vunpack.c.l.b16 %v1941
    %v3549 = vunpack.c.l.b16 %v1942
    %v3550 = vunpack.c.l.b16 %v1943
    %v3551 = vunpack.c.l.b16 %v1944
    %v3552 = vunpack.c.l.b16 %v1945
    %v3553 = vunpack.c.l.b16 %v1946
    %v3554 = vunpack.c.l.b16 %v1947
    %v3555 = vunpack.c.l.b16 %v1948
    %v3556 = vunpack.c.l.b16 %v1949
    %v3557 = vunpack.c.l.b16 %v1950
    %v3558 = vunpack.c.l.b16 %v1951
    %v3559 = vunpack.c.l.b16 %v1952
    %v3560 = vunpack.c.l.b16 %v1953
    %v3561 = vunpack.c.l.b16 %v1954
    %v3562 = vunpack.c.l.b16 %v1955
    %v3563 = vunpack.c.l.b16 %v1956
    %v3564 = vunpack.c.l.b16 %v1957
    %v3565 = vunpack.c.l.b16 %v1958
    %v3566 = vunpack.c.l.b16 %v1959
    %v3567 = vunpack.c.l.b16 %v1960
    %v3568 = vunpack.c.l.b16 %v1961
    %v3569 = vunpack.c.l.b16 %v1962
    %v3570 = vunpack.c.l.b16 %v1963
    %v3571 = vunpack.c.l.b16 %v1964
    %v3572 = vunpack.c.l.b16 %v1965
    %v3573 = vunpack.c.l.b16 %v1966
    %v3574 = vunpack.c.l.b16 %v1967
    %v3575 = vunpack.c.l.b16 %v1968
    %v3576 = vunpack.c.l.b16 %v1969
    %v3577 = vunpack.c.l.b16 %v1970
    %v3578 = vunpack.c.l.b16 %v1971
    %v3579 = vunpack.c.l.b16 %v1972
    %v3580 = vunpack.c.l.b16 %v1973
    %v3581 = vunpack.c.l.b16 %v1974
    %v3582 = vunpack.c.l.b16 %v1975
    %v3583 = vunpack.c.l.b16 %v1976
    %v3584 = vunpack.c.l.b16 %v1977
    %v3585 = vunpack.c.l.b16 %v1978
    %v3586 = vunpack.c.l.b16 %v1979
    %v3587 = vunpack.c.l.b16 %v1980
    %v3588 = vunpack.c.l.b16 %v1981
    %v3589 = vunpack.c.l.b16 %v1982
    %v3590 = vunpack.c.l.b16 %v1983
    %v3591 = vunpack.c.l.b16 %v1984
    %v3592 = vunpack.c.l.b16 %v1985
    %v3593 = vunpack.c.l.b16 %v1986
    %v3594 = vunpack.c.l.b16 %v1987
    %v3595 = vunpack.c.l.b16 %v1988
    %v3596 = vunpack.c.l.b16 %v1989
    %v3597 = vunpack.c.l.b16 %v1990
    %v3598 = vunpack.c.l.b16 %v1991
    %v3599 = vunpack.c.l.b16 %v1992
    %v3600 = vunpack.c.l.b16 %v1993
    %v3601 = vunpack.c.l.b16 %v1994
    %v3602 = vunpack.c.l.b16 %v1995
    %v3603 = vunpack.c.l.b16 %v1996
    %v3604 = vunpack.c.l.b16 %v1997
    %v3605 = vunpack.c.l.b16 %v1998
    %v3606 = vunpack.c.l.b16 %v1999
    %v3607 = vunpack.c.l.b16 %v2000
    %v3608 = vunpack.c.l.b16 %v2001
    %v3609 = vunpack.c.l.b16 %v2002
    %v3610 = vunpack.c.l.b16 %v2003
    %v3611 = vunpack.c.l.b16 %v2004
    %v3612 = vunpack.c.l.b16 %v2005
    %v3613 = vunpack.c.l.b16 %v2006
    %v3614 = vunpack.c.l.b16 %v2007
    %v3615 = vunpack.c.l.b16 %v2008
    %v3616 = vunpack.c.l.b16 %v2009
    %v3617 = vunpack.c.l.b16 %v2010
    %v3618 = vunpack.c.l.b16 %v2011
    %v3619 = vunpack.c.l.b16 %v2012
    %v3620 = vunpack.c.l.b16 %v2013
    %v3621 = vunpack.c.l.b16 %v2014
    %v3622 = vunpack.c.l.b16 %v2015
    %v3623 = vunpack.c.l.b16 %v2016
    %v3624 = vunpack.c.l.b16 %v2017
    %v3625 = vunpack.c.l.b16 %v2018
    %v3626 = vunpack.c.l.b16 %v2019
    %v3627 = vunpack.c.l.b16 %v2020
    %v3628 = vunpack.c.l.b16 %v2021
    %v3629 = vunpack.c.l.b16 %v2022
    %v3630 = vunpack.c.l.b16 %v2023
    %v3631 = vunpack.c.l.b16 %v2024
    %v3632 = vunpack.c.l.b16 %v2025
    %v3633 = vunpack.c.l.b16 %v2026
    %v3634 = vunpack.c.l.b16 %v2027
    %v3635 = vunpack.c.l.b16 %v2028
    %v3636 = vunpack.c.l.b16 %v2029
    %v3637 = vunpack.c.l.b16 %v2030
    %v3638 = vunpack.c.l.b16 %v2031
    %v3639 = vunpack.c.l.b16 %v2032
    %v3640 = vunpack.c.l.b16 %v2033
    %v3641 = vunpack.c.l.b16 %v2034
    %v3642 = vunpack.c.l.b16 %v2035
    %v3643 = vunpack.c.l.b16 %v2036
    %v3644 = vunpack.c.l.b16 %v2037
    %v3645 = vunpack.c.l.b16 %v2038
    %v3646 = vunpack.c.l.b16 %v2039
    %v3647 = vunpack.c.l.b16 %v2040
    %v3648 = vunpack.c.l.b16 %v2041
    %v3649 = vunpack.c.l.b16 %v2042
    %v3650 = vunpack.c.l.b16 %v2043
    %v3651 = vunpack.c.l.b16 %v2044
    %v3652 = vunpack.c.l.b16 %v2045
    %v3653 = vunpack.c.l.b16 %v2046
    %v3654 = vunpack.c.l.b16 %v2047
    %v3655 = vunpack.c.l.b16 %v2048
    %v3656 = vunpack.c.l.b16 %v2049
    %v3657 = vunpack.c.l.b16 %v2050
    %v3658 = vunpack.c.l.b16 %v2051
    %v3659 = vunpack.c.l.b16 %v2052
    %v3660 = vunpack.c.l.b16 %v2053
    %v3661 = vunpack.c.l.b16 %v2054
    %v3662 = vunpack.c.l.b16 %v2055
    %v3663 = vunpack.c.l.b16 %v2056
    %v3664 = vunpack.c.l.b16 %v2057
    %v3665 = vunpack.c.l.b16 %v2058
    %v3666 = vunpack.c.l.b16 %v2059
    %v3667 = vunpack.c.l.b16 %v2060
    %v3668 = vunpack.c.l.b16 %v2061
    %v3669 = vunpack.c.l.b16 %v2062
    %v3670 = vunpack.c.l.b16 %v2063
    %v3671 = vunpack.c.l.b16 %v2064
    %v3672 = vunpack.c.l.b16 %v2065
    %v3673 = vunpack.c.l.b16 %v2066
    %v3674 = vunpack.c.l.b16 %v2067
    %v3675 = vunpack.c.l.b16 %v2068
    %v3676 = vunpack.c.l.b16 %v2069
    %v3677 = vunpack.c.l.b16 %v2070
    %v3678 = vunpack.c.l.b16 %v2071
    %v3679 = vunpack.c.l.b16 %v2072
    %v3680 = vunpack.c.l.b16 %v2073
    %v3681 = vunpack.c.l.b16 %v2074
    %v3682 = vunpack.c.l.b16 %v2075
    %v3683 = vunpack.c.l.b16 %v2076
    %v3684 = vunpack.c.l.b16 %v2077
    %v3685 = vunpack.c.l.b16 %v2078
    %v3686 = vunpack.c.l.b16 %v2079
    %v3687 = vpack.c.b16 %v2888, %v2887
    %v3688 = vpack.c.b16 %v2890, %v2889
    %v3689 = vpack.c.b16 %v2892, %v2891
    %v3690 = vpack.c.b16 %v2894, %v2893
    %v3691 = vpack.c.b16 %v2896, %v2895
    %v3692 = vpack.c.b16 %v2898, %v2897
    %v3693 = vpack.c.b16 %v2900, %v2899
    %v3694 = vpack.c.b16 %v2902, %v2901
    %v3695 = vpack.c.b16 %v2904, %v2903
    %v3696 = vpack.c.b16 %v2906, %v2905
    %v3697 = vpack.c.b16 %v2908, %v2907
    %v3698 = vpack.c.b16 %v2910, %v2909
    %v3699 = vpack.c.b16 %v2912, %v2911
    %v3700 = vpack.c.b16 %v2914, %v2913
    %v3701 = vpack.c.b16 %v2916, %v2915
    %v3702 = vpack.c.b16 %v2918, %v2917
    %v3703 = vpack.c.b16 %v2920, %v2919
    %v3704 = vpack.c.b16 %v2922, %v2921
    %v3705 = vpack.c.b16 %v2924, %v2923
    %v3706 = vpack.c.b16 %v2926, %v2925
    %v3707 = vpack.c.b16 %v2928, %v2927
    %v3708 = vpack.c.b16 %v2930, %v2929
    %v3709 = vpack.c.b16 %v2932, %v2931
    %v3710 = vpack.c.b16 %v2934, %v2933
    %v3711 = vpack.c.b16 %v2936, %v2935
    %v3712 = vpack.c.b16 %v2938, %v2937
    %v3713 = vpack.c.b16 %v2940, %v2939
    %v3714 = vpack.c.b16 %v2942, %v2941
    %v3715 = vpack.c.b16 %v2944, %v2943
    %v3716 = vpack.c.b16 %v2946, %v2945
    %v3717 = vpack.c.b16 %v2948, %v2947
    %v3718 = vpack.c.b16 %v2950, %v2949
    %v3719 = vpack.c.b16 %v2952, %v2951
    %v3720 = vpack.c.b16 %v2954, %v2953
    %v3721 = vpack.c.b16 %v2956, %v2955
    %v3722 = vpack.c.b16 %v2958, %v2957
    %v3723 = vpack.c.b16 %v2960, %v2959
    %v3724 = vpack.c.b16 %v2962, %v2961
    %v3725 = vpack.c.b16 %v2964, %v2963
    %v3726 = vpack.c.b16 %v2966, %v2965
    %v3727 = vpack.c.b16 %v2968, %v2967
    %v3728 = vpack.c.b16 %v2970, %v2969
    %v3729 = vpack.c.b16 %v2972, %v2971
    %v3730 = vpack.c.b16 %v2974, %v2973
    %v3731 = vpack.c.b16 %v2976, %v2975
    %v3732 = vpack.c.b16 %v2978, %v2977
    %v3733 = vpack.c.b16 %v2980, %v2979
    %v3734 = vpack.c.b16 %v2982, %v2981
    %v3735 = vpack.c.b16 %v2984, %v2983
    %v3736 = vpack.c.b16 %v2986, %v2985
    %v3737 = vpack.c.b16 %v2988, %v2987
    %v3738 = vpack.c.b16 %v2990, %v2989
    %v3739 = vpack.c.b16 %v2992, %v2991
    %v3740 = vpack.c.b16 %v2994, %v2993
    %v3741 = vpack.c.b16 %v2996, %v2995
    %v3742 = vpack.c.b16 %v2998, %v2997
    %v3743 = vpack.c.b16 %v3000, %v2999
    %v3744 = vpack.c.b16 %v3002, %v3001
    %v3745 = vpack.c.b16 %v3004, %v3003
    %v3746 = vpack.c.b16 %v3006, %v3005
    %v3747 = vpack.c.b16 %v3008, %v3007
    %v3748 = vpack.c.b16 %v3010, %v3009
    %v3749 = vpack.c.b16 %v3012, %v3011
    %v3750 = vpack.c.b16 %v3014, %v3013
    %v3751 = vpack.c.b16 %v3016, %v3015
    %v3752 = vpack.c.b16 %v3018, %v3017
    %v3753 = vpack.c.b16 %v3020, %v3019
    %v3754 = vpack.c.b16 %v3022, %v3021
    %v3755 = vpack.c.b16 %v3024, %v3023
    %v3756 = vpack.c.b16 %v3026, %v3025
    %v3757 = vpack.c.b16 %v3028, %v3027
    %v3758 = vpack.c.b16 %v3030, %v3029
    %v3759 = vpack.c.b16 %v3032, %v3031
    %v3760 = vpack.c.b16 %v3034, %v3033
    %v3761 = vpack.c.b16 %v3036, %v3035
    %v3762 = vpack.c.b16 %v3038, %v3037
    %v3763 = vpack.c.b16 %v3040, %v3039
    %v3764 = vpack.c.b16 %v3042, %v3041
    %v3765 = vpack.c.b16 %v3044, %v3043
    %v3766 = vpack.c.b16 %v3046, %v3045
    %v3767 = vpack.c.b16 %v3048, %v3047
    %v3768 = vpack.c.b16 %v3050, %v3049
    %v3769 = vpack.c.b16 %v3052, %v3051
    %v3770 = vpack.c.b16 %v3054, %v3053
    %v3771 = vpack.c.b16 %v3056, %v3055
    %v3772 = vpack.c.b16 %v3058, %v3057
    %v3773 = vpack.c.b16 %v3060, %v3059
    %v3774 = vpack.c.b16 %v3062, %v3061
    %v3775 = vpack.c.b16 %v3064, %v3063
    %v3776 = vpack.c.b16 %v3066, %v3065
    %v3777 = vpack.c.b16 %v3068, %v3067
    %v3778 = vpack.c.b16 %v3070, %v3069
    %v3779 = vpack.c.b16 %v3072, %v3071
    %v3780 = vpack.c.b16 %v3074, %v3073
    %v3781 = vpack.c.b16 %v3076, %v3075
    %v3782 = vpack.c.b16 %v3078, %v3077
    %v3783 = vpack.c.b16 %v3080, %v3079
    %v3784 = vpack.c.b16 %v3082, %v3081
    %v3785 = vpack.c.b16 %v3084, %v3083
    %v3786 = vpack.c.b16 %v3086, %v3085
    %v3787 = vpack.c.b16 %v3088, %v3087
    %v3788 = vpack.c.b16 %v3090, %v3089
    %v3789 = vpack.c.b16 %v3092, %v3091
    %v3790 = vpack.c.b16 %v3094, %v3093
    %v3791 = vpack.c.b16 %v3096, %v3095
    %v3792 = vpack.c.b16 %v3098, %v3097
    %v3793 = vpack.c.b16 %v3100, %v3099
    %v3794 = vpack.c.b16 %v3102, %v3101
    %v3795 = vpack.c.b16 %v3104, %v3103
    %v3796 = vpack.c.b16 %v3106, %v3105
    %v3797 = vpack.c.b16 %v3108, %v3107
    %v3798 = vpack.c.b16 %v3110, %v3109
    %v3799 = vpack.c.b16 %v3112, %v3111
    %v3800 = vpack.c.b16 %v3114, %v3113
    %v3801 = vpack.c.b16 %v3116, %v3115
    %v3802 = vpack.c.b16 %v3118, %v3117
    %v3803 = vpack.c.b16 %v3120, %v3119
    %v3804 = vpack.c.b16 %v3122, %v3121
    %v3805 = vpack.c.b16 %v3124, %v3123
    %v3806 = vpack.c.b16 %v3126, %v3125
    %v3807 = vpack.c.b16 %v3128, %v3127
    %v3808 = vpack.c.b16 %v3130, %v3129
    %v3809 = vpack.c.b16 %v3132, %v3131
    %v3810 = vpack.c.b16 %v3134, %v3133
    %v3811 = vpack.c.b16 %v3136, %v3135
    %v3812 = vpack.c.b16 %v3138, %v3137
    %v3813 = vpack.c.b16 %v3140, %v3139
    %v3814 = vpack.c.b16 %v3142, %v3141
    %v3815 = vpack.c.b16 %v3144, %v3143
    %v3816 = vpack.c.b16 %v3146, %v3145
    %v3817 = vpack.c.b16 %v3148, %v3147
    %v3818 = vpack.c.b16 %v3150, %v3149
    %v3819 = vpack.c.b16 %v3152, %v3151
    %v3820 = vpack.c.b16 %v3154, %v3153
    %v3821 = vpack.c.b16 %v3156, %v3155
    %v3822 = vpack.c.b16 %v3158, %v3157
    %v3823 = vpack.c.b16 %v3160, %v3159
    %v3824 = vpack.c.b16 %v3162, %v3161
    %v3825 = vpack.c.b16 %v3164, %v3163
    %v3826 = vpack.c.b16 %v3166, %v3165
    %v3827 = vpack.c.b16 %v3168, %v3167
    %v3828 = vpack.c.b16 %v3170, %v3169
    %v3829 = vpack.c.b16 %v3172, %v3171
    %v3830 = vpack.c.b16 %v3174, %v3173
    %v3831 = vpack.c.b16 %v3176, %v3175
    %v3832 = vpack.c.b16 %v3178, %v3177
    %v3833 = vpack.c.b16 %v3180, %v3179
    %v3834 = vpack.c.b16 %v3182, %v3181
    %v3835 = vpack.c.b16 %v3184, %v3183
    %v3836 = vpack.c.b16 %v3186, %v3185
    %v3837 = vpack.c.b16 %v3188, %v3187
    %v3838 = vpack.c.b16 %v3190, %v3189
    %v3839 = vpack.c.b16 %v3192, %v3191
    %v3840 = vpack.c.b16 %v3194, %v3193
    %v3841 = vpack.c.b16 %v3196, %v3195
    %v3842 = vpack.c.b16 %v3198, %v3197
    %v3843 = vpack.c.b16 %v3200, %v3199
    %v3844 = vpack.c.b16 %v3202, %v3201
    %v3845 = vpack.c.b16 %v3204, %v3203
    %v3846 = vpack.c.b16 %v3206, %v3205
    %v3847 = vpack.c.b16 %v3208, %v3207
    %v3848 = vpack.c.b16 %v3210, %v3209
    %v3849 = vpack.c.b16 %v3212, %v3211
    %v3850 = vpack.c.b16 %v3214, %v3213
    %v3851 = vpack.c.b16 %v3216, %v3215
    %v3852 = vpack.c.b16 %v3218, %v3217
    %v3853 = vpack.c.b16 %v3220, %v3219
    %v3854 = vpack.c.b16 %v3222, %v3221
    %v3855 = vpack.c.b16 %v3224, %v3223
    %v3856 = vpack.c.b16 %v3226, %v3225
    %v3857 = vpack.c.b16 %v3228, %v3227
    %v3858 = vpack.c.b16 %v3230, %v3229
    %v3859 = vpack.c.b16 %v3232, %v3231
    %v3860 = vpack.c.b16 %v3234, %v3233
    %v3861 = vpack.c.b16 %v3236, %v3235
    %v3862 = vpack.c.b16 %v3238, %v3237
    %v3863 = vpack.c.b16 %v3240, %v3239
    %v3864 = vpack.c.b16 %v3242, %v3241
    %v3865 = vpack.c.b16 %v3244, %v3243
    %v3866 = vpack.c.b16 %v3246, %v3245
    %v3867 = vpack.c.b16 %v3248, %v3247
    %v3868 = vpack.c.b16 %v3250, %v3249
    %v3869 = vpack.c.b16 %v3252, %v3251
    %v3870 = vpack.c.b16 %v3254, %v3253
    %v3871 = vpack.c.b16 %v3256, %v3255
    %v3872 = vpack.c.b16 %v3258, %v3257
    %v3873 = vpack.c.b16 %v3260, %v3259
    %v3874 = vpack.c.b16 %v3262, %v3261
    %v3875 = vpack.c.b16 %v3264, %v3263
    %v3876 = vpack.c.b16 %v3266, %v3265
    %v3877 = vpack.c.b16 %v3268, %v3267
    %v3878 = vpack.c.b16 %v3270, %v3269
    %v3879 = vpack.c.b16 %v3272, %v3271
    %v3880 = vpack.c.b16 %v3274, %v3273
    %v3881 = vpack.c.b16 %v3276, %v3275
    %v3882 = vpack.c.b16 %v3278, %v3277
    %v3883 = vpack.c.b16 %v3280, %v3279
    %v3884 = vpack.c.b16 %v3282, %v3281
    %v3885 = vpack.c.b16 %v3284, %v3283
    %v3886 = vpack.c.b16 %v3286, %v3285
    %v3887 = vpack.c.b16 %v3288, %v3287
    %v3888 = vpack.c.b16 %v3290, %v3289
    %v3889 = vpack.c.b16 %v3292, %v3291
    %v3890 = vpack.c.b16 %v3294, %v3293
    %v3891 = vpack.c.b16 %v3296, %v3295
    %v3892 = vpack.c.b16 %v3298, %v3297
    %v3893 = vpack.c.b16 %v3300, %v3299
    %v3894 = vpack.c.b16 %v3302, %v3301
    %v3895 = vpack.c.b16 %v3304, %v3303
    %v3896 = vpack.c.b16 %v3306, %v3305
    %v3897 = vpack.c.b16 %v3308, %v3307
    %v3898 = vpack.c.b16 %v3310, %v3309
    %v3899 = vpack.c.b16 %v3312, %v3311
    %v3900 = vpack.c.b16 %v3314, %v3313
    %v3901 = vpack.c.b16 %v3316, %v3315
    %v3902 = vpack.c.b16 %v3318, %v3317
    %v3903 = vpack.c.b16 %v3320, %v3319
    %v3904 = vpack.c.b16 %v3322, %v3321
    %v3905 = vpack.c.b16 %v3324, %v3323
    %v3906 = vpack.c.b16 %v3326, %v3325
    %v3907 = vpack.c.b16 %v3328, %v3327
    %v3908 = vpack.c.b16 %v3330, %v3329
    %v3909 = vpack.c.b16 %v3332, %v3331
    %v3910 = vpack.c.b16 %v3334, %v3333
    %v3911 = vpack.c.b16 %v3336, %v3335
    %v3912 = vpack.c.b16 %v3338, %v3337
    %v3913 = vpack.c.b16 %v3340, %v3339
    %v3914 = vpack.c.b16 %v3342, %v3341
    %v3915 = vpack.c.b16 %v3344, %v3343
    %v3916 = vpack.c.b16 %v3346, %v3345
    %v3917 = vpack.c.b16 %v3348, %v3347
    %v3918 = vpack.c.b16 %v3350, %v3349
    %v3919 = vpack.c.b16 %v3352, %v3351
    %v3920 = vpack.c.b16 %v3354, %v3353
    %v3921 = vpack.c.b16 %v3356, %v3355
    %v3922 = vpack.c.b16 %v3358, %v3357
    %v3923 = vpack.c.b16 %v3360, %v3359
    %v3924 = vpack.c.b16 %v3362, %v3361
    %v3925 = vpack.c.b16 %v3364, %v3363
    %v3926 = vpack.c.b16 %v3366, %v3365
    %v3927 = vpack.c.b16 %v3368, %v3367
    %v3928 = vpack.c.b16 %v3370, %v3369
    %v3929 = vpack.c.b16 %v3372, %v3371
    %v3930 = vpack.c.b16 %v3374, %v3373
    %v3931 = vpack.c.b16 %v3376, %v3375
    %v3932 = vpack.c.b16 %v3378, %v3377
    %v3933 = vpack.c.b16 %v3380, %v3379
    %v3934 = vpack.c.b16 %v3382, %v3381
    %v3935 = vpack.c.b16 %v3384, %v3383
    %v3936 = vpack.c.b16 %v3386, %v3385
    %v3937 = vpack.c.b16 %v3388, %v3387
    %v3938 = vpack.c.b16 %v3390, %v3389
    %v3939 = vpack.c.b16 %v3392, %v3391
    %v3940 = vpack.c.b16 %v3394, %v3393
    %v3941 = vpack.c.b16 %v3396, %v3395
    %v3942 = vpack.c.b16 %v3398, %v3397
    %v3943 = vpack.c.b16 %v3400, %v3399
    %v3944 = vpack.c.b16 %v3402, %v3401
    %v3945 = vpack.c.b16 %v3404, %v3403
    %v3946 = vpack.c.b16 %v3406, %v3405
    %v3947 = vpack.c.b16 %v3408, %v3407
    %v3948 = vpack.c.b16 %v3410, %v3409
    %v3949 = vpack.c.b16 %v3412, %v3411
    %v3950 = vpack.c.b16 %v3414, %v3413
    %v3951 = vpack.c.b16 %v3416, %v3415
    %v3952 = vpack.c.b16 %v3418, %v3417
    %v3953 = vpack.c.b16 %v3420, %v3419
    %v3954 = vpack.c.b16 %v3422, %v3421
    %v3955 = vpack.c.b16 %v3424, %v3423
    %v3956 = vpack.c.b16 %v3426, %v3425
    %v3957 = vpack.c.b16 %v3428, %v3427
    %v3958 = vpack.c.b16 %v3430, %v3429
    %v3959 = vpack.c.b16 %v3432, %v3431
    %v3960 = vpack.c.b16 %v3434, %v3433
    %v3961 = vpack.c.b16 %v3436, %v3435
    %v3962 = vpack.c.b16 %v3438, %v3437
    %v3963 = vpack.c.b16 %v3440, %v3439
    %v3964 = vpack.c.b16 %v3442, %v3441
    %v3965 = vpack.c.b16 %v3444, %v3443
    %v3966 = vpack.c.b16 %v3446, %v3445
    %v3967 = vpack.c.b16 %v3448, %v3447
    %v3968 = vpack.c.b16 %v3450, %v3449
    %v3969 = vpack.c.b16 %v3452, %v3451
    %v3970 = vpack.c.b16 %v3454, %v3453
    %v3971 = vpack.c.b16 %v3456, %v3455
    %v3972 = vpack.c.b16 %v3458, %v3457
    %v3973 = vpack.c.b16 %v3460, %v3459
    %v3974 = vpack.c.b16 %v3462, %v3461
    %v3975 = vpack.c.b16 %v3464, %v3463
    %v3976 = vpack.c.b16 %v3466, %v3465
    %v3977 = vpack.c.b16 %v3468, %v3467
    %v3978 = vpack.c.b16 %v3470, %v3469
    %v3979 = vpack.c.b16 %v3472, %v3471
    %v3980 = vpack.c.b16 %v3474, %v3473
    %v3981 = vpack.c.b16 %v3476, %v3475
    %v3982 = vpack.c.b16 %v3478, %v3477
    %v3983 = vpack.c.b16 %v3480, %v3479
    %v3984 = vpack.c.b16 %v3482, %v3481
    %v3985 = vpack.c.b16 %v3484, %v3483
    %v3986 = vpack.c.b16 %v3486, %v3485
    %v3987 = vpack.c.b16 %v3488, %v3487
    %v3988 = vpack.c.b16 %v3490, %v3489
    %v3989 = vpack.c.b16 %v3492, %v3491
    %v3990 = vpack.c.b16 %v3494, %v3493
    %v3991 = vpack.c.b16 %v3496, %v3495
    %v3992 = vpack.c.b16 %v3498, %v3497
    %v3993 = vpack.c.b16 %v3500, %v3499
    %v3994 = vpack.c.b16 %v3502, %v3501
    %v3995 = vpack.c.b16 %v3504, %v3503
    %v3996 = vpack.c.b16 %v3506, %v3505
    %v3997 = vpack.c.b16 %v3508, %v3507
    %v3998 = vpack.c.b16 %v3510, %v3509
    %v3999 = vpack.c.b16 %v3512, %v3511
    %v4000 = vpack.c.b16 %v3514, %v3513
    %v4001 = vpack.c.b16 %v3516, %v3515
    %v4002 = vpack.c.b16 %v3518, %v3517
    %v4003 = vpack.c.b16 %v3520, %v3519
    %v4004 = vpack.c.b16 %v3522, %v3521
    %v4005 = vpack.c.b16 %v3524, %v3523
    %v4006 = vpack.c.b16 %v3526, %v3525
    %v4007 = vpack.c.b16 %v3528, %v3527
    %v4008 = vpack.c.b16 %v3530, %v3529
    %v4009 = vpack.c.b16 %v3532, %v3531
    %v4010 = vpack.c.b16 %v3534, %v3533
    %v4011 = vpack.c.b16 %v3536, %v3535
    %v4012 = vpack.c.b16 %v3538, %v3537
    %v4013 = vpack.c.b16 %v3540, %v3539
    %v4014 = vpack.c.b16 %v3542, %v3541
    %v4015 = vpack.c.b16 %v3544, %v3543
    %v4016 = vpack.c.b16 %v3546, %v3545
    %v4017 = vpack.c.b16 %v3548, %v3547
    %v4018 = vpack.c.b16 %v3550, %v3549
    %v4019 = vpack.c.b16 %v3552, %v3551
    %v4020 = vpack.c.b16 %v3554, %v3553
    %v4021 = vpack.c.b16 %v3556, %v3555
    %v4022 = vpack.c.b16 %v3558, %v3557
    %v4023 = vpack.c.b16 %v3560, %v3559
    %v4024 = vpack.c.b16 %v3562, %v3561
    %v4025 = vpack.c.b16 %v3564, %v3563
    %v4026 = vpack.c.b16 %v3566, %v3565
    %v4027 = vpack.c.b16 %v3568, %v3567
    %v4028 = vpack.c.b16 %v3570, %v3569
    %v4029 = vpack.c.b16 %v3572, %v3571
    %v4030 = vpack.c.b16 %v3574, %v3573
    %v4031 = vpack.c.b16 %v3576, %v3575
    %v4032 = vpack.c.b16 %v3578, %v3577
    %v4033 = vpack.c.b16 %v3580, %v3579
    %v4034 = vpack.c.b16 %v3582, %v3581
    %v4035 = vpack.c.b16 %v3584, %v3583
    %v4036 = vpack.c.b16 %v3586, %v3585
    %v4037 = vpack.c.b16 %v3588, %v3587
    %v4038 = vpack.c.b16 %v3590, %v3589
    %v4039 = vpack.c.b16 %v3592, %v3591
    %v4040 = vpack.c.b16 %v3594, %v3593
    %v4041 = vpack.c.b16 %v3596, %v3595
    %v4042 = vpack.c.b16 %v3598, %v3597
    %v4043 = vpack.c.b16 %v3600, %v3599
    %v4044 = vpack.c.b16 %v3602, %v3601
    %v4045 = vpack.c.b16 %v3604, %v3603
    %v4046 = vpack.c.b16 %v3606, %v3605
    %v4047 = vpack.c.b16 %v3608, %v3607
    %v4048 = vpack.c.b16 %v3610, %v3609
    %v4049 = vpack.c.b16 %v3612, %v3611
    %v4050 = vpack.c.b16 %v3614, %v3613
    %v4051 = vpack.c.b16 %v3616, %v3615
    %v4052 = vpack.c.b16 %v3618, %v3617
    %v4053 = vpack.c.b16 %v3620, %v3619
    %v4054 = vpack.c.b16 %v3622, %v3621
    %v4055 = vpack.c.b16 %v3624, %v3623
    %v4056 = vpack.c.b16 %v3626, %v3625
    %v4057 = vpack.c.b16 %v3628, %v3627
    %v4058 = vpack.c.b16 %v3630, %v3629
    %v4059 = vpack.c.b16 %v3632, %v3631
    %v4060 = vpack.c.b16 %v3634, %v3633
    %v4061 = vpack.c.b16 %v3636, %v3635
    %v4062 = vpack.c.b16 %v3638, %v3637
    %v4063 = vpack.c.b16 %v3640, %v3639
    %v4064 = vpack.c.b16 %v3642, %v3641
    %v4065 = vpack.c.b16 %v3644, %v3643
    %v4066 = vpack.c.b16 %v3646, %v3645
    %v4067 = vpack.c.b16 %v3648, %v3647
    %v4068 = vpack.c.b16 %v3650, %v3649
    %v4069 = vpack.c.b16 %v3652, %v3651
    %v4070 = vpack.c.b16 %v3654, %v3653
    %v4071 = vpack.c.b16 %v3656, %v3655
    %v4072 = vpack.c.b16 %v3658, %v3657
    %v4073 = vpack.c.b16 %v3660, %v3659
    %v4074 = vpack.c.b16 %v3662, %v3661
    %v4075 = vpack.c.b16 %v3664, %v3663
    %v4076 = vpack.c.b16 %v3666, %v3665
    %v4077 = vpack.c.b16 %v3668, %v3667
    %v4078 = vpack.c.b16 %v3670, %v3669
    %v4079 = vpack.c.b16 %v3672, %v3671
    %v4080 = vpack.c.b16 %v3674, %v3673
    %v4081 = vpack.c.b16 %v3676, %v3675
    %v4082 = vpack.c.b16 %v3678, %v3677
    %v4083 = vpack.c.b16 %v3680, %v3679
    %v4084 = vpack.c.b16 %v3682, %v3681
    %v4085 = vpack.c.b16 %v3684, %v3683
    %v4086 = vpack.c.b16 %v3686, %v3685
    %4487 = vmatprep.subr.bf16.mxu0 0
    %4488 = vmatpush1.bf16.msra.mxu0 %v3687
    %4489 = vmatprep.subr.bf16.mxu0 0
    %4490 = vmatpush1.bf16.msra.mxu0 %v3688
    %4491 = vmatprep.subr.bf16.mxu0 0
    %4492 = vmatpush1.bf16.msra.mxu0 %v3689
    %4493 = vmatprep.subr.bf16.mxu0 0
    %4494 = vmatpush1.bf16.msra.mxu0 %v3690
    %4495 = vmatprep.subr.bf16.mxu0 0
    %4496 = vmatpush1.bf16.msra.mxu0 %v3691
    %4497 = vmatprep.subr.bf16.mxu0 0
    %4498 = vmatpush1.bf16.msra.mxu0 %v3692
    %4499 = vmatprep.subr.bf16.mxu0 0
    %4500 = vmatpush1.bf16.msra.mxu0 %v3693
    %4501 = vmatprep.subr.bf16.mxu0 0
    %4502 = vmatpush1.bf16.msra.mxu0 %v3694
    %4503 = vmatprep.subr.bf16.mxu0 0
    %4504 = vmatpush1.bf16.msra.mxu0 %v3695
    %4505 = vmatprep.subr.bf16.mxu0 0
    %4506 = vmatpush1.bf16.msra.mxu0 %v3696
    %4507 = vmatprep.subr.bf16.mxu0 0
    %4508 = vmatpush1.bf16.msra.mxu0 %v3697
    %4509 = vmatprep.subr.bf16.mxu0 0
    %4510 = vmatpush1.bf16.msra.mxu0 %v3698
    %4511 = vmatprep.subr.bf16.mxu0 0
    %4512 = vmatpush1.bf16.msra.mxu0 %v3699
    %4513 = vmatprep.subr.bf16.mxu0 0
    %4514 = vmatpush1.bf16.msra.mxu0 %v3700
    %4515 = vmatprep.subr.bf16.mxu0 0
    %4516 = vmatpush1.bf16.msra.mxu0 %v3701
    %4517 = vmatprep.subr.bf16.mxu0 0
    %4518 = vmatpush1.bf16.msra.mxu0 %v3702
    %4519 = vmatprep.mubr.bf16.mxu0 %v1231
    %4520 = vmatmul.mubr.bf16.gmra.mrb[0].mxu0 %v1230
    %v4521 = vpop.f32.mrb[0].mxu0
    %v4522 = vadd.f32 %v2085, %v4521
    %v4523 = vpop.f32.mrb[0].mxu0
    %v4524 = vpop.f32.mrb[0].mxu0
    %v4525 = vadd.f32 %v2085, %v4524
    %v4526 = vpop.f32.mrb[0].mxu0
    %4527 = vdwg.mxu0
    %4528 = vmatprep.subr.bf16.mxu0 0
    %4529 = vmatpush1.bf16.msra.mxu0 %v3703
    %4530 = vmatprep.subr.bf16.mxu0 0
    %4531 = vmatpush1.bf16.msra.mxu0 %v3704
    %4532 = vmatprep.subr.bf16.mxu0 0
    %4533 = vmatpush1.bf16.msra.mxu0 %v3705
    %4534 = vmatprep.subr.bf16.mxu0 0
    %4535 = vmatpush1.bf16.msra.mxu0 %v3706
    %4536 = vmatprep.subr.bf16.mxu0 0
    %4537 = vmatpush1.bf16.msra.mxu0 %v3707
    %4538 = vmatprep.subr.bf16.mxu0 0
    %4539 = vmatpush1.bf16.msra.mxu0 %v3708
    %4540 = vmatprep.subr.bf16.mxu0 0
    %4541 = vmatpush1.bf16.msra.mxu0 %v3709
    %4542 = vmatprep.subr.bf16.mxu0 0
    %4543 = vmatpush1.bf16.msra.mxu0 %v3710
    %4544 = vmatprep.subr.bf16.mxu0 0
    %4545 = vmatpush1.bf16.msra.mxu0 %v3711
    %4546 = vmatprep.subr.bf16.mxu0 0
    %4547 = vmatpush1.bf16.msra.mxu0 %v3712
    %4548 = vmatprep.subr.bf16.mxu0 0
    %4549 = vmatpush1.bf16.msra.mxu0 %v3713
    %4550 = vmatprep.subr.bf16.mxu0 0
    %4551 = vmatpush1.bf16.msra.mxu0 %v3714
    %4552 = vmatprep.subr.bf16.mxu0 0
    %4553 = vmatpush1.bf16.msra.mxu0 %v3715
    %4554 = vmatprep.subr.bf16.mxu0 0
    %4555 = vmatpush1.bf16.msra.mxu0 %v3716
    %4556 = vmatprep.subr.bf16.mxu0 0
    %4557 = vmatpush1.bf16.msra.mxu0 %v3717
    %4558 = vmatprep.subr.bf16.mxu0 0
    %4559 = vmatpush1.bf16.msra.mxu0 %v3718
    %4560 = vmatprep.mubr.bf16.mxu0 %v1233
    %4561 = vmatmul.mubr.bf16.gmra.mrb[0].mxu0 %v1232
    %v4562 = vpop.f32.mrb[0].mxu0
    %v4563 = vadd.f32 %v4522, %v4562
    %v4564 = vpop.f32.mrb[0].mxu0
    %v4565 = vpop.f32.mrb[0].mxu0
    %v4566 = vadd.f32 %v4525, %v4565
    %v4567 = vpop.f32.mrb[0].mxu0
    %4568 = vdwg.mxu0
    %4569 = vmatprep.subr.bf16.mxu0 0
    %4570 = vmatpush1.bf16.msra.mxu0 %v3719
    %4571 = vmatprep.subr.bf16.mxu0 0
    %4572 = vmatpush1.bf16.msra.mxu0 %v3720
    %4573 = vmatprep.subr.bf16.mxu0 0
    %4574 = vmatpush1.bf16.msra.mxu0 %v3721
    %4575 = vmatprep.subr.bf16.mxu0 0
    %4576 = vmatpush1.bf16.msra.mxu0 %v3722
    %4577 = vmatprep.subr.bf16.mxu0 0
    %4578 = vmatpush1.bf16.msra.mxu0 %v3723
    %4579 = vmatprep.subr.bf16.mxu0 0
    %4580 = vmatpush1.bf16.msra.mxu0 %v3724
    %4581 = vmatprep.subr.bf16.mxu0 0
    %4582 = vmatpush1.bf16.msra.mxu0 %v3725
    %4583 = vmatprep.subr.bf16.mxu0 0
    %4584 = vmatpush1.bf16.msra.mxu0 %v3726
    %4585 = vmatprep.subr.bf16.mxu0 0
    %4586 = vmatpush1.bf16.msra.mxu0 %v3727
    %4587 = vmatprep.subr.bf16.mxu0 0
    %4588 = vmatpush1.bf16.msra.mxu0 %v3728
    %4589 = vmatprep.subr.bf16.mxu0 0
    %4590 = vmatpush1.bf16.msra.mxu0 %v3729
    %4591 = vmatprep.subr.bf16.mxu0 0
    %4592 = vmatpush1.bf16.msra.mxu0 %v3730
    %4593 = vmatprep.subr.bf16.mxu0 0
    %4594 = vmatpush1.bf16.msra.mxu0 %v3731
    %4595 = vmatprep.subr.bf16.mxu0 0
    %4596 = vmatpush1.bf16.msra.mxu0 %v3732
    %4597 = vmatprep.subr.bf16.mxu0 0
    %4598 = vmatpush1.bf16.msra.mxu0 %v3733
    %4599 = vmatprep.subr.bf16.mxu0 0
    %4600 = vmatpush1.bf16.msra.mxu0 %v3734
    %4601 = vmatprep.mubr.bf16.mxu0 %v1235
    %4602 = vmatmul.mubr.bf16.gmra.mrb[0].mxu0 %v1234
    %v4603 = vpop.f32.mrb[0].mxu0
    %v4604 = vadd.f32 %v4563, %v4603
    %v4605 = vpop.f32.mrb[0].mxu0
    %v4606 = vpop.f32.mrb[0].mxu0
    %v4607 = vadd.f32 %v4566, %v4606
    %v4608 = vpop.f32.mrb[0].mxu0
    %4609 = vdwg.mxu0
    %4610 = vmatprep.subr.bf16.mxu0 0
    %4611 = vmatpush1.bf16.msra.mxu0 %v3735
    %4612 = vmatprep.subr.bf16.mxu0 0
    %4613 = vmatpush1.bf16.msra.mxu0 %v3736
    %4614 = vmatprep.subr.bf16.mxu0 0
    %4615 = vmatpush1.bf16.msra.mxu0 %v3737
    %4616 = vmatprep.subr.bf16.mxu0 0
    %4617 = vmatpush1.bf16.msra.mxu0 %v3738
    %4618 = vmatprep.subr.bf16.mxu0 0
    %4619 = vmatpush1.bf16.msra.mxu0 %v3739
    %4620 = vmatprep.subr.bf16.mxu0 0
    %4621 = vmatpush1.bf16.msra.mxu0 %v3740
    %4622 = vmatprep.subr.bf16.mxu0 0
    %4623 = vmatpush1.bf16.msra.mxu0 %v3741
    %4624 = vmatprep.subr.bf16.mxu0 0
    %4625 = vmatpush1.bf16.msra.mxu0 %v3742
    %4626 = vmatprep.subr.bf16.mxu0 0
    %4627 = vmatpush1.bf16.msra.mxu0 %v3743
    %4628 = vmatprep.subr.bf16.mxu0 0
    %4629 = vmatpush1.bf16.msra.mxu0 %v3744
    %4630 = vmatprep.subr.bf16.mxu0 0
    %4631 = vmatpush1.bf16.msra.mxu0 %v3745
    %4632 = vmatprep.subr.bf16.mxu0 0
    %4633 = vmatpush1.bf16.msra.mxu0 %v3746
    %4634 = vmatprep.subr.bf16.mxu0 0
    %4635 = vmatpush1.bf16.msra.mxu0 %v3747
    %4636 = vmatprep.subr.bf16.mxu0 0
    %4637 = vmatpush1.bf16.msra.mxu0 %v3748
    %4638 = vmatprep.subr.bf16.mxu0 0
    %4639 = vmatpush1.bf16.msra.mxu0 %v3749
    %4640 = vmatprep.subr.bf16.mxu0 0
    %4641 = vmatpush1.bf16.msra.mxu0 %v3750
    %4642 = vmatprep.mubr.bf16.mxu0 %v1237
    %4643 = vmatmul.mubr.bf16.gmra.mrb[0].mxu0 %v1236
    %v4644 = vpop.f32.mrb[0].mxu0
    %v4645 = vadd.f32 %v4604, %v4644
    %v4646 = vpop.f32.mrb[0].mxu0
    %v4647 = vpop.f32.mrb[0].mxu0
    %v4648 = vadd.f32 %v4607, %v4647
    %v4649 = vpop.f32.mrb[0].mxu0
    %4650 = vdwg.mxu0
    %4651 = vmatprep.subr.bf16.mxu0 0
    %4652 = vmatpush1.bf16.msra.mxu0 %v3751
    %4653 = vmatprep.subr.bf16.mxu0 0
    %4654 = vmatpush1.bf16.msra.mxu0 %v3752
    %4655 = vmatprep.subr.bf16.mxu0 0
    %4656 = vmatpush1.bf16.msra.mxu0 %v3753
    %4657 = vmatprep.subr.bf16.mxu0 0
    %4658 = vmatpush1.bf16.msra.mxu0 %v3754
    %4659 = vmatprep.subr.bf16.mxu0 0
    %4660 = vmatpush1.bf16.msra.mxu0 %v3755
    %4661 = vmatprep.subr.bf16.mxu0 0
    %4662 = vmatpush1.bf16.msra.mxu0 %v3756
    %4663 = vmatprep.subr.bf16.mxu0 0
    %4664 = vmatpush1.bf16.msra.mxu0 %v3757
    %4665 = vmatprep.subr.bf16.mxu0 0
    %4666 = vmatpush1.bf16.msra.mxu0 %v3758
    %4667 = vmatprep.subr.bf16.mxu0 0
    %4668 = vmatpush1.bf16.msra.mxu0 %v3759
    %4669 = vmatprep.subr.bf16.mxu0 0
    %4670 = vmatpush1.bf16.msra.mxu0 %v3760
    %4671 = vmatprep.subr.bf16.mxu0 0
    %4672 = vmatpush1.bf16.msra.mxu0 %v3761
    %4673 = vmatprep.subr.bf16.mxu0 0
    %4674 = vmatpush1.bf16.msra.mxu0 %v3762
    %4675 = vmatprep.subr.bf16.mxu0 0
    %4676 = vmatpush1.bf16.msra.mxu0 %v3763
    %4677 = vmatprep.subr.bf16.mxu0 0
    %4678 = vmatpush1.bf16.msra.mxu0 %v3764
    %4679 = vmatprep.subr.bf16.mxu0 0
    %4680 = vmatpush1.bf16.msra.mxu0 %v3765
    %4681 = vmatprep.subr.bf16.mxu0 0
    %4682 = vmatpush1.bf16.msra.mxu0 %v3766
    %4683 = vmatprep.mubr.bf16.mxu0 %v1239
    %4684 = vmatmul.mubr.bf16.gmra.mrb[0].mxu0 %v1238
    %v4685 = vpop.f32.mrb[0].mxu0
    %v4686 = vadd.f32 %v4645, %v4685
    %v4687 = vpop.f32.mrb[0].mxu0
    %v4688 = vpop.f32.mrb[0].mxu0
    %v4689 = vadd.f32 %v4648, %v4688
    %v4690 = vpop.f32.mrb[0].mxu0
    %4691 = vdwg.mxu0
    %4692 = vmatprep.subr.bf16.mxu0 0
    %4693 = vmatpush1.bf16.msra.mxu0 %v3767
    %4694 = vmatprep.subr.bf16.mxu0 0
    %4695 = vmatpush1.bf16.msra.mxu0 %v3768
    %4696 = vmatprep.subr.bf16.mxu0 0
    %4697 = vmatpush1.bf16.msra.mxu0 %v3769
    %4698 = vmatprep.subr.bf16.mxu0 0
    %4699 = vmatpush1.bf16.msra.mxu0 %v3770
    %4700 = vmatprep.subr.bf16.mxu0 0
    %4701 = vmatpush1.bf16.msra.mxu0 %v3771
    %4702 = vmatprep.subr.bf16.mxu0 0
    %4703 = vmatpush1.bf16.msra.mxu0 %v3772
    %4704 = vmatprep.subr.bf16.mxu0 0
    %4705 = vmatpush1.bf16.msra.mxu0 %v3773
    %4706 = vmatprep.subr.bf16.mxu0 0
    %4707 = vmatpush1.bf16.msra.mxu0 %v3774
    %4708 = vmatprep.subr.bf16.mxu0 0
    %4709 = vmatpush1.bf16.msra.mxu0 %v3775
    %4710 = vmatprep.subr.bf16.mxu0 0
    %4711 = vmatpush1.bf16.msra.mxu0 %v3776
    %4712 = vmatprep.subr.bf16.mxu0 0
    %4713 = vmatpush1.bf16.msra.mxu0 %v3777
    %4714 = vmatprep.subr.bf16.mxu0 0
    %4715 = vmatpush1.bf16.msra.mxu0 %v3778
    %4716 = vmatprep.subr.bf16.mxu0 0
    %4717 = vmatpush1.bf16.msra.mxu0 %v3779
    %4718 = vmatprep.subr.bf16.mxu0 0
    %4719 = vmatpush1.bf16.msra.mxu0 %v3780
    %4720 = vmatprep.subr.bf16.mxu0 0
    %4721 = vmatpush1.bf16.msra.mxu0 %v3781
    %4722 = vmatprep.subr.bf16.mxu0 0
    %4723 = vmatpush1.bf16.msra.mxu0 %v3782
    %4724 = vmatprep.mubr.bf16.mxu0 %v1241
    %4725 = vmatmul.mubr.bf16.gmra.mrb[0].mxu0 %v1240
    %v4726 = vpop.f32.mrb[0].mxu0
    %v4727 = vadd.f32 %v4686, %v4726
    %v4728 = vpop.f32.mrb[0].mxu0
    %v4729 = vpop.f32.mrb[0].mxu0
    %v4730 = vadd.f32 %v4689, %v4729
    %v4731 = vpop.f32.mrb[0].mxu0
    %4732 = vdwg.mxu0
    %4733 = vmatprep.subr.bf16.mxu0 0
    %4734 = vmatpush1.bf16.msra.mxu0 %v3783
    %4735 = vmatprep.subr.bf16.mxu0 0
    %4736 = vmatpush1.bf16.msra.mxu0 %v3784
    %4737 = vmatprep.subr.bf16.mxu0 0
    %4738 = vmatpush1.bf16.msra.mxu0 %v3785
    %4739 = vmatprep.subr.bf16.mxu0 0
    %4740 = vmatpush1.bf16.msra.mxu0 %v3786
    %4741 = vmatprep.subr.bf16.mxu0 0
    %4742 = vmatpush1.bf16.msra.mxu0 %v3787
    %4743 = vmatprep.subr.bf16.mxu0 0
    %4744 = vmatpush1.bf16.msra.mxu0 %v3788
    %4745 = vmatprep.subr.bf16.mxu0 0
    %4746 = vmatpush1.bf16.msra.mxu0 %v3789
    %4747 = vmatprep.subr.bf16.mxu0 0
    %4748 = vmatpush1.bf16.msra.mxu0 %v3790
    %4749 = vmatprep.subr.bf16.mxu0 0
    %4750 = vmatpush1.bf16.msra.mxu0 %v3791
    %4751 = vmatprep.subr.bf16.mxu0 0
    %4752 = vmatpush1.bf16.msra.mxu0 %v3792
    %4753 = vmatprep.subr.bf16.mxu0 0
    %4754 = vmatpush1.bf16.msra.mxu0 %v3793
    %4755 = vmatprep.subr.bf16.mxu0 0
    %4756 = vmatpush1.bf16.msra.mxu0 %v3794
    %4757 = vmatprep.subr.bf16.mxu0 0
    %4758 = vmatpush1.bf16.msra.mxu0 %v3795
    %4759 = vmatprep.subr.bf16.mxu0 0
    %4760 = vmatpush1.bf16.msra.mxu0 %v3796
    %4761 = vmatprep.subr.bf16.mxu0 0
    %4762 = vmatpush1.bf16.msra.mxu0 %v3797
    %4763 = vmatprep.subr.bf16.mxu0 0
    %4764 = vmatpush1.bf16.msra.mxu0 %v3798
    %4765 = vmatprep.mubr.bf16.mxu0 %v1243
    %4766 = vmatmul.mubr.bf16.gmra.mrb[0].mxu0 %v1242
    %v4767 = vpop.f32.mrb[0].mxu0
    %v4768 = vadd.f32 %v4727, %v4767
    %v4769 = vpop.f32.mrb[0].mxu0
    %v4770 = vpop.f32.mrb[0].mxu0
    %v4771 = vadd.f32 %v4730, %v4770
    %v4772 = vpop.f32.mrb[0].mxu0
    %4773 = vdwg.mxu0
    %4774 = vmatprep.subr.bf16.mxu0 0
    %4775 = vmatpush1.bf16.msra.mxu0 %v3799
    %4776 = vmatprep.subr.bf16.mxu0 0
    %4777 = vmatpush1.bf16.msra.mxu0 %v3800
    %4778 = vmatprep.subr.bf16.mxu0 0
    %4779 = vmatpush1.bf16.msra.mxu0 %v3801
    %4780 = vmatprep.subr.bf16.mxu0 0
    %4781 = vmatpush1.bf16.msra.mxu0 %v3802
    %4782 = vmatprep.subr.bf16.mxu0 0
    %4783 = vmatpush1.bf16.msra.mxu0 %v3803
    %4784 = vmatprep.subr.bf16.mxu0 0
    %4785 = vmatpush1.bf16.msra.mxu0 %v3804
    %4786 = vmatprep.subr.bf16.mxu0 0
    %4787 = vmatpush1.bf16.msra.mxu0 %v3805
    %4788 = vmatprep.subr.bf16.mxu0 0
    %4789 = vmatpush1.bf16.msra.mxu0 %v3806
    %4790 = vmatprep.subr.bf16.mxu0 0
    %4791 = vmatpush1.bf16.msra.mxu0 %v3807
    %4792 = vmatprep.subr.bf16.mxu0 0
    %4793 = vmatpush1.bf16.msra.mxu0 %v3808
    %4794 = vmatprep.subr.bf16.mxu0 0
    %4795 = vmatpush1.bf16.msra.mxu0 %v3809
    %4796 = vmatprep.subr.bf16.mxu0 0
    %4797 = vmatpush1.bf16.msra.mxu0 %v3810
    %4798 = vmatprep.subr.bf16.mxu0 0
    %4799 = vmatpush1.bf16.msra.mxu0 %v3811
    %4800 = vmatprep.subr.bf16.mxu0 0
    %4801 = vmatpush1.bf16.msra.mxu0 %v3812
    %4802 = vmatprep.subr.bf16.mxu0 0
    %4803 = vmatpush1.bf16.msra.mxu0 %v3813
    %4804 = vmatprep.subr.bf16.mxu0 0
    %4805 = vmatpush1.bf16.msra.mxu0 %v3814
    %4806 = vmatprep.mubr.bf16.mxu0 %v1245
    %4807 = vmatmul.mubr.bf16.gmra.mrb[0].mxu0 %v1244
    %v4808 = vpop.f32.mrb[0].mxu0
    %v4809 = vadd.f32 %v4768, %v4808
    %v4810 = vpop.f32.mrb[0].mxu0
    %v4811 = vpop.f32.mrb[0].mxu0
    %v4812 = vadd.f32 %v4771, %v4811
    %v4813 = vpop.f32.mrb[0].mxu0
    %4814 = vdwg.mxu0
    %4815 = vmatprep.subr.bf16.mxu0 0
    %4816 = vmatpush1.bf16.msra.mxu0 %v3815
    %4817 = vmatprep.subr.bf16.mxu0 0
    %4818 = vmatpush1.bf16.msra.mxu0 %v3816
    %4819 = vmatprep.subr.bf16.mxu0 0
    %4820 = vmatpush1.bf16.msra.mxu0 %v3817
    %4821 = vmatprep.subr.bf16.mxu0 0
    %4822 = vmatpush1.bf16.msra.mxu0 %v3818
    %4823 = vmatprep.subr.bf16.mxu0 0
    %4824 = vmatpush1.bf16.msra.mxu0 %v3819
    %4825 = vmatprep.subr.bf16.mxu0 0
    %4826 = vmatpush1.bf16.msra.mxu0 %v3820
    %4827 = vmatprep.subr.bf16.mxu0 0
    %4828 = vmatpush1.bf16.msra.mxu0 %v3821
    %4829 = vmatprep.subr.bf16.mxu0 0
    %4830 = vmatpush1.bf16.msra.mxu0 %v3822
    %4831 = vmatprep.subr.bf16.mxu0 0
    %4832 = vmatpush1.bf16.msra.mxu0 %v3823
    %4833 = vmatprep.subr.bf16.mxu0 0
    %4834 = vmatpush1.bf16.msra.mxu0 %v3824
    %4835 = vmatprep.subr.bf16.mxu0 0
    %4836 = vmatpush1.bf16.msra.mxu0 %v3825
    %4837 = vmatprep.subr.bf16.mxu0 0
    %4838 = vmatpush1.bf16.msra.mxu0 %v3826
    %4839 = vmatprep.subr.bf16.mxu0 0
    %4840 = vmatpush1.bf16.msra.mxu0 %v3827
    %4841 = vmatprep.subr.bf16.mxu0 0
    %4842 = vmatpush1.bf16.msra.mxu0 %v3828
    %4843 = vmatprep.subr.bf16.mxu0 0
    %4844 = vmatpush1.bf16.msra.mxu0 %v3829
    %4845 = vmatprep.subr.bf16.mxu0 0
    %4846 = vmatpush1.bf16.msra.mxu0 %v3830
    %4847 = vmatprep.mubr.bf16.mxu0 %v1247
    %4848 = vmatmul.mubr.bf16.gmra.mrb[0].mxu0 %v1246
    %v4849 = vpop.f32.mrb[0].mxu0
    %v4850 = vadd.f32 %v4809, %v4849
    %v4851 = vpop.f32.mrb[0].mxu0
    %v4852 = vpop.f32.mrb[0].mxu0
    %v4853 = vadd.f32 %v4812, %v4852
    %v4854 = vpop.f32.mrb[0].mxu0
    %4855 = vdwg.mxu0
    %4856 = vmatprep.subr.bf16.mxu0 0
    %4857 = vmatpush1.bf16.msra.mxu0 %v3831
    %4858 = vmatprep.subr.bf16.mxu0 0
    %4859 = vmatpush1.bf16.msra.mxu0 %v3832
    %4860 = vmatprep.subr.bf16.mxu0 0
    %4861 = vmatpush1.bf16.msra.mxu0 %v3833
    %4862 = vmatprep.subr.bf16.mxu0 0
    %4863 = vmatpush1.bf16.msra.mxu0 %v3834
    %4864 = vmatprep.subr.bf16.mxu0 0
    %4865 = vmatpush1.bf16.msra.mxu0 %v3835
    %4866 = vmatprep.subr.bf16.mxu0 0
    %4867 = vmatpush1.bf16.msra.mxu0 %v3836
    %4868 = vmatprep.subr.bf16.mxu0 0
    %4869 = vmatpush1.bf16.msra.mxu0 %v3837
    %4870 = vmatprep.subr.bf16.mxu0 0
    %4871 = vmatpush1.bf16.msra.mxu0 %v3838
    %4872 = vmatprep.subr.bf16.mxu0 0
    %4873 = vmatpush1.bf16.msra.mxu0 %v3839
    %4874 = vmatprep.subr.bf16.mxu0 0
    %4875 = vmatpush1.bf16.msra.mxu0 %v3840
    %4876 = vmatprep.subr.bf16.mxu0 0
    %4877 = vmatpush1.bf16.msra.mxu0 %v3841
    %4878 = vmatprep.subr.bf16.mxu0 0
    %4879 = vmatpush1.bf16.msra.mxu0 %v3842
    %4880 = vmatprep.subr.bf16.mxu0 0
    %4881 = vmatpush1.bf16.msra.mxu0 %v3843
    %4882 = vmatprep.subr.bf16.mxu0 0
    %4883 = vmatpush1.bf16.msra.mxu0 %v3844
    %4884 = vmatprep.subr.bf16.mxu0 0
    %4885 = vmatpush1.bf16.msra.mxu0 %v3845
    %4886 = vmatprep.subr.bf16.mxu0 0
    %4887 = vmatpush1.bf16.msra.mxu0 %v3846
    %4888 = vmatprep.mubr.bf16.mxu0 %v1249
    %4889 = vmatmul.mubr.bf16.gmra.mrb[0].mxu0 %v1248
    %v4890 = vpop.f32.mrb[0].mxu0
    %v4891 = vadd.f32 %v4850, %v4890
    %v4892 = vpop.f32.mrb[0].mxu0
    %v4893 = vpop.f32.mrb[0].mxu0
    %v4894 = vadd.f32 %v4853, %v4893
    %v4895 = vpop.f32.mrb[0].mxu0
    %4896 = vdwg.mxu0
    %4897 = vmatprep.subr.bf16.mxu0 0
    %4898 = vmatpush1.bf16.msra.mxu0 %v3847
    %4899 = vmatprep.subr.bf16.mxu0 0
    %4900 = vmatpush1.bf16.msra.mxu0 %v3848
    %4901 = vmatprep.subr.bf16.mxu0 0
    %4902 = vmatpush1.bf16.msra.mxu0 %v3849
    %4903 = vmatprep.subr.bf16.mxu0 0
    %4904 = vmatpush1.bf16.msra.mxu0 %v3850
    %4905 = vmatprep.subr.bf16.mxu0 0
    %4906 = vmatpush1.bf16.msra.mxu0 %v3851
    %4907 = vmatprep.subr.bf16.mxu0 0
    %4908 = vmatpush1.bf16.msra.mxu0 %v3852
    %4909 = vmatprep.subr.bf16.mxu0 0
    %4910 = vmatpush1.bf16.msra.mxu0 %v3853
    %4911 = vmatprep.subr.bf16.mxu0 0
    %4912 = vmatpush1.bf16.msra.mxu0 %v3854
    %4913 = vmatprep.subr.bf16.mxu0 0
    %4914 = vmatpush1.bf16.msra.mxu0 %v3855
    %4915 = vmatprep.subr.bf16.mxu0 0
    %4916 = vmatpush1.bf16.msra.mxu0 %v3856
    %4917 = vmatprep.subr.bf16.mxu0 0
    %4918 = vmatpush1.bf16.msra.mxu0 %v3857
    %4919 = vmatprep.subr.bf16.mxu0 0
    %4920 = vmatpush1.bf16.msra.mxu0 %v3858
    %4921 = vmatprep.subr.bf16.mxu0 0
    %4922 = vmatpush1.bf16.msra.mxu0 %v3859
    %4923 = vmatprep.subr.bf16.mxu0 0
    %4924 = vmatpush1.bf16.msra.mxu0 %v3860
    %4925 = vmatprep.subr.bf16.mxu0 0
    %4926 = vmatpush1.bf16.msra.mxu0 %v3861
    %4927 = vmatprep.subr.bf16.mxu0 0
    %4928 = vmatpush1.bf16.msra.mxu0 %v3862
    %4929 = vmatprep.mubr.bf16.mxu0 %v1251
    %4930 = vmatmul.mubr.bf16.gmra.mrb[0].mxu0 %v1250
    %v4931 = vpop.f32.mrb[0].mxu0
    %v4932 = vadd.f32 %v4891, %v4931
    %v4933 = vpop.f32.mrb[0].mxu0
    %v4934 = vpop.f32.mrb[0].mxu0
    %v4935 = vadd.f32 %v4894, %v4934
    %v4936 = vpop.f32.mrb[0].mxu0
    %4937 = vdwg.mxu0
    %4938 = vmatprep.subr.bf16.mxu0 0
    %4939 = vmatpush1.bf16.msra.mxu0 %v3863
    %4940 = vmatprep.subr.bf16.mxu0 0
    %4941 = vmatpush1.bf16.msra.mxu0 %v3864
    %4942 = vmatprep.subr.bf16.mxu0 0
    %4943 = vmatpush1.bf16.msra.mxu0 %v3865
    %4944 = vmatprep.subr.bf16.mxu0 0
    %4945 = vmatpush1.bf16.msra.mxu0 %v3866
    %4946 = vmatprep.subr.bf16.mxu0 0
    %4947 = vmatpush1.bf16.msra.mxu0 %v3867
    %4948 = vmatprep.subr.bf16.mxu0 0
    %4949 = vmatpush1.bf16.msra.mxu0 %v3868
    %4950 = vmatprep.subr.bf16.mxu0 0
    %4951 = vmatpush1.bf16.msra.mxu0 %v3869
    %4952 = vmatprep.subr.bf16.mxu0 0
    %4953 = vmatpush1.bf16.msra.mxu0 %v3870
    %4954 = vmatprep.subr.bf16.mxu0 0
    %4955 = vmatpush1.bf16.msra.mxu0 %v3871
    %4956 = vmatprep.subr.bf16.mxu0 0
    %4957 = vmatpush1.bf16.msra.mxu0 %v3872
    %4958 = vmatprep.subr.bf16.mxu0 0
    %4959 = vmatpush1.bf16.msra.mxu0 %v3873
    %4960 = vmatprep.subr.bf16.mxu0 0
    %4961 = vmatpush1.bf16.msra.mxu0 %v3874
    %4962 = vmatprep.subr.bf16.mxu0 0
    %4963 = vmatpush1.bf16.msra.mxu0 %v3875
    %4964 = vmatprep.subr.bf16.mxu0 0
    %4965 = vmatpush1.bf16.msra.mxu0 %v3876
    %4966 = vmatprep.subr.bf16.mxu0 0
    %4967 = vmatpush1.bf16.msra.mxu0 %v3877
    %4968 = vmatprep.subr.bf16.mxu0 0
    %4969 = vmatpush1.bf16.msra.mxu0 %v3878
    %4970 = vmatprep.mubr.bf16.mxu0 %v1253
    %4971 = vmatmul.mubr.bf16.gmra.mrb[0].mxu0 %v1252
    %v4972 = vpop.f32.mrb[0].mxu0
    %v4973 = vadd.f32 %v4932, %v4972
    %v4974 = vpop.f32.mrb[0].mxu0
    %v4975 = vpop.f32.mrb[0].mxu0
    %v4976 = vadd.f32 %v4935, %v4975
    %v4977 = vpop.f32.mrb[0].mxu0
    %4978 = vdwg.mxu0
    %4979 = vmatprep.subr.bf16.mxu0 0
    %4980 = vmatpush1.bf16.msra.mxu0 %v3879
    %4981 = vmatprep.subr.bf16.mxu0 0
    %4982 = vmatpush1.bf16.msra.mxu0 %v3880
    %4983 = vmatprep.subr.bf16.mxu0 0
    %4984 = vmatpush1.bf16.msra.mxu0 %v3881
    %4985 = vmatprep.subr.bf16.mxu0 0
    %4986 = vmatpush1.bf16.msra.mxu0 %v3882
    %4987 = vmatprep.subr.bf16.mxu0 0
    %4988 = vmatpush1.bf16.msra.mxu0 %v3883
    %4989 = vmatprep.subr.bf16.mxu0 0
    %4990 = vmatpush1.bf16.msra.mxu0 %v3884
    %4991 = vmatprep.subr.bf16.mxu0 0
    %4992 = vmatpush1.bf16.msra.mxu0 %v3885
    %4993 = vmatprep.subr.bf16.mxu0 0
    %4994 = vmatpush1.bf16.msra.mxu0 %v3886
    %4995 = vmatprep.subr.bf16.mxu0 0
    %4996 = vmatpush1.bf16.msra.mxu0 %v3887
    %4997 = vmatprep.subr.bf16.mxu0 0
    %4998 = vmatpush1.bf16.msra.mxu0 %v3888
    %4999 = vmatprep.subr.bf16.mxu0 0
    %5000 = vmatpush1.bf16.msra.mxu0 %v3889
    %5001 = vmatprep.subr.bf16.mxu0 0
    %5002 = vmatpush1.bf16.msra.mxu0 %v3890
    %5003 = vmatprep.subr.bf16.mxu0 0
    %5004 = vmatpush1.bf16.msra.mxu0 %v3891
    %5005 = vmatprep.subr.bf16.mxu0 0
    %5006 = vmatpush1.bf16.msra.mxu0 %v3892
    %5007 = vmatprep.subr.bf16.mxu0 0
    %5008 = vmatpush1.bf16.msra.mxu0 %v3893
    %5009 = vmatprep.subr.bf16.mxu0 0
    %5010 = vmatpush1.bf16.msra.mxu0 %v3894
    %5011 = vmatprep.mubr.bf16.mxu0 %v1255
    %5012 = vmatmul.mubr.bf16.gmra.mrb[0].mxu0 %v1254
    %v5013 = vpop.f32.mrb[0].mxu0
    %v5014 = vadd.f32 %v4973, %v5013
    %v5015 = vpop.f32.mrb[0].mxu0
    %v5016 = vpop.f32.mrb[0].mxu0
    %v5017 = vadd.f32 %v4976, %v5016
    %v5018 = vpop.f32.mrb[0].mxu0
    %5019 = vdwg.mxu0
    %5020 = vmatprep.subr.bf16.mxu0 0
    %5021 = vmatpush1.bf16.msra.mxu0 %v3895
    %5022 = vmatprep.subr.bf16.mxu0 0
    %5023 = vmatpush1.bf16.msra.mxu0 %v3896
    %5024 = vmatprep.subr.bf16.mxu0 0
    %5025 = vmatpush1.bf16.msra.mxu0 %v3897
    %5026 = vmatprep.subr.bf16.mxu0 0
    %5027 = vmatpush1.bf16.msra.mxu0 %v3898
    %5028 = vmatprep.subr.bf16.mxu0 0
    %5029 = vmatpush1.bf16.msra.mxu0 %v3899
    %5030 = vmatprep.subr.bf16.mxu0 0
    %5031 = vmatpush1.bf16.msra.mxu0 %v3900
    %5032 = vmatprep.subr.bf16.mxu0 0
    %5033 = vmatpush1.bf16.msra.mxu0 %v3901
    %5034 = vmatprep.subr.bf16.mxu0 0
    %5035 = vmatpush1.bf16.msra.mxu0 %v3902
    %5036 = vmatprep.subr.bf16.mxu0 0
    %5037 = vmatpush1.bf16.msra.mxu0 %v3903
    %5038 = vmatprep.subr.bf16.mxu0 0
    %5039 = vmatpush1.bf16.msra.mxu0 %v3904
    %5040 = vmatprep.subr.bf16.mxu0 0
    %5041 = vmatpush1.bf16.msra.mxu0 %v3905
    %5042 = vmatprep.subr.bf16.mxu0 0
    %5043 = vmatpush1.bf16.msra.mxu0 %v3906
    %5044 = vmatprep.subr.bf16.mxu0 0
    %5045 = vmatpush1.bf16.msra.mxu0 %v3907
    %5046 = vmatprep.subr.bf16.mxu0 0
    %5047 = vmatpush1.bf16.msra.mxu0 %v3908
    %5048 = vmatprep.subr.bf16.mxu0 0
    %5049 = vmatpush1.bf16.msra.mxu0 %v3909
    %5050 = vmatprep.subr.bf16.mxu0 0
    %5051 = vmatpush1.bf16.msra.mxu0 %v3910
    %5052 = vmatprep.mubr.bf16.mxu0 %v1257
    %5053 = vmatmul.mubr.bf16.gmra.mrb[0].mxu0 %v1256
    %v5054 = vpop.f32.mrb[0].mxu0
    %v5055 = vadd.f32 %v5014, %v5054
    %v5056 = vpop.f32.mrb[0].mxu0
    %v5057 = vpop.f32.mrb[0].mxu0
    %v5058 = vadd.f32 %v5017, %v5057
    %v5059 = vpop.f32.mrb[0].mxu0
    %5060 = vdwg.mxu0
    %5061 = vmatprep.subr.bf16.mxu0 0
    %5062 = vmatpush1.bf16.msra.mxu0 %v3911
    %5063 = vmatprep.subr.bf16.mxu0 0
    %5064 = vmatpush1.bf16.msra.mxu0 %v3912
    %5065 = vmatprep.subr.bf16.mxu0 0
    %5066 = vmatpush1.bf16.msra.mxu0 %v3913
    %5067 = vmatprep.subr.bf16.mxu0 0
    %5068 = vmatpush1.bf16.msra.mxu0 %v3914
    %5069 = vmatprep.subr.bf16.mxu0 0
    %5070 = vmatpush1.bf16.msra.mxu0 %v3915
    %5071 = vmatprep.subr.bf16.mxu0 0
    %5072 = vmatpush1.bf16.msra.mxu0 %v3916
    %5073 = vmatprep.subr.bf16.mxu0 0
    %5074 = vmatpush1.bf16.msra.mxu0 %v3917
    %5075 = vmatprep.subr.bf16.mxu0 0
    %5076 = vmatpush1.bf16.msra.mxu0 %v3918
    %5077 = vmatprep.subr.bf16.mxu0 0
    %5078 = vmatpush1.bf16.msra.mxu0 %v3919
    %5079 = vmatprep.subr.bf16.mxu0 0
    %5080 = vmatpush1.bf16.msra.mxu0 %v3920
    %5081 = vmatprep.subr.bf16.mxu0 0
    %5082 = vmatpush1.bf16.msra.mxu0 %v3921
    %5083 = vmatprep.subr.bf16.mxu0 0
    %5084 = vmatpush1.bf16.msra.mxu0 %v3922
    %5085 = vmatprep.subr.bf16.mxu0 0
    %5086 = vmatpush1.bf16.msra.mxu0 %v3923
    %5087 = vmatprep.subr.bf16.mxu0 0
    %5088 = vmatpush1.bf16.msra.mxu0 %v3924
    %5089 = vmatprep.subr.bf16.mxu0 0
    %5090 = vmatpush1.bf16.msra.mxu0 %v3925
    %5091 = vmatprep.subr.bf16.mxu0 0
    %5092 = vmatpush1.bf16.msra.mxu0 %v3926
    %5093 = vmatprep.mubr.bf16.mxu0 %v1259
    %5094 = vmatmul.mubr.bf16.gmra.mrb[0].mxu0 %v1258
    %v5095 = vpop.f32.mrb[0].mxu0
    %v5096 = vadd.f32 %v5055, %v5095
    %v5097 = vpop.f32.mrb[0].mxu0
    %v5098 = vpop.f32.mrb[0].mxu0
    %v5099 = vadd.f32 %v5058, %v5098
    %v5100 = vpop.f32.mrb[0].mxu0
    %5101 = vdwg.mxu0
    %5102 = vmatprep.subr.bf16.mxu0 0
    %5103 = vmatpush1.bf16.msra.mxu0 %v3927
    %5104 = vmatprep.subr.bf16.mxu0 0
    %5105 = vmatpush1.bf16.msra.mxu0 %v3928
    %5106 = vmatprep.subr.bf16.mxu0 0
    %5107 = vmatpush1.bf16.msra.mxu0 %v3929
    %5108 = vmatprep.subr.bf16.mxu0 0
    %5109 = vmatpush1.bf16.msra.mxu0 %v3930
    %5110 = vmatprep.subr.bf16.mxu0 0
    %5111 = vmatpush1.bf16.msra.mxu0 %v3931
    %5112 = vmatprep.subr.bf16.mxu0 0
    %5113 = vmatpush1.bf16.msra.mxu0 %v3932
    %5114 = vmatprep.subr.bf16.mxu0 0
    %5115 = vmatpush1.bf16.msra.mxu0 %v3933
    %5116 = vmatprep.subr.bf16.mxu0 0
    %5117 = vmatpush1.bf16.msra.mxu0 %v3934
    %5118 = vmatprep.subr.bf16.mxu0 0
    %5119 = vmatpush1.bf16.msra.mxu0 %v3935
    %5120 = vmatprep.subr.bf16.mxu0 0
    %5121 = vmatpush1.bf16.msra.mxu0 %v3936
    %5122 = vmatprep.subr.bf16.mxu0 0
    %5123 = vmatpush1.bf16.msra.mxu0 %v3937
    %5124 = vmatprep.subr.bf16.mxu0 0
    %5125 = vmatpush1.bf16.msra.mxu0 %v3938
    %5126 = vmatprep.subr.bf16.mxu0 0
    %5127 = vmatpush1.bf16.msra.mxu0 %v3939
    %5128 = vmatprep.subr.bf16.mxu0 0
    %5129 = vmatpush1.bf16.msra.mxu0 %v3940
    %5130 = vmatprep.subr.bf16.mxu0 0
    %5131 = vmatpush1.bf16.msra.mxu0 %v3941
    %5132 = vmatprep.subr.bf16.mxu0 0
    %5133 = vmatpush1.bf16.msra.mxu0 %v3942
    %5134 = vmatprep.mubr.bf16.mxu0 %v1261
    %5135 = vmatmul.mubr.bf16.gmra.mrb[0].mxu0 %v1260
    %v5136 = vpop.f32.mrb[0].mxu0
    %v5137 = vadd.f32 %v5096, %v5136
    %v5138 = vpop.f32.mrb[0].mxu0
    %v5139 = vpop.f32.mrb[0].mxu0
    %v5140 = vadd.f32 %v5099, %v5139
    %v5141 = vpop.f32.mrb[0].mxu0
    %5142 = vdwg.mxu0
    %5143 = vmatprep.subr.bf16.mxu0 0
    %5144 = vmatpush1.bf16.msra.mxu0 %v3943
    %5145 = vmatprep.subr.bf16.mxu0 0
    %5146 = vmatpush1.bf16.msra.mxu0 %v3944
    %5147 = vmatprep.subr.bf16.mxu0 0
    %5148 = vmatpush1.bf16.msra.mxu0 %v3945
    %5149 = vmatprep.subr.bf16.mxu0 0
    %5150 = vmatpush1.bf16.msra.mxu0 %v3946
    %5151 = vmatprep.subr.bf16.mxu0 0
    %5152 = vmatpush1.bf16.msra.mxu0 %v3947
    %5153 = vmatprep.subr.bf16.mxu0 0
    %5154 = vmatpush1.bf16.msra.mxu0 %v3948
    %5155 = vmatprep.subr.bf16.mxu0 0
    %5156 = vmatpush1.bf16.msra.mxu0 %v3949
    %5157 = vmatprep.subr.bf16.mxu0 0
    %5158 = vmatpush1.bf16.msra.mxu0 %v3950
    %5159 = vmatprep.subr.bf16.mxu0 0
    %5160 = vmatpush1.bf16.msra.mxu0 %v3951
    %5161 = vmatprep.subr.bf16.mxu0 0
    %5162 = vmatpush1.bf16.msra.mxu0 %v3952
    %5163 = vmatprep.subr.bf16.mxu0 0
    %5164 = vmatpush1.bf16.msra.mxu0 %v3953
    %5165 = vmatprep.subr.bf16.mxu0 0
    %5166 = vmatpush1.bf16.msra.mxu0 %v3954
    %5167 = vmatprep.subr.bf16.mxu0 0
    %5168 = vmatpush1.bf16.msra.mxu0 %v3955
    %5169 = vmatprep.subr.bf16.mxu0 0
    %5170 = vmatpush1.bf16.msra.mxu0 %v3956
    %5171 = vmatprep.subr.bf16.mxu0 0
    %5172 = vmatpush1.bf16.msra.mxu0 %v3957
    %5173 = vmatprep.subr.bf16.mxu0 0
    %5174 = vmatpush1.bf16.msra.mxu0 %v3958
    %5175 = vmatprep.mubr.bf16.mxu0 %v1263
    %5176 = vmatmul.mubr.bf16.gmra.mrb[0].mxu0 %v1262
    %v5177 = vpop.f32.mrb[0].mxu0
    %v5178 = vadd.f32 %v5137, %v5177
    %v5179 = vpop.f32.mrb[0].mxu0
    %v5180 = vpop.f32.mrb[0].mxu0
    %v5181 = vadd.f32 %v5140, %v5180
    %v5182 = vpop.f32.mrb[0].mxu0
    %5183 = vdwg.mxu0
    %5184 = vmatprep.subr.bf16.mxu0 0
    %5185 = vmatpush1.bf16.msra.mxu0 %v3959
    %5186 = vmatprep.subr.bf16.mxu0 0
    %5187 = vmatpush1.bf16.msra.mxu0 %v3960
    %5188 = vmatprep.subr.bf16.mxu0 0
    %5189 = vmatpush1.bf16.msra.mxu0 %v3961
    %5190 = vmatprep.subr.bf16.mxu0 0
    %5191 = vmatpush1.bf16.msra.mxu0 %v3962
    %5192 = vmatprep.subr.bf16.mxu0 0
    %5193 = vmatpush1.bf16.msra.mxu0 %v3963
    %5194 = vmatprep.subr.bf16.mxu0 0
    %5195 = vmatpush1.bf16.msra.mxu0 %v3964
    %5196 = vmatprep.subr.bf16.mxu0 0
    %5197 = vmatpush1.bf16.msra.mxu0 %v3965
    %5198 = vmatprep.subr.bf16.mxu0 0
    %5199 = vmatpush1.bf16.msra.mxu0 %v3966
    %5200 = vmatprep.subr.bf16.mxu0 0
    %5201 = vmatpush1.bf16.msra.mxu0 %v3967
    %5202 = vmatprep.subr.bf16.mxu0 0
    %5203 = vmatpush1.bf16.msra.mxu0 %v3968
    %5204 = vmatprep.subr.bf16.mxu0 0
    %5205 = vmatpush1.bf16.msra.mxu0 %v3969
    %5206 = vmatprep.subr.bf16.mxu0 0
    %5207 = vmatpush1.bf16.msra.mxu0 %v3970
    %5208 = vmatprep.subr.bf16.mxu0 0
    %5209 = vmatpush1.bf16.msra.mxu0 %v3971
    %5210 = vmatprep.subr.bf16.mxu0 0
    %5211 = vmatpush1.bf16.msra.mxu0 %v3972
    %5212 = vmatprep.subr.bf16.mxu0 0
    %5213 = vmatpush1.bf16.msra.mxu0 %v3973
    %5214 = vmatprep.subr.bf16.mxu0 0
    %5215 = vmatpush1.bf16.msra.mxu0 %v3974
    %5216 = vmatprep.mubr.bf16.mxu0 %v1265
    %5217 = vmatmul.mubr.bf16.gmra.mrb[0].mxu0 %v1264
    %v5218 = vpop.f32.mrb[0].mxu0
    %v5219 = vadd.f32 %v5178, %v5218
    %v5220 = vpop.f32.mrb[0].mxu0
    %v5221 = vpop.f32.mrb[0].mxu0
    %v5222 = vadd.f32 %v5181, %v5221
    %v5223 = vpop.f32.mrb[0].mxu0
    %5224 = vdwg.mxu0
    %5225 = vmatprep.subr.bf16.mxu0 0
    %5226 = vmatpush1.bf16.msra.mxu0 %v3975
    %5227 = vmatprep.subr.bf16.mxu0 0
    %5228 = vmatpush1.bf16.msra.mxu0 %v3976
    %5229 = vmatprep.subr.bf16.mxu0 0
    %5230 = vmatpush1.bf16.msra.mxu0 %v3977
    %5231 = vmatprep.subr.bf16.mxu0 0
    %5232 = vmatpush1.bf16.msra.mxu0 %v3978
    %5233 = vmatprep.subr.bf16.mxu0 0
    %5234 = vmatpush1.bf16.msra.mxu0 %v3979
    %5235 = vmatprep.subr.bf16.mxu0 0
    %5236 = vmatpush1.bf16.msra.mxu0 %v3980
    %5237 = vmatprep.subr.bf16.mxu0 0
    %5238 = vmatpush1.bf16.msra.mxu0 %v3981
    %5239 = vmatprep.subr.bf16.mxu0 0
    %5240 = vmatpush1.bf16.msra.mxu0 %v3982
    %5241 = vmatprep.subr.bf16.mxu0 0
    %5242 = vmatpush1.bf16.msra.mxu0 %v3983
    %5243 = vmatprep.subr.bf16.mxu0 0
    %5244 = vmatpush1.bf16.msra.mxu0 %v3984
    %5245 = vmatprep.subr.bf16.mxu0 0
    %5246 = vmatpush1.bf16.msra.mxu0 %v3985
    %5247 = vmatprep.subr.bf16.mxu0 0
    %5248 = vmatpush1.bf16.msra.mxu0 %v3986
    %5249 = vmatprep.subr.bf16.mxu0 0
    %5250 = vmatpush1.bf16.msra.mxu0 %v3987
    %5251 = vmatprep.subr.bf16.mxu0 0
    %5252 = vmatpush1.bf16.msra.mxu0 %v3988
    %5253 = vmatprep.subr.bf16.mxu0 0
    %5254 = vmatpush1.bf16.msra.mxu0 %v3989
    %5255 = vmatprep.subr.bf16.mxu0 0
    %5256 = vmatpush1.bf16.msra.mxu0 %v3990
    %5257 = vmatprep.mubr.bf16.mxu0 %v1267
    %5258 = vmatmul.mubr.bf16.gmra.mrb[0].mxu0 %v1266
    %v5259 = vpop.f32.mrb[0].mxu0
    %v5260 = vadd.f32 %v5219, %v5259
    %v5261 = vpop.f32.mrb[0].mxu0
    %v5262 = vpop.f32.mrb[0].mxu0
    %v5263 = vadd.f32 %v5222, %v5262
    %v5264 = vpop.f32.mrb[0].mxu0
    %5265 = vdwg.mxu0
    %5266 = vmatprep.subr.bf16.mxu0 0
    %5267 = vmatpush1.bf16.msra.mxu0 %v3991
    %5268 = vmatprep.subr.bf16.mxu0 0
    %5269 = vmatpush1.bf16.msra.mxu0 %v3992
    %5270 = vmatprep.subr.bf16.mxu0 0
    %5271 = vmatpush1.bf16.msra.mxu0 %v3993
    %5272 = vmatprep.subr.bf16.mxu0 0
    %5273 = vmatpush1.bf16.msra.mxu0 %v3994
    %5274 = vmatprep.subr.bf16.mxu0 0
    %5275 = vmatpush1.bf16.msra.mxu0 %v3995
    %5276 = vmatprep.subr.bf16.mxu0 0
    %5277 = vmatpush1.bf16.msra.mxu0 %v3996
    %5278 = vmatprep.subr.bf16.mxu0 0
    %5279 = vmatpush1.bf16.msra.mxu0 %v3997
    %5280 = vmatprep.subr.bf16.mxu0 0
    %5281 = vmatpush1.bf16.msra.mxu0 %v3998
    %5282 = vmatprep.subr.bf16.mxu0 0
    %5283 = vmatpush1.bf16.msra.mxu0 %v3999
    %5284 = vmatprep.subr.bf16.mxu0 0
    %5285 = vmatpush1.bf16.msra.mxu0 %v4000
    %5286 = vmatprep.subr.bf16.mxu0 0
    %5287 = vmatpush1.bf16.msra.mxu0 %v4001
    %5288 = vmatprep.subr.bf16.mxu0 0
    %5289 = vmatpush1.bf16.msra.mxu0 %v4002
    %5290 = vmatprep.subr.bf16.mxu0 0
    %5291 = vmatpush1.bf16.msra.mxu0 %v4003
    %5292 = vmatprep.subr.bf16.mxu0 0
    %5293 = vmatpush1.bf16.msra.mxu0 %v4004
    %5294 = vmatprep.subr.bf16.mxu0 0
    %5295 = vmatpush1.bf16.msra.mxu0 %v4005
    %5296 = vmatprep.subr.bf16.mxu0 0
    %5297 = vmatpush1.bf16.msra.mxu0 %v4006
    %5298 = vmatprep.mubr.bf16.mxu0 %v1269
    %5299 = vmatmul.mubr.bf16.gmra.mrb[0].mxu0 %v1268
    %v5300 = vpop.f32.mrb[0].mxu0
    %v5301 = vadd.f32 %v5260, %v5300
    %v5302 = vpop.f32.mrb[0].mxu0
    %v5303 = vpop.f32.mrb[0].mxu0
    %v5304 = vadd.f32 %v5263, %v5303
    %v5305 = vpop.f32.mrb[0].mxu0
    %5306 = vdwg.mxu0
    %5307 = vmatprep.subr.bf16.mxu0 0
    %5308 = vmatpush1.bf16.msra.mxu0 %v4007
    %5309 = vmatprep.subr.bf16.mxu0 0
    %5310 = vmatpush1.bf16.msra.mxu0 %v4008
    %5311 = vmatprep.subr.bf16.mxu0 0
    %5312 = vmatpush1.bf16.msra.mxu0 %v4009
    %5313 = vmatprep.subr.bf16.mxu0 0
    %5314 = vmatpush1.bf16.msra.mxu0 %v4010
    %5315 = vmatprep.subr.bf16.mxu0 0
    %5316 = vmatpush1.bf16.msra.mxu0 %v4011
    %5317 = vmatprep.subr.bf16.mxu0 0
    %5318 = vmatpush1.bf16.msra.mxu0 %v4012
    %5319 = vmatprep.subr.bf16.mxu0 0
    %5320 = vmatpush1.bf16.msra.mxu0 %v4013
    %5321 = vmatprep.subr.bf16.mxu0 0
    %5322 = vmatpush1.bf16.msra.mxu0 %v4014
    %5323 = vmatprep.subr.bf16.mxu0 0
    %5324 = vmatpush1.bf16.msra.mxu0 %v4015
    %5325 = vmatprep.subr.bf16.mxu0 0
    %5326 = vmatpush1.bf16.msra.mxu0 %v4016
    %5327 = vmatprep.subr.bf16.mxu0 0
    %5328 = vmatpush1.bf16.msra.mxu0 %v4017
    %5329 = vmatprep.subr.bf16.mxu0 0
    %5330 = vmatpush1.bf16.msra.mxu0 %v4018
    %5331 = vmatprep.subr.bf16.mxu0 0
    %5332 = vmatpush1.bf16.msra.mxu0 %v4019
    %5333 = vmatprep.subr.bf16.mxu0 0
    %5334 = vmatpush1.bf16.msra.mxu0 %v4020
    %5335 = vmatprep.subr.bf16.mxu0 0
    %5336 = vmatpush1.bf16.msra.mxu0 %v4021
    %5337 = vmatprep.subr.bf16.mxu0 0
    %5338 = vmatpush1.bf16.msra.mxu0 %v4022
    %5339 = vmatprep.mubr.bf16.mxu0 %v1271
    %5340 = vmatmul.mubr.bf16.gmra.mrb[0].mxu0 %v1270
    %v5341 = vpop.f32.mrb[0].mxu0
    %v5342 = vadd.f32 %v5301, %v5341
    %v5343 = vpop.f32.mrb[0].mxu0
    %v5344 = vpop.f32.mrb[0].mxu0
    %v5345 = vadd.f32 %v5304, %v5344
    %v5346 = vpop.f32.mrb[0].mxu0
    %5347 = vdwg.mxu0
    %5348 = vmatprep.subr.bf16.mxu0 0
    %5349 = vmatpush1.bf16.msra.mxu0 %v4023
    %5350 = vmatprep.subr.bf16.mxu0 0
    %5351 = vmatpush1.bf16.msra.mxu0 %v4024
    %5352 = vmatprep.subr.bf16.mxu0 0
    %5353 = vmatpush1.bf16.msra.mxu0 %v4025
    %5354 = vmatprep.subr.bf16.mxu0 0
    %5355 = vmatpush1.bf16.msra.mxu0 %v4026
    %5356 = vmatprep.subr.bf16.mxu0 0
    %5357 = vmatpush1.bf16.msra.mxu0 %v4027
    %5358 = vmatprep.subr.bf16.mxu0 0
    %5359 = vmatpush1.bf16.msra.mxu0 %v4028
    %5360 = vmatprep.subr.bf16.mxu0 0
    %5361 = vmatpush1.bf16.msra.mxu0 %v4029
    %5362 = vmatprep.subr.bf16.mxu0 0
    %5363 = vmatpush1.bf16.msra.mxu0 %v4030
    %5364 = vmatprep.subr.bf16.mxu0 0
    %5365 = vmatpush1.bf16.msra.mxu0 %v4031
    %5366 = vmatprep.subr.bf16.mxu0 0
    %5367 = vmatpush1.bf16.msra.mxu0 %v4032
    %5368 = vmatprep.subr.bf16.mxu0 0
    %5369 = vmatpush1.bf16.msra.mxu0 %v4033
    %5370 = vmatprep.subr.bf16.mxu0 0
    %5371 = vmatpush1.bf16.msra.mxu0 %v4034
    %5372 = vmatprep.subr.bf16.mxu0 0
    %5373 = vmatpush1.bf16.msra.mxu0 %v4035
    %5374 = vmatprep.subr.bf16.mxu0 0
    %5375 = vmatpush1.bf16.msra.mxu0 %v4036
    %5376 = vmatprep.subr.bf16.mxu0 0
    %5377 = vmatpush1.bf16.msra.mxu0 %v4037
    %5378 = vmatprep.subr.bf16.mxu0 0
    %5379 = vmatpush1.bf16.msra.mxu0 %v4038
    %5380 = vmatprep.mubr.bf16.mxu0 %v1273
    %5381 = vmatmul.mubr.bf16.gmra.mrb[0].mxu0 %v1272
    %v5382 = vpop.f32.mrb[0].mxu0
    %v5383 = vadd.f32 %v5342, %v5382
    %v5384 = vpop.f32.mrb[0].mxu0
    %v5385 = vpop.f32.mrb[0].mxu0
    %v5386 = vadd.f32 %v5345, %v5385
    %v5387 = vpop.f32.mrb[0].mxu0
    %5388 = vdwg.mxu0
    %5389 = vmatprep.subr.bf16.mxu0 0
    %5390 = vmatpush1.bf16.msra.mxu0 %v4039
    %5391 = vmatprep.subr.bf16.mxu0 0
    %5392 = vmatpush1.bf16.msra.mxu0 %v4040
    %5393 = vmatprep.subr.bf16.mxu0 0
    %5394 = vmatpush1.bf16.msra.mxu0 %v4041
    %5395 = vmatprep.subr.bf16.mxu0 0
    %5396 = vmatpush1.bf16.msra.mxu0 %v4042
    %5397 = vmatprep.subr.bf16.mxu0 0
    %5398 = vmatpush1.bf16.msra.mxu0 %v4043
    %5399 = vmatprep.subr.bf16.mxu0 0
    %5400 = vmatpush1.bf16.msra.mxu0 %v4044
    %5401 = vmatprep.subr.bf16.mxu0 0
    %5402 = vmatpush1.bf16.msra.mxu0 %v4045
    %5403 = vmatprep.subr.bf16.mxu0 0
    %5404 = vmatpush1.bf16.msra.mxu0 %v4046
    %5405 = vmatprep.subr.bf16.mxu0 0
    %5406 = vmatpush1.bf16.msra.mxu0 %v4047
    %5407 = vmatprep.subr.bf16.mxu0 0
    %5408 = vmatpush1.bf16.msra.mxu0 %v4048
    %5409 = vmatprep.subr.bf16.mxu0 0
    %5410 = vmatpush1.bf16.msra.mxu0 %v4049
    %5411 = vmatprep.subr.bf16.mxu0 0
    %5412 = vmatpush1.bf16.msra.mxu0 %v4050
    %5413 = vmatprep.subr.bf16.mxu0 0
    %5414 = vmatpush1.bf16.msra.mxu0 %v4051
    %5415 = vmatprep.subr.bf16.mxu0 0
    %5416 = vmatpush1.bf16.msra.mxu0 %v4052
    %5417 = vmatprep.subr.bf16.mxu0 0
    %5418 = vmatpush1.bf16.msra.mxu0 %v4053
    %5419 = vmatprep.subr.bf16.mxu0 0
    %5420 = vmatpush1.bf16.msra.mxu0 %v4054
    %5421 = vmatprep.mubr.bf16.mxu0 %v1275
    %5422 = vmatmul.mubr.bf16.gmra.mrb[0].mxu0 %v1274
    %v5423 = vpop.f32.mrb[0].mxu0
    %v5424 = vadd.f32 %v5383, %v5423
    %v5425 = vpop.f32.mrb[0].mxu0
    %v5426 = vpop.f32.mrb[0].mxu0
    %v5427 = vadd.f32 %v5386, %v5426
    %v5428 = vpop.f32.mrb[0].mxu0
    %5429 = vdwg.mxu0
    %5430 = vmatprep.subr.bf16.mxu0 0
    %5431 = vmatpush1.bf16.msra.mxu0 %v4055
    %5432 = vmatprep.subr.bf16.mxu0 0
    %5433 = vmatpush1.bf16.msra.mxu0 %v4056
    %5434 = vmatprep.subr.bf16.mxu0 0
    %5435 = vmatpush1.bf16.msra.mxu0 %v4057
    %5436 = vmatprep.subr.bf16.mxu0 0
    %5437 = vmatpush1.bf16.msra.mxu0 %v4058
    %5438 = vmatprep.subr.bf16.mxu0 0
    %5439 = vmatpush1.bf16.msra.mxu0 %v4059
    %5440 = vmatprep.subr.bf16.mxu0 0
    %5441 = vmatpush1.bf16.msra.mxu0 %v4060
    %5442 = vmatprep.subr.bf16.mxu0 0
    %5443 = vmatpush1.bf16.msra.mxu0 %v4061
    %5444 = vmatprep.subr.bf16.mxu0 0
    %5445 = vmatpush1.bf16.msra.mxu0 %v4062
    %5446 = vmatprep.subr.bf16.mxu0 0
    %5447 = vmatpush1.bf16.msra.mxu0 %v4063
    %5448 = vmatprep.subr.bf16.mxu0 0
    %5449 = vmatpush1.bf16.msra.mxu0 %v4064
    %5450 = vmatprep.subr.bf16.mxu0 0
    %5451 = vmatpush1.bf16.msra.mxu0 %v4065
    %5452 = vmatprep.subr.bf16.mxu0 0
    %5453 = vmatpush1.bf16.msra.mxu0 %v4066
    %5454 = vmatprep.subr.bf16.mxu0 0
    %5455 = vmatpush1.bf16.msra.mxu0 %v4067
    %5456 = vmatprep.subr.bf16.mxu0 0
    %5457 = vmatpush1.bf16.msra.mxu0 %v4068
    %5458 = vmatprep.subr.bf16.mxu0 0
    %5459 = vmatpush1.bf16.msra.mxu0 %v4069
    %5460 = vmatprep.subr.bf16.mxu0 0
    %5461 = vmatpush1.bf16.msra.mxu0 %v4070
    %5462 = vmatprep.mubr.bf16.mxu0 %v1277
    %5463 = vmatmul.mubr.bf16.gmra.mrb[0].mxu0 %v1276
    %v5464 = vpop.f32.mrb[0].mxu0
    %v5465 = vadd.f32 %v5424, %v5464
    %v5466 = vpop.f32.mrb[0].mxu0
    %v5467 = vpop.f32.mrb[0].mxu0
    %v5468 = vadd.f32 %v5427, %v5467
    %v5469 = vpop.f32.mrb[0].mxu0
    %5470 = vdwg.mxu0
    %5471 = vmatprep.subr.bf16.mxu0 0
    %5472 = vmatpush1.bf16.msra.mxu0 %v4071
    %5473 = vmatprep.subr.bf16.mxu0 0
    %5474 = vmatpush1.bf16.msra.mxu0 %v4072
    %5475 = vmatprep.subr.bf16.mxu0 0
    %5476 = vmatpush1.bf16.msra.mxu0 %v4073
    %5477 = vmatprep.subr.bf16.mxu0 0
    %5478 = vmatpush1.bf16.msra.mxu0 %v4074
    %5479 = vmatprep.subr.bf16.mxu0 0
    %5480 = vmatpush1.bf16.msra.mxu0 %v4075
    %5481 = vmatprep.subr.bf16.mxu0 0
    %5482 = vmatpush1.bf16.msra.mxu0 %v4076
    %5483 = vmatprep.subr.bf16.mxu0 0
    %5484 = vmatpush1.bf16.msra.mxu0 %v4077
    %5485 = vmatprep.subr.bf16.mxu0 0
    %5486 = vmatpush1.bf16.msra.mxu0 %v4078
    %5487 = vmatprep.subr.bf16.mxu0 0
    %5488 = vmatpush1.bf16.msra.mxu0 %v4079
    %5489 = vmatprep.subr.bf16.mxu0 0
    %5490 = vmatpush1.bf16.msra.mxu0 %v4080
    %5491 = vmatprep.subr.bf16.mxu0 0
    %5492 = vmatpush1.bf16.msra.mxu0 %v4081
    %5493 = vmatprep.subr.bf16.mxu0 0
    %5494 = vmatpush1.bf16.msra.mxu0 %v4082
    %5495 = vmatprep.subr.bf16.mxu0 0
    %5496 = vmatpush1.bf16.msra.mxu0 %v4083
    %5497 = vmatprep.subr.bf16.mxu0 0
    %5498 = vmatpush1.bf16.msra.mxu0 %v4084
    %5499 = vmatprep.subr.bf16.mxu0 0
    %5500 = vmatpush1.bf16.msra.mxu0 %v4085
    %5501 = vmatprep.subr.bf16.mxu0 0
    %5502 = vmatpush1.bf16.msra.mxu0 %v4086
    %5503 = vmatprep.mubr.bf16.mxu0 %v1279
    %5504 = vmatmul.mubr.bf16.gmra.mrb[0].mxu0 %v1278
    %v5505 = vpop.f32.mrb[0].mxu0
    %v5506 = vadd.f32 %v5465, %v5505
    %v5507 = vpop.f32.mrb[0].mxu0
    %v5508 = vpop.f32.mrb[0].mxu0
    %v5509 = vadd.f32 %v5468, %v5508
    %v5510 = vpop.f32.mrb[0].mxu0
    %5511 = vdwg.mxu0
    %v5512 = vtanh.pop %v5506
    %v5513 = vtanh.pop %v5509
    %v5514 = vld [vmem:[%s3] sm:$0xff]
    %v5515 = vld [vmem:[%s3 + $0x8] sm:$0xff]
    %v5516 = vld [vmem:[%s3 + $0x10] sm:$0xff]
    %v5517 = vld [vmem:[%s3 + $0x18] sm:$0xff]
    %v5518 = vld [vmem:[%s3 + $0x20] sm:$0xff]
    %v5519 = vld [vmem:[%s3 + $0x28] sm:$0xff]
    %v5520 = vld [vmem:[%s3 + $0x30] sm:$0xff]
    %v5521 = vld [vmem:[%s3 + $0x38] sm:$0xff]
    %v5522 = vld [vmem:[%s4] sm:$0x1]
    %v5524 = vlaneseq
    %v5525 = vshrl.u32 %v5524, 7
    %v5526 = vsub.s32 0, %v5525
    %v5527 = vrot.slane %v5522, %v5526
    %vm5529 = vcmask 523264
    %v5531 = vsel %vm5529, %v5512, 0
    %v5534 = vsel %vm5529, %v5513, 0
    %5536 = vmatprep.subr.mxu0 0.0
    %5537 = vmatpush1.msra.mxu0 %v5514
    %5538 = vmatprep.subr.mxu0 0.0
    %5539 = vmatpush1.msra.mxu0 %v5515
    %5540 = vmatprep.subr.mxu0 0.0
    %5541 = vmatpush1.msra.mxu0 %v5516
    %5542 = vmatprep.subr.mxu0 0.0
    %5543 = vmatpush1.msra.mxu0 %v5517
    %5544 = vmatprep.subr.mxu0 0.0
    %5545 = vmatpush1.msra.mxu0 %v5518
    %5546 = vmatprep.subr.mxu0 0.0
    %5547 = vmatpush1.msra.mxu0 %v5519
    %5548 = vmatprep.subr.mxu0 0.0
    %5549 = vmatpush1.msra.mxu0 %v5520
    %5550 = vmatprep.subr.mxu0 0.0
    %5551 = vmatpush1.msra.mxu0 %v5521
    %5552 = vmatprep.subr.mxu0 0.0
    %5553 = vmatpush1.msra.mxu0 0.0
    %5554 = vmatprep.subr.mxu0 0.0
    %5555 = vmatpush1.msra.mxu0 0.0
    %5556 = vmatprep.subr.mxu0 0.0
    %5557 = vmatpush1.msra.mxu0 0.0
    %5558 = vmatprep.subr.mxu0 0.0
    %5559 = vmatpush1.msra.mxu0 0.0
    %5560 = vmatprep.subr.mxu0 0.0
    %5561 = vmatpush1.msra.mxu0 0.0
    %5562 = vmatprep.subr.mxu0 0.0
    %5563 = vmatpush1.msra.mxu0 0.0
    %5564 = vmatprep.subr.mxu0 0.0
    %5565 = vmatpush1.msra.mxu0 0.0
    %5566 = vmatprep.subr.mxu0 0.0
    %5567 = vmatpush1.msra.mxu0 0.0
    %5568 = vmatprep.subr.mxu0 0.0
    %5569 = vmatpush1.msra.mxu0 0.0
    %5570 = vmatprep.subr.mxu0 0.0
    %5571 = vmatpush1.msra.mxu0 0.0
    %5572 = vmatprep.subr.mxu0 0.0
    %5573 = vmatpush1.msra.mxu0 0.0
    %5574 = vmatprep.subr.mxu0 0.0
    %5575 = vmatpush1.msra.mxu0 0.0
    %5576 = vmatprep.subr.mxu0 0.0
    %5577 = vmatpush1.msra.mxu0 0.0
    %5578 = vmatprep.subr.mxu0 0.0
    %5579 = vmatpush1.msra.mxu0 0.0
    %5580 = vmatprep.subr.mxu0 0.0
    %5581 = vmatpush1.msra.mxu0 0.0
    %5582 = vmatprep.subr.mxu0 0.0
    %5583 = vmatpush1.msra.mxu0 0.0
    %5584 = vmatprep.subr.mxu0 0.0
    %5585 = vmatpush1.msra.mxu0 0.0
    %5586 = vmatprep.subr.mxu0 0.0
    %5587 = vmatpush1.msra.mxu0 0.0
    %5588 = vmatprep.subr.mxu0 0.0
    %5589 = vmatpush1.msra.mxu0 0.0
    %5590 = vmatprep.subr.mxu0 0.0
    %5591 = vmatpush1.msra.mxu0 0.0
    %5592 = vmatprep.subr.mxu0 0.0
    %5593 = vmatpush1.msra.mxu0 0.0
    %5594 = vmatprep.subr.mxu0 0.0
    %5595 = vmatpush1.msra.mxu0 0.0
    %5596 = vmatprep.subr.mxu0 0.0
    %5597 = vmatpush1.msra.mxu0 0.0
    %5598 = vmatprep.subr.mxu0 0.0
    %5599 = vmatpush1.msra.mxu0 0.0
    %5600 = vmatprep.mubr.f32.mxu0 0.0
    %5601 = vmatmul.mubr.f32.gmra.mrb[0].mxu0 %v5531
    %v5602 = vpop.f32.mrb[0].mxu0
    %v5603 = vadd.f32 %v5527, %v5602
    %v5604 = vpop.f32.mrb[0].mxu0
    %5605 = vmatprep.mubr.f32.mxu0 0.0
    %5606 = vmatmul.mubr.f32.gmra.mrb[0].mxu0 %v5534
    %v5607 = vpop.f32.mrb[0].mxu0
    %v5608 = vadd.f32 %v5527, %v5607
    %v5609 = vpop.f32.mrb[0].mxu0
    %5610 = vdwg.mxu0
    %vm5611 = vcmask 48128
    %v5612 = vsel %vm5611, %v5603, -inf
    %5613 = vmax.xlane.f32.xlu0 %v5612
    %v5614 = vpop.xlane.xlu0 %5613
    %v5615 = vsel %vm5611, %v5608, -inf
    %5616 = vmax.xlane.f32.xlu0 %v5615
    %v5617 = vpop.xlane.xlu0 %5616
    %v5618 = vsub.f32 %v5603, %v5614
    %v5619 = vsub.f32 %v5608, %v5617
    %v5620 = vmul.f32 %v5618, 1.442695
    %v5621 = vpow.pop %v5620
    %v5622 = vmul.f32 %v5619, 1.442695
    %v5623 = vpow.pop %v5622
    %v5624 = vsel %vm5611, %v5621, 0.0
    %5625 = vadd.xlane.f32.xlu0 %v5624
    %v5626 = vpop.xlane.xlu0 %5625
    %v5627 = vsel %vm5611, %v5623, 0.0
    %5628 = vadd.xlane.f32.xlu0 %v5627
    %v5629 = vpop.xlane.xlu0 %5628
    %v5630 = vrcp.pop %v5626
    %v5631 = vmul.f32 %v5621, %v5630
    %v5632 = vrcp.pop %v5629
    %v5633 = vmul.f32 %v5623, %v5632
    %5634 = vst.msk [vmem:[#allocation2] sm:$0xff] %vm5611, %v5631
    %5635 = vst.msk [vmem:[#allocation2 + $0x8] sm:$0xff] %vm5611, %v5633
    // Predicated region
    $region22: #{tpu_custom_call.1} parent=1 // pred_check
      _
    $region23: #{tpu_custom_call.1} parent=1 // pred_check_branch
      %5637 = sbr.rel (0) target = $region25
    $region24: #{tpu_custom_call.1} parent=1 // pred_region
      %s5639 = ssub.s32 256, 32
      %5640 = vsyncadd [#allocation3], %s5639
      %s5641 = sshll.u32 [#allocation2], 4
      %s5642 = int_to_ptr.vmem [resolvable:$true] %s5641
      %5647 = dma.vmem_to_hbm [thread:$0]  %s5642, 32, %s5, [#allocation3], 32, 32, 2
    $region25: #{tpu_custom_call.1} parent=1 // pred_fallthru
      _
    // Predicated region
    $region26: #{tpu_custom_call.1} parent=1 // pred_check
      _
    $region27: #{tpu_custom_call.1} parent=1 // pred_check_branch
      %5649 = sbr.rel (0) target = $region29
    $region28: #{tpu_custom_call.1} parent=1 // pred_region
      %5650 = dma.done [#allocation3], 256
    $region29: #{tpu_custom_call.1} parent=1 // pred_fallthru
      _
    %5651 = vsyncpa [#allocation3], 1

</llo_original>
